<compile_context>
chip_gen: v6e
topology: v6e:2x2x1
jax: 0.10.0
libtpu: 0.0.40
codegen_flags: <defaults>
</compile_context>

<pallas_src>
import functools
import math

import numpy as np
import jax
import jax.numpy as jnp
from jax.experimental import pallas as pl
from jax.experimental.pallas import tpu as pltpu

CH_OUT = 32        # conv channel_out
HID = 96           # GRU hidden size (dim_embedding_key)
HIDP = 128         # per-gate lane-padded width (96 -> 128) so gate slices are lane-aligned
H1, H2 = 512, 256  # MLP hidden sizes


def _decompose_kernel(T, Np, OXP,
                      xt_ref, xh_ref, f_ref,
                      wc0, wc1, wi, wh,
                      w1f, w1h, b1, xw2, xb2, yw2, yb2, xw3, xb3, yw3, yb3,
                      out_ref, g_scr):
    f32 = jnp.float32
    TN = T * Np

    # ---- x_ = x_true - x_hat ; Conv1d(2 -> 32, k=3, pad=1) + ReLU (VPU) -----
    # K=2 "matmul" done as two broadcast multiplies on the VPU so the MXU is
    # free; taps k=0/1/2 land in lane-aligned 128-wide blocks of y.
    xd = xt_ref[...] - xh_ref[...]                                  # (T*Np, 2)
    y = xd[:, 0:1] * wc0[...] + xd[:, 1:2] * wc1[...]               # (T*Np, 3*128)
    y0 = y[:, 0:HIDP]             # tap k=0 -> contribution of x[t-1]
    y1 = y[:, HIDP:2 * HIDP]      # tap k=1 -> x[t]
    y2 = y[:, 2 * HIDP:]          # tap k=2 -> x[t+1]
    zblk = jnp.zeros((Np, HIDP), f32)
    y0s = jnp.concatenate([zblk, y0[:TN - Np, :]], axis=0)          # shift by +1 timestep
    y2s = jnp.concatenate([y2[Np:, :], zblk], axis=0)               # shift by -1 timestep
    # conv bias is zero (nn.init.zeros_), folded out
    emb = jnp.maximum(y0s + y1 + y2s, 0.0)                          # (T*Np, 128); lanes 32.. are 0

    # ---- GRU(32 -> 96): input projection hoisted out of the recurrence ------
    # G blocks: [r | z | n], each 128 lanes wide (only the first 96 are real).
    # G is staged in VMEM scratch so only one (Np, 384) slice is live per step.
    g_scr[...] = jnp.dot(emb, wi[...], preferred_element_type=f32)  # (T*Np, 3*128)
    h = jnp.zeros((Np, HIDP), f32)                                  # padded lanes stay exactly 0
    # GRU biases are zero (nn.init.zeros_), folded out.  T is static -> fully unrolled.
    for t in range(T):
        g = g_scr[t * Np:(t + 1) * Np, :]                           # (Np, 3*128), static slice
        gh = jnp.dot(h, wh[...], preferred_element_type=f32)        # W_h streamed from VMEM ref
        r = jax.nn.sigmoid(g[:, :HIDP] + gh[:, :HIDP])
        z = jax.nn.sigmoid(g[:, HIDP:2 * HIDP] + gh[:, HIDP:2 * HIDP])
        n = jnp.tanh(g[:, 2 * HIDP:] + r * gh[:, 2 * HIDP:])
        h = (1.0 - z) * n + z * h

    # ---- Decoders: fused 1024-wide layer-1, separate per-decoder layer-2/3 --
    # Decoder weights stored bf16 (half the DMA); up-cast once, compute in f32.
    fv = f_ref[...]
    a1 = jnp.maximum(jnp.dot(fv, w1f[...].astype(f32), preferred_element_type=f32)
                     + jnp.dot(h, w1h[...].astype(f32), preferred_element_type=f32)
                     + b1[...], 0.0)                                # (Np, 2*H1)
    a1x, a1y = a1[:, :H1], a1[:, H1:]
    a2x = jnp.maximum(jnp.dot(a1x, xw2[...].astype(f32), preferred_element_type=f32)
                      + xb2[...], 0.0)                              # (Np, H2)
    a2y = jnp.maximum(jnp.dot(a1y, yw2[...].astype(f32), preferred_element_type=f32)
                      + yb2[...], 0.0)                              # (Np, H2)
    # Lane-dense output slab: cols [0:OXP) = decoder_x, [OXP:) = decoder_y.
    # Both halves are 128-aligned -> unmasked lane-dense stores.
    out_ref[:, 0:OXP] = (jnp.dot(a2x, xw3[...].astype(f32), preferred_element_type=f32)
                         + xb3[...])
    out_ref[:, OXP:] = (jnp.dot(a2y, yw3[...].astype(f32), preferred_element_type=f32)
                        + yb3[...])


def decompose_block(x_true, x_hat, f, fp, past_len, future_len):
    """x_true, x_hat: (N, past_len, 2); f: (N, D) -> ((N,past_len,2), (N,future_len,2))."""
    N, T, _ = x_true.shape
    assert T == past_len
    pad = (-N) % 8                      # sublane alignment for the time-shifted adds
    Np = N + pad
    if pad:
        x_true = jnp.pad(x_true, ((0, pad), (0, 0), (0, 0)))
        x_hat = jnp.pad(x_hat, ((0, pad), (0, 0), (0, 0)))
        f = jnp.pad(f, ((0, pad), (0, 0)))

    # time-major flatten (layout plumbing): row index = t*Np + n
    xt_flat = jnp.transpose(x_true, (1, 0, 2)).reshape(T * Np, 2)
    xh_flat = jnp.transpose(x_hat, (1, 0, 2)).reshape(T * Np, 2)

    OXP, OYP = fp['oxp'], fp['oyp']
    weight_args = (fp['wc0'], fp['wc1'], fp['wi'], fp['wh'],
                   fp['w1f'], fp['w1h'], fp['b1'],
                   fp['xw2'], fp['xb2'], fp['yw2'], fp['yb2'],
                   fp['xw3'], fp['xb3'], fp['yw3'], fp['yb3'])

    # Advisory cost estimate so XLA can overlap neighboring HLO work.
    flops = 2 * (T * Np * HIDP * 3 * HIDP            # G projection
                 + T * Np * HIDP * 3 * HIDP          # recurrence
                 + Np * ((f.shape[1] + HIDP) * 2 * H1
                         + 2 * H1 * H2
                         + H2 * (OXP + OYP)))
    bytes_accessed = sum(int(np.prod(a.shape)) * a.dtype.itemsize for a in weight_args)
    bytes_accessed += (xt_flat.size + xh_flat.size + f.size + Np * (OXP + OYP)) * 4

    kernel = functools.partial(_decompose_kernel, T, Np, OXP)
    out = pl.pallas_call(
        kernel,
        out_shape=jax.ShapeDtypeStruct((Np, OXP + OYP), jnp.float32),
        in_specs=[pl.BlockSpec(memory_space=pltpu.MemorySpace.VMEM)] * (3 + len(weight_args)),
        out_specs=pl.BlockSpec(memory_space=pltpu.MemorySpace.VMEM),
        scratch_shapes=[pltpu.VMEM((T * Np, 3 * HIDP), jnp.float32)],
        cost_estimate=pl.CostEstimate(flops=int(flops),
                                      transcendentals=int(4 * T * Np * HIDP),
                                      bytes_accessed=int(bytes_accessed)),
    )(xt_flat, xh_flat, f, *weight_args)

    x_hat_after = out[:N, :2 * past_len].reshape(N, past_len, 2)
    y_hat = out[:N, OXP:OXP + 2 * future_len].reshape(N, future_len, 2)
    return x_hat_after, y_hat


def prepare_params(p, past_len, future_len, input_dim):
    """One-time fusion/padding of the raw weights into the lane-aligned layouts
    the kernel consumes.  Decoder matmul weights are stored bf16 (halves their
    per-call HBM->VMEM DMA); GRU/conv weights and all biases stay f32 so the
    serial recurrence keeps full precision."""
    f32, bf16 = jnp.float32, jnp.bfloat16
    fp = {}
    # Conv taps: one (1, 3*128) row per input channel, taps in lane-aligned blocks.
    wc = jnp.zeros((2, 3 * HIDP), f32)
    wc = wc.at[:, 0:CH_OUT].set(p['cw0'])
    wc = wc.at[:, HIDP:HIDP + CH_OUT].set(p['cw1'])
    wc = wc.at[:, 2 * HIDP:2 * HIDP + CH_OUT].set(p['cw2'])
    fp['wc0'], fp['wc1'] = wc[0:1, :], wc[1:2, :]
    # GRU gate weights: columns [r|z|n] each padded 96 -> 128; input rows padded
    # 32 -> 128 (emb is 128 lanes wide), hidden rows padded 96 -> 128 with zeros.
    wi = jnp.zeros((HIDP, 3 * HIDP), f32)
    wh = jnp.zeros((HIDP, 3 * HIDP), f32)
    for blk, (ki, kh) in enumerate((('wir', 'whr'), ('wiz', 'whz'), ('win', 'whn'))):
        wi = wi.at[:CH_OUT, blk * HIDP:blk * HIDP + HID].set(p[ki])
        wh = wh.at[:HID, blk * HIDP:blk * HIDP + HID].set(p[kh])
    fp['wi'], fp['wh'] = wi, wh
    # Decoder layer 1 fused across both decoders (1024 wide), stored bf16.
    fp['w1f'] = jnp.concatenate([p['xw1f'], p['yw1f']], axis=1).astype(bf16)   # (D, 2*H1)
    w1h = jnp.zeros((HIDP, 2 * H1), f32)
    w1h = w1h.at[:HID, :H1].set(p['xw1h']).at[:HID, H1:].set(p['yw1h'])
    fp['w1h'] = w1h.astype(bf16)
    fp['b1'] = jnp.concatenate([p['xb1'], p['yb1']], axis=1)                   # (1, 2*H1) f32
    fp['xw2'], fp['xb2'] = p['xw2'].astype(bf16), p['xb2']
    fp['yw2'], fp['yb2'] = p['yw2'].astype(bf16), p['yb2']
    # Layer 3: separate per-decoder weights; output columns padded to a
    # 128-multiple so each decoder's half of the output slab is lane-aligned.
    OX, OY = 2 * past_len, 2 * future_len
    OXP, OYP = -(-OX // 128) * 128, -(-OY // 128) * 128
    xw3 = jnp.zeros((H2, OXP), f32).at[:, :OX].set(p['xw3'])
    yw3 = jnp.zeros((H2, OYP), f32).at[:, :OY].set(p['yw3'])
    fp['xw3'], fp['yw3'] = xw3.astype(bf16), yw3.astype(bf16)
    fp['xb3'] = jnp.zeros((1, OXP), f32).at[:, :OX].set(p['xb3'])
    fp['yb3'] = jnp.zeros((1, OYP), f32).at[:, :OY].set(p['yb3'])
    fp['oxp'], fp['oyp'] = OXP, OYP
    return fp


def init_params(key, past_len, future_len, input_dim):
    ks = jax.random.split(key, 5)
    p = {}
    # Conv1d(2, 32, 3) -- kaiming_normal, fan_in = 2*3
    conv_w = jax.random.normal(ks[0], (CH_OUT, 2, 3), jnp.float32) * math.sqrt(2.0 / 6.0)
    p['cw0'] = conv_w[:, :, 0].T           # (2, 32), cw[k][ci, co]
    p['cw1'] = conv_w[:, :, 1].T
    p['cw2'] = conv_w[:, :, 2].T
    # GRU(32 -> 96) -- kaiming_normal on weight_ih/weight_hh, gates ordered (r, z, n)
    w_ih = jax.random.normal(ks[1], (3 * HID, CH_OUT), jnp.float32) * math.sqrt(2.0 / CH_OUT)
    w_hh = jax.random.normal(ks[2], (3 * HID, HID), jnp.float32) * math.sqrt(2.0 / HID)
    p['wir'], p['wiz'], p['win'] = w_ih[:HID].T, w_ih[HID:2 * HID].T, w_ih[2 * HID:].T
    p['whr'], p['whz'], p['whn'] = w_hh[:HID].T, w_hh[HID:2 * HID].T, w_hh[2 * HID:].T

    def linear(k, fan_in, fan_out):
        kw, kb = jax.random.split(k)
        bound = 1.0 / math.sqrt(fan_in)
        w = jax.random.uniform(kw, (fan_in, fan_out), jnp.float32, -bound, bound)
        b = jax.random.uniform(kb, (1, fan_out), jnp.float32, -bound, bound)
        return w, b

    # decoder_x / decoder_y : MLP(input_dim + 96 -> 512 -> 256 -> out)
    for name, out_dim, kk in (('x', 2 * past_len, ks[3]), ('y', 2 * future_len, ks[4])):
        k1, k2, k3 = jax.random.split(kk, 3)
        w1, b1 = linear(k1, input_dim + HID, H1)
        w2, b2 = linear(k2, H1, H2)
        w3, b3 = linear(k3, H2, out_dim)
        p[name + 'w1f'] = w1[:input_dim]   # rows for f  (cat order: f first)
        p[name + 'w1h'] = w1[input_dim:]   # rows for GRU state
        p[name + 'b1'], p[name + 'w2'], p[name + 'b2'] = b1, w2, b2
        p[name + 'w3'], p[name + 'b3'] = w3, b3
    return p


def reference_forward(x_true, x_hat, f, p, past_len, future_len):
    """Pure-JAX reference mirroring the PyTorch forward."""
    hp = jax.lax.Precision.HIGHEST
    dot = lambda a, b: jnp.dot(a, b, precision=hp)
    N, T, _ = x_true.shape
    xd = x_true - x_hat
    xpad = jnp.pad(xd, ((0, 0), (1, 1), (0, 0)))
    conv = (jnp.einsum('ntc,co->nto', xpad[:, 0:T], p['cw0'], precision=hp)
            + jnp.einsum('ntc,co->nto', xpad[:, 1:T + 1], p['cw1'], precision=hp)
            + jnp.einsum('ntc,co->nto', xpad[:, 2:T + 2], p['cw2'], precision=hp))
    emb = jnp.maximum(conv, 0.0)
    h = jnp.zeros((N, HID), jnp.float32)
    for t in range(T):
        xt = emb[:, t, :]
        r = jax.nn.sigmoid(dot(xt, p['wir']) + dot(h, p['whr']))
        z = jax.nn.sigmoid(dot(xt, p['wiz']) + dot(h, p['whz']))
        n = jnp.tanh(dot(xt, p['win']) + r * dot(h, p['whn']))
        h = (1.0 - z) * n + z * h

    def mlp(pfx):
        a1 = jnp.maximum(dot(f, p[pfx + 'w1f']) + dot(h, p[pfx + 'w1h']) + p[pfx + 'b1'], 0.0)
        a2 = jnp.maximum(dot(a1, p[pfx + 'w2']) + p[pfx + 'b2'], 0.0)
        return dot(a2, p[pfx + 'w3']) + p[pfx + 'b3']

    return (mlp('x').reshape(N, past_len, 2), mlp('y').reshape(N, future_len, 2))


if __name__ == "__main__":
    past_len, future_len, input_dim = 8, 10, 32
    N = 8
    key = jax.random.PRNGKey(0)
    k1, k2, k3, kp = jax.random.split(key, 4)
    x_true = jax.random.normal(k1, (N, past_len, 2), jnp.float32)
    x_hat = jax.random.normal(k2, (N, past_len, 2), jnp.float32)
    f = jax.random.normal(k3, (N, input_dim), jnp.float32)
    params = init_params(kp, past_len, future_len, input_dim)
    fused = prepare_params(params, past_len, future_len, input_dim)

    x_after, y_hat = decompose_block(x_true, x_hat, f, fused, past_len, future_len)
    jax.block_until_ready((x_after, y_hat))

    assert x_after.shape == (N, past_len, 2)
    assert y_hat.shape == (N, future_len, 2)

    rx, ry = reference_forward(x_true, x_hat, f, params, past_len, future_len)
    np.testing.assert_allclose(np.asarray(x_after), np.asarray(rx), rtol=5e-3, atol=5e-3)
    np.testing.assert_allclose(np.asarray(y_hat), np.asarray(ry), rtol=5e-3, atol=5e-3)

    print("KERNEL_OK")
</pallas_src>

<mosaic_0001>
module attributes {stable_mosaic.version = 11 : i64} {
  func.func @_decompose_kernel(%arg0: memref<64x2xf32, #tpu.memory_space<vmem>>, %arg1: memref<64x2xf32, #tpu.memory_space<vmem>>, %arg2: memref<8x32xf32, #tpu.memory_space<vmem>>, %arg3: memref<1x384xf32, #tpu.memory_space<vmem>>, %arg4: memref<1x384xf32, #tpu.memory_space<vmem>>, %arg5: memref<128x384xf32, #tpu.memory_space<vmem>>, %arg6: memref<128x384xf32, #tpu.memory_space<vmem>>, %arg7: memref<32x1024xbf16, #tpu.memory_space<vmem>>, %arg8: memref<128x1024xbf16, #tpu.memory_space<vmem>>, %arg9: memref<1x1024xf32, #tpu.memory_space<vmem>>, %arg10: memref<512x256xbf16, #tpu.memory_space<vmem>>, %arg11: memref<1x256xf32, #tpu.memory_space<vmem>>, %arg12: memref<512x256xbf16, #tpu.memory_space<vmem>>, %arg13: memref<1x256xf32, #tpu.memory_space<vmem>>, %arg14: memref<256x128xbf16, #tpu.memory_space<vmem>>, %arg15: memref<1x128xf32, #tpu.memory_space<vmem>>, %arg16: memref<256x128xbf16, #tpu.memory_space<vmem>>, %arg17: memref<1x128xf32, #tpu.memory_space<vmem>>, %arg18: memref<8x256xf32, #tpu.memory_space<vmem>>, %arg19: memref<64x384xf32, #tpu.memory_space<vmem>>) attributes {dimension_semantics = [], scalar_prefetch = 0 : i64, scratch_operands = 1 : i64, tpu.core_type = #tpu.core_type<tc>} {
    %c0 = arith.constant 0 : index
    %c0_0 = arith.constant 0 : index
    %0 = vector.load %arg0[%c0, %c0_0] : memref<64x2xf32, #tpu.memory_space<vmem>>, vector<64x2xf32>
    %c0_1 = arith.constant 0 : index
    %c0_2 = arith.constant 0 : index
    %1 = vector.load %arg1[%c0_1, %c0_2] : memref<64x2xf32, #tpu.memory_space<vmem>>, vector<64x2xf32>
    %2 = arith.subf %0, %1 : vector<64x2xf32>
    %3 = vector.extract_strided_slice %2 {offsets = [0, 0], sizes = [64, 1], strides = [1, 1]} : vector<64x2xf32> to vector<64x1xf32>
    %c0_3 = arith.constant 0 : index
    %c0_4 = arith.constant 0 : index
    %4 = vector.load %arg3[%c0_3, %c0_4] : memref<1x384xf32, #tpu.memory_space<vmem>>, vector<1x384xf32>
    %5 = vector.broadcast %3 : vector<64x1xf32> to vector<64x384xf32>
    %6 = vector.broadcast %4 : vector<1x384xf32> to vector<64x384xf32>
    %7 = arith.mulf %5, %6 : vector<64x384xf32>
    %8 = vector.extract_strided_slice %2 {offsets = [0, 1], sizes = [64, 1], strides = [1, 1]} : vector<64x2xf32> to vector<64x1xf32>
    %c0_5 = arith.constant 0 : index
    %c0_6 = arith.constant 0 : index
    %9 = vector.load %arg4[%c0_5, %c0_6] : memref<1x384xf32, #tpu.memory_space<vmem>>, vector<1x384xf32>
    %10 = vector.broadcast %8 : vector<64x1xf32> to vector<64x384xf32>
    %11 = vector.broadcast %9 : vector<1x384xf32> to vector<64x384xf32>
    %12 = arith.mulf %10, %11 : vector<64x384xf32>
    %13 = arith.addf %7, %12 : vector<64x384xf32>
    %14 = vector.extract_strided_slice %13 {offsets = [0, 0], sizes = [64, 128], strides = [1, 1]} : vector<64x384xf32> to vector<64x128xf32>
    %15 = vector.extract_strided_slice %13 {offsets = [0, 128], sizes = [64, 128], strides = [1, 1]} : vector<64x384xf32> to vector<64x128xf32>
    %16 = vector.extract_strided_slice %13 {offsets = [0, 256], sizes = [64, 128], strides = [1, 1]} : vector<64x384xf32> to vector<64x128xf32>
    %cst = arith.constant 0.000000e+00 : f32
    %17 = vector.broadcast %cst : f32 to vector<8x128xf32>
    %18 = vector.extract_strided_slice %14 {offsets = [0, 0], sizes = [56, 128], strides = [1, 1]} : vector<64x128xf32> to vector<56x128xf32>
    %19 = tpu.concatenate %17, %18 in 0 : vector<8x128xf32>, vector<56x128xf32> -> vector<64x128xf32>
    %20 = vector.extract_strided_slice %16 {offsets = [8, 0], sizes = [56, 128], strides = [1, 1]} : vector<64x128xf32> to vector<56x128xf32>
    %21 = tpu.concatenate %20, %17 in 0 : vector<56x128xf32>, vector<8x128xf32> -> vector<64x128xf32>
    %22 = arith.addf %19, %15 : vector<64x128xf32>
    %23 = arith.addf %22, %21 : vector<64x128xf32>
    %cst_7 = arith.constant 0.000000e+00 : f32
    %24 = vector.broadcast %cst_7 : f32 to vector<64x128xf32>
    %25 = arith.maximumf %23, %24 : vector<64x128xf32>
    %c0_8 = arith.constant 0 : index
    %c0_9 = arith.constant 0 : index
    %26 = vector.load %arg5[%c0_8, %c0_9] : memref<128x384xf32, #tpu.memory_space<vmem>>, vector<128x384xf32>
    %cst_10 = arith.constant dense<0.000000e+00> : vector<64x384xf32>
    %27 = tpu.matmul %25, %26, %cst_10 {dimension_numbers = #tpu.dot_dimension_numbers<[1], [0], [0], [1], [0, 0, 1, 1], [], []>} : vector<64x128xf32>, vector<128x384xf32>, vector<64x384xf32> -> vector<64x384xf32>
    %c0_11 = arith.constant 0 : index
    %c0_12 = arith.constant 0 : index
    %28 = vector.load %arg19[%c0_11, %c0_12] : memref<64x384xf32, #tpu.memory_space<vmem>>, vector<64x384xf32>
    tpu.vector_store %arg19[%c0_11, %c0_12], %27 {strides = array<i32>} : memref<64x384xf32, #tpu.memory_space<vmem>>, vector<64x384xf32>,
    %cst_13 = arith.constant 0.000000e+00 : f32
    %29 = vector.broadcast %cst_13 : f32 to vector<8x128xf32>
    %c0_14 = arith.constant 0 : index
    %c0_15 = arith.constant 0 : index
    %30 = vector.load %arg19[%c0_14, %c0_15] : memref<64x384xf32, #tpu.memory_space<vmem>>, vector<8x384xf32>
    %c0_16 = arith.constant 0 : index
    %c0_17 = arith.constant 0 : index
    %31 = vector.load %arg6[%c0_16, %c0_17] : memref<128x384xf32, #tpu.memory_space<vmem>>, vector<128x384xf32>
    %cst_18 = arith.constant dense<0.000000e+00> : vector<8x384xf32>
    %32 = tpu.matmul %29, %31, %cst_18 {dimension_numbers = #tpu.dot_dimension_numbers<[1], [0], [0], [1], [0, 0, 1, 1], [], []>} : vector<8x128xf32>, vector<128x384xf32>, vector<8x384xf32> -> vector<8x384xf32>
    %33 = vector.extract_strided_slice %30 {offsets = [0, 0], sizes = [8, 128], strides = [1, 1]} : vector<8x384xf32> to vector<8x128xf32>
    %34 = vector.extract_strided_slice %32 {offsets = [0, 0], sizes = [8, 128], strides = [1, 1]} : vector<8x384xf32> to vector<8x128xf32>
    %35 = arith.addf %33, %34 : vector<8x128xf32>
    %36 = arith.negf %35 : vector<8x128xf32>
    %37 = math.exp %36 : vector<8x128xf32>
    %cst_19 = arith.constant 1.000000e+00 : f32
    %38 = vector.broadcast %cst_19 : f32 to vector<8x128xf32>
    %39 = arith.addf %38, %37 : vector<8x128xf32>
    %40 = arith.divf %38, %39 : vector<8x128xf32>
    %41 = vector.extract_strided_slice %30 {offsets = [0, 128], sizes = [8, 128], strides = [1, 1]} : vector<8x384xf32> to vector<8x128xf32>
    %42 = vector.extract_strided_slice %32 {offsets = [0, 128], sizes = [8, 128], strides = [1, 1]} : vector<8x384xf32> to vector<8x128xf32>
    %43 = arith.addf %41, %42 : vector<8x128xf32>
    %44 = arith.negf %43 : vector<8x128xf32>
    %45 = math.exp %44 : vector<8x128xf32>
    %cst_20 = arith.constant 1.000000e+00 : f32
    %46 = vector.broadcast %cst_20 : f32 to vector<8x128xf32>
    %47 = arith.addf %46, %45 : vector<8x128xf32>
    %48 = arith.divf %46, %47 : vector<8x128xf32>
    %49 = vector.extract_strided_slice %30 {offsets = [0, 256], sizes = [8, 128], strides = [1, 1]} : vector<8x384xf32> to vector<8x128xf32>
    %50 = vector.extract_strided_slice %32 {offsets = [0, 256], sizes = [8, 128], strides = [1, 1]} : vector<8x384xf32> to vector<8x128xf32>
    %51 = arith.mulf %40, %50 : vector<8x128xf32>
    %52 = arith.addf %49, %51 : vector<8x128xf32>
    %53 = math.tanh %52 : vector<8x128xf32>
    %cst_21 = arith.constant 1.000000e+00 : f32
    %54 = vector.broadcast %cst_21 : f32 to vector<8x128xf32>
    %55 = arith.subf %54, %48 : vector<8x128xf32>
    %56 = arith.mulf %55, %53 : vector<8x128xf32>
    %57 = arith.mulf %48, %29 : vector<8x128xf32>
    %58 = arith.addf %56, %57 : vector<8x128xf32>
    %c8 = arith.constant 8 : index
    %c0_22 = arith.constant 0 : index
    %59 = vector.load %arg19[%c8, %c0_22] : memref<64x384xf32, #tpu.memory_space<vmem>>, vector<8x384xf32>
    %c0_23 = arith.constant 0 : index
    %c0_24 = arith.constant 0 : index
    %60 = vector.load %arg6[%c0_23, %c0_24] : memref<128x384xf32, #tpu.memory_space<vmem>>, vector<128x384xf32>
    %cst_25 = arith.constant dense<0.000000e+00> : vector<8x384xf32>
    %61 = tpu.matmul %58, %60, %cst_25 {dimension_numbers = #tpu.dot_dimension_numbers<[1], [0], [0], [1], [0, 0, 1, 1], [], []>} : vector<8x128xf32>, vector<128x384xf32>, vector<8x384xf32> -> vector<8x384xf32>
    %62 = vector.extract_strided_slice %59 {offsets = [0, 0], sizes = [8, 128], strides = [1, 1]} : vector<8x384xf32> to vector<8x128xf32>
    %63 = vector.extract_strided_slice %61 {offsets = [0, 0], sizes = [8, 128], strides = [1, 1]} : vector<8x384xf32> to vector<8x128xf32>
    %64 = arith.addf %62, %63 : vector<8x128xf32>
    %65 = arith.negf %64 : vector<8x128xf32>
    %66 = math.exp %65 : vector<8x128xf32>
    %cst_26 = arith.constant 1.000000e+00 : f32
    %67 = vector.broadcast %cst_26 : f32 to vector<8x128xf32>
    %68 = arith.addf %67, %66 : vector<8x128xf32>
    %69 = arith.divf %67, %68 : vector<8x128xf32>
    %70 = vector.extract_strided_slice %59 {offsets = [0, 128], sizes = [8, 128], strides = [1, 1]} : vector<8x384xf32> to vector<8x128xf32>
    %71 = vector.extract_strided_slice %61 {offsets = [0, 128], sizes = [8, 128], strides = [1, 1]} : vector<8x384xf32> to vector<8x128xf32>
    %72 = arith.addf %70, %71 : vector<8x128xf32>
    %73 = arith.negf %72 : vector<8x128xf32>
    %74 = math.exp %73 : vector<8x128xf32>
    %cst_27 = arith.constant 1.000000e+00 : f32
    %75 = vector.broadcast %cst_27 : f32 to vector<8x128xf32>
    %76 = arith.addf %75, %74 : vector<8x128xf32>
    %77 = arith.divf %75, %76 : vector<8x128xf32>
    %78 = vector.extract_strided_slice %59 {offsets = [0, 256], sizes = [8, 128], strides = [1, 1]} : vector<8x384xf32> to vector<8x128xf32>
    %79 = vector.extract_strided_slice %61 {offsets = [0, 256], sizes = [8, 128], strides = [1, 1]} : vector<8x384xf32> to vector<8x128xf32>
    %80 = arith.mulf %69, %79 : vector<8x128xf32>
    %81 = arith.addf %78, %80 : vector<8x128xf32>
    %82 = math.tanh %81 : vector<8x128xf32>
    %cst_28 = arith.constant 1.000000e+00 : f32
    %83 = vector.broadcast %cst_28 : f32 to vector<8x128xf32>
    %84 = arith.subf %83, %77 : vector<8x128xf32>
    %85 = arith.mulf %84, %82 : vector<8x128xf32>
    %86 = arith.mulf %77, %58 : vector<8x128xf32>
    %87 = arith.addf %85, %86 : vector<8x128xf32>
    %c16 = arith.constant 16 : index
    %c0_29 = arith.constant 0 : index
    %88 = vector.load %arg19[%c16, %c0_29] : memref<64x384xf32, #tpu.memory_space<vmem>>, vector<8x384xf32>
    %c0_30 = arith.constant 0 : index
    %c0_31 = arith.constant 0 : index
    %89 = vector.load %arg6[%c0_30, %c0_31] : memref<128x384xf32, #tpu.memory_space<vmem>>, vector<128x384xf32>
    %cst_32 = arith.constant dense<0.000000e+00> : vector<8x384xf32>
    %90 = tpu.matmul %87, %89, %cst_32 {dimension_numbers = #tpu.dot_dimension_numbers<[1], [0], [0], [1], [0, 0, 1, 1], [], []>} : vector<8x128xf32>, vector<128x384xf32>, vector<8x384xf32> -> vector<8x384xf32>
    %91 = vector.extract_strided_slice %88 {offsets = [0, 0], sizes = [8, 128], strides = [1, 1]} : vector<8x384xf32> to vector<8x128xf32>
    %92 = vector.extract_strided_slice %90 {offsets = [0, 0], sizes = [8, 128], strides = [1, 1]} : vector<8x384xf32> to vector<8x128xf32>
    %93 = arith.addf %91, %92 : vector<8x128xf32>
    %94 = arith.negf %93 : vector<8x128xf32>
    %95 = math.exp %94 : vector<8x128xf32>
    %cst_33 = arith.constant 1.000000e+00 : f32
    %96 = vector.broadcast %cst_33 : f32 to vector<8x128xf32>
    %97 = arith.addf %96, %95 : vector<8x128xf32>
    %98 = arith.divf %96, %97 : vector<8x128xf32>
    %99 = vector.extract_strided_slice %88 {offsets = [0, 128], sizes = [8, 128], strides = [1, 1]} : vector<8x384xf32> to vector<8x128xf32>
    %100 = vector.extract_strided_slice %90 {offsets = [0, 128], sizes = [8, 128], strides = [1, 1]} : vector<8x384xf32> to vector<8x128xf32>
    %101 = arith.addf %99, %100 : vector<8x128xf32>
    %102 = arith.negf %101 : vector<8x128xf32>
    %103 = math.exp %102 : vector<8x128xf32>
    %cst_34 = arith.constant 1.000000e+00 : f32
    %104 = vector.broadcast %cst_34 : f32 to vector<8x128xf32>
    %105 = arith.addf %104, %103 : vector<8x128xf32>
    %106 = arith.divf %104, %105 : vector<8x128xf32>
    %107 = vector.extract_strided_slice %88 {offsets = [0, 256], sizes = [8, 128], strides = [1, 1]} : vector<8x384xf32> to vector<8x128xf32>
    %108 = vector.extract_strided_slice %90 {offsets = [0, 256], sizes = [8, 128], strides = [1, 1]} : vector<8x384xf32> to vector<8x128xf32>
    %109 = arith.mulf %98, %108 : vector<8x128xf32>
    %110 = arith.addf %107, %109 : vector<8x128xf32>
    %111 = math.tanh %110 : vector<8x128xf32>
    %cst_35 = arith.constant 1.000000e+00 : f32
    %112 = vector.broadcast %cst_35 : f32 to vector<8x128xf32>
    %113 = arith.subf %112, %106 : vector<8x128xf32>
    %114 = arith.mulf %113, %111 : vector<8x128xf32>
    %115 = arith.mulf %106, %87 : vector<8x128xf32>
    %116 = arith.addf %114, %115 : vector<8x128xf32>
    %c24 = arith.constant 24 : index
    %c0_36 = arith.constant 0 : index
    %117 = vector.load %arg19[%c24, %c0_36] : memref<64x384xf32, #tpu.memory_space<vmem>>, vector<8x384xf32>
    %c0_37 = arith.constant 0 : index
    %c0_38 = arith.constant 0 : index
    %118 = vector.load %arg6[%c0_37, %c0_38] : memref<128x384xf32, #tpu.memory_space<vmem>>, vector<128x384xf32>
    %cst_39 = arith.constant dense<0.000000e+00> : vector<8x384xf32>
    %119 = tpu.matmul %116, %118, %cst_39 {dimension_numbers = #tpu.dot_dimension_numbers<[1], [0], [0], [1], [0, 0, 1, 1], [], []>} : vector<8x128xf32>, vector<128x384xf32>, vector<8x384xf32> -> vector<8x384xf32>
    %120 = vector.extract_strided_slice %117 {offsets = [0, 0], sizes = [8, 128], strides = [1, 1]} : vector<8x384xf32> to vector<8x128xf32>
    %121 = vector.extract_strided_slice %119 {offsets = [0, 0], sizes = [8, 128], strides = [1, 1]} : vector<8x384xf32> to vector<8x128xf32>
    %122 = arith.addf %120, %121 : vector<8x128xf32>
    %123 = arith.negf %122 : vector<8x128xf32>
    %124 = math.exp %123 : vector<8x128xf32>
    %cst_40 = arith.constant 1.000000e+00 : f32
    %125 = vector.broadcast %cst_40 : f32 to vector<8x128xf32>
    %126 = arith.addf %125, %124 : vector<8x128xf32>
    %127 = arith.divf %125, %126 : vector<8x128xf32>
    %128 = vector.extract_strided_slice %117 {offsets = [0, 128], sizes = [8, 128], strides = [1, 1]} : vector<8x384xf32> to vector<8x128xf32>
    %129 = vector.extract_strided_slice %119 {offsets = [0, 128], sizes = [8, 128], strides = [1, 1]} : vector<8x384xf32> to vector<8x128xf32>
    %130 = arith.addf %128, %129 : vector<8x128xf32>
    %131 = arith.negf %130 : vector<8x128xf32>
    %132 = math.exp %131 : vector<8x128xf32>
    %cst_41 = arith.constant 1.000000e+00 : f32
    %133 = vector.broadcast %cst_41 : f32 to vector<8x128xf32>
    %134 = arith.addf %133, %132 : vector<8x128xf32>
    %135 = arith.divf %133, %134 : vector<8x128xf32>
    %136 = vector.extract_strided_slice %117 {offsets = [0, 256], sizes = [8, 128], strides = [1, 1]} : vector<8x384xf32> to vector<8x128xf32>
    %137 = vector.extract_strided_slice %119 {offsets = [0, 256], sizes = [8, 128], strides = [1, 1]} : vector<8x384xf32> to vector<8x128xf32>
    %138 = arith.mulf %127, %137 : vector<8x128xf32>
    %139 = arith.addf %136, %138 : vector<8x128xf32>
    %140 = math.tanh %139 : vector<8x128xf32>
    %cst_42 = arith.constant 1.000000e+00 : f32
    %141 = vector.broadcast %cst_42 : f32 to vector<8x128xf32>
    %142 = arith.subf %141, %135 : vector<8x128xf32>
    %143 = arith.mulf %142, %140 : vector<8x128xf32>
    %144 = arith.mulf %135, %116 : vector<8x128xf32>
    %145 = arith.addf %143, %144 : vector<8x128xf32>
    %c32 = arith.constant 32 : index
    %c0_43 = arith.constant 0 : index
    %146 = vector.load %arg19[%c32, %c0_43] : memref<64x384xf32, #tpu.memory_space<vmem>>, vector<8x384xf32>
    %c0_44 = arith.constant 0 : index
    %c0_45 = arith.constant 0 : index
    %147 = vector.load %arg6[%c0_44, %c0_45] : memref<128x384xf32, #tpu.memory_space<vmem>>, vector<128x384xf32>
    %cst_46 = arith.constant dense<0.000000e+00> : vector<8x384xf32>
    %148 = tpu.matmul %145, %147, %cst_46 {dimension_numbers = #tpu.dot_dimension_numbers<[1], [0], [0], [1], [0, 0, 1, 1], [], []>} : vector<8x128xf32>, vector<128x384xf32>, vector<8x384xf32> -> vector<8x384xf32>
    %149 = vector.extract_strided_slice %146 {offsets = [0, 0], sizes = [8, 128], strides = [1, 1]} : vector<8x384xf32> to vector<8x128xf32>
    %150 = vector.extract_strided_slice %148 {offsets = [0, 0], sizes = [8, 128], strides = [1, 1]} : vector<8x384xf32> to vector<8x128xf32>
    %151 = arith.addf %149, %150 : vector<8x128xf32>
    %152 = arith.negf %151 : vector<8x128xf32>
    %153 = math.exp %152 : vector<8x128xf32>
    %cst_47 = arith.constant 1.000000e+00 : f32
    %154 = vector.broadcast %cst_47 : f32 to vector<8x128xf32>
    %155 = arith.addf %154, %153 : vector<8x128xf32>
    %156 = arith.divf %154, %155 : vector<8x128xf32>
    %157 = vector.extract_strided_slice %146 {offsets = [0, 128], sizes = [8, 128], strides = [1, 1]} : vector<8x384xf32> to vector<8x128xf32>
    %158 = vector.extract_strided_slice %148 {offsets = [0, 128], sizes = [8, 128], strides = [1, 1]} : vector<8x384xf32> to vector<8x128xf32>
    %159 = arith.addf %157, %158 : vector<8x128xf32>
    %160 = arith.negf %159 : vector<8x128xf32>
    %161 = math.exp %160 : vector<8x128xf32>
    %cst_48 = arith.constant 1.000000e+00 : f32
    %162 = vector.broadcast %cst_48 : f32 to vector<8x128xf32>
    %163 = arith.addf %162, %161 : vector<8x128xf32>
    %164 = arith.divf %162, %163 : vector<8x128xf32>
    %165 = vector.extract_strided_slice %146 {offsets = [0, 256], sizes = [8, 128], strides = [1, 1]} : vector<8x384xf32> to vector<8x128xf32>
    %166 = vector.extract_strided_slice %148 {offsets = [0, 256], sizes = [8, 128], strides = [1, 1]} : vector<8x384xf32> to vector<8x128xf32>
    %167 = arith.mulf %156, %166 : vector<8x128xf32>
    %168 = arith.addf %165, %167 : vector<8x128xf32>
    %169 = math.tanh %168 : vector<8x128xf32>
    %cst_49 = arith.constant 1.000000e+00 : f32
    %170 = vector.broadcast %cst_49 : f32 to vector<8x128xf32>
    %171 = arith.subf %170, %164 : vector<8x128xf32>
    %172 = arith.mulf %171, %169 : vector<8x128xf32>
    %173 = arith.mulf %164, %145 : vector<8x128xf32>
    %174 = arith.addf %172, %173 : vector<8x128xf32>
    %c40 = arith.constant 40 : index
    %c0_50 = arith.constant 0 : index
    %175 = vector.load %arg19[%c40, %c0_50] : memref<64x384xf32, #tpu.memory_space<vmem>>, vector<8x384xf32>
    %c0_51 = arith.constant 0 : index
    %c0_52 = arith.constant 0 : index
    %176 = vector.load %arg6[%c0_51, %c0_52] : memref<128x384xf32, #tpu.memory_space<vmem>>, vector<128x384xf32>
    %cst_53 = arith.constant dense<0.000000e+00> : vector<8x384xf32>
    %177 = tpu.matmul %174, %176, %cst_53 {dimension_numbers = #tpu.dot_dimension_numbers<[1], [0], [0], [1], [0, 0, 1, 1], [], []>} : vector<8x128xf32>, vector<128x384xf32>, vector<8x384xf32> -> vector<8x384xf32>
    %178 = vector.extract_strided_slice %175 {offsets = [0, 0], sizes = [8, 128], strides = [1, 1]} : vector<8x384xf32> to vector<8x128xf32>
    %179 = vector.extract_strided_slice %177 {offsets = [0, 0], sizes = [8, 128], strides = [1, 1]} : vector<8x384xf32> to vector<8x128xf32>
    %180 = arith.addf %178, %179 : vector<8x128xf32>
    %181 = arith.negf %180 : vector<8x128xf32>
    %182 = math.exp %181 : vector<8x128xf32>
    %cst_54 = arith.constant 1.000000e+00 : f32
    %183 = vector.broadcast %cst_54 : f32 to vector<8x128xf32>
    %184 = arith.addf %183, %182 : vector<8x128xf32>
    %185 = arith.divf %183, %184 : vector<8x128xf32>
    %186 = vector.extract_strided_slice %175 {offsets = [0, 128], sizes = [8, 128], strides = [1, 1]} : vector<8x384xf32> to vector<8x128xf32>
    %187 = vector.extract_strided_slice %177 {offsets = [0, 128], sizes = [8, 128], strides = [1, 1]} : vector<8x384xf32> to vector<8x128xf32>
    %188 = arith.addf %186, %187 : vector<8x128xf32>
    %189 = arith.negf %188 : vector<8x128xf32>
    %190 = math.exp %189 : vector<8x128xf32>
    %cst_55 = arith.constant 1.000000e+00 : f32
    %191 = vector.broadcast %cst_55 : f32 to vector<8x128xf32>
    %192 = arith.addf %191, %190 : vector<8x128xf32>
    %193 = arith.divf %191, %192 : vector<8x128xf32>
    %194 = vector.extract_strided_slice %175 {offsets = [0, 256], sizes = [8, 128], strides = [1, 1]} : vector<8x384xf32> to vector<8x128xf32>
    %195 = vector.extract_strided_slice %177 {offsets = [0, 256], sizes = [8, 128], strides = [1, 1]} : vector<8x384xf32> to vector<8x128xf32>
    %196 = arith.mulf %185, %195 : vector<8x128xf32>
    %197 = arith.addf %194, %196 : vector<8x128xf32>
    %198 = math.tanh %197 : vector<8x128xf32>
    %cst_56 = arith.constant 1.000000e+00 : f32
    %199 = vector.broadcast %cst_56 : f32 to vector<8x128xf32>
    %200 = arith.subf %199, %193 : vector<8x128xf32>
    %201 = arith.mulf %200, %198 : vector<8x128xf32>
    %202 = arith.mulf %193, %174 : vector<8x128xf32>
    %203 = arith.addf %201, %202 : vector<8x128xf32>
    %c48 = arith.constant 48 : index
    %c0_57 = arith.constant 0 : index
    %204 = vector.load %arg19[%c48, %c0_57] : memref<64x384xf32, #tpu.memory_space<vmem>>, vector<8x384xf32>
    %c0_58 = arith.constant 0 : index
    %c0_59 = arith.constant 0 : index
    %205 = vector.load %arg6[%c0_58, %c0_59] : memref<128x384xf32, #tpu.memory_space<vmem>>, vector<128x384xf32>
    %cst_60 = arith.constant dense<0.000000e+00> : vector<8x384xf32>
    %206 = tpu.matmul %203, %205, %cst_60 {dimension_numbers = #tpu.dot_dimension_numbers<[1], [0], [0], [1], [0, 0, 1, 1], [], []>} : vector<8x128xf32>, vector<128x384xf32>, vector<8x384xf32> -> vector<8x384xf32>
    %207 = vector.extract_strided_slice %204 {offsets = [0, 0], sizes = [8, 128], strides = [1, 1]} : vector<8x384xf32> to vector<8x128xf32>
    %208 = vector.extract_strided_slice %206 {offsets = [0, 0], sizes = [8, 128], strides = [1, 1]} : vector<8x384xf32> to vector<8x128xf32>
    %209 = arith.addf %207, %208 : vector<8x128xf32>
    %210 = arith.negf %209 : vector<8x128xf32>
    %211 = math.exp %210 : vector<8x128xf32>
    %cst_61 = arith.constant 1.000000e+00 : f32
    %212 = vector.broadcast %cst_61 : f32 to vector<8x128xf32>
    %213 = arith.addf %212, %211 : vector<8x128xf32>
    %214 = arith.divf %212, %213 : vector<8x128xf32>
    %215 = vector.extract_strided_slice %204 {offsets = [0, 128], sizes = [8, 128], strides = [1, 1]} : vector<8x384xf32> to vector<8x128xf32>
    %216 = vector.extract_strided_slice %206 {offsets = [0, 128], sizes = [8, 128], strides = [1, 1]} : vector<8x384xf32> to vector<8x128xf32>
    %217 = arith.addf %215, %216 : vector<8x128xf32>
    %218 = arith.negf %217 : vector<8x128xf32>
    %219 = math.exp %218 : vector<8x128xf32>
    %cst_62 = arith.constant 1.000000e+00 : f32
    %220 = vector.broadcast %cst_62 : f32 to vector<8x128xf32>
    %221 = arith.addf %220, %219 : vector<8x128xf32>
    %222 = arith.divf %220, %221 : vector<8x128xf32>
    %223 = vector.extract_strided_slice %204 {offsets = [0, 256], sizes = [8, 128], strides = [1, 1]} : vector<8x384xf32> to vector<8x128xf32>
    %224 = vector.extract_strided_slice %206 {offsets = [0, 256], sizes = [8, 128], strides = [1, 1]} : vector<8x384xf32> to vector<8x128xf32>
    %225 = arith.mulf %214, %224 : vector<8x128xf32>
    %226 = arith.addf %223, %225 : vector<8x128xf32>
    %227 = math.tanh %226 : vector<8x128xf32>
    %cst_63 = arith.constant 1.000000e+00 : f32
    %228 = vector.broadcast %cst_63 : f32 to vector<8x128xf32>
    %229 = arith.subf %228, %222 : vector<8x128xf32>
    %230 = arith.mulf %229, %227 : vector<8x128xf32>
    %231 = arith.mulf %222, %203 : vector<8x128xf32>
    %232 = arith.addf %230, %231 : vector<8x128xf32>
    %c56 = arith.constant 56 : index
    %c0_64 = arith.constant 0 : index
    %233 = vector.load %arg19[%c56, %c0_64] : memref<64x384xf32, #tpu.memory_space<vmem>>, vector<8x384xf32>
    %c0_65 = arith.constant 0 : index
    %c0_66 = arith.constant 0 : index
    %234 = vector.load %arg6[%c0_65, %c0_66] : memref<128x384xf32, #tpu.memory_space<vmem>>, vector<128x384xf32>
    %cst_67 = arith.constant dense<0.000000e+00> : vector<8x384xf32>
    %235 = tpu.matmul %232, %234, %cst_67 {dimension_numbers = #tpu.dot_dimension_numbers<[1], [0], [0], [1], [0, 0, 1, 1], [], []>} : vector<8x128xf32>, vector<128x384xf32>, vector<8x384xf32> -> vector<8x384xf32>
    %236 = vector.extract_strided_slice %233 {offsets = [0, 0], sizes = [8, 128], strides = [1, 1]} : vector<8x384xf32> to vector<8x128xf32>
    %237 = vector.extract_strided_slice %235 {offsets = [0, 0], sizes = [8, 128], strides = [1, 1]} : vector<8x384xf32> to vector<8x128xf32>
    %238 = arith.addf %236, %237 : vector<8x128xf32>
    %239 = arith.negf %238 : vector<8x128xf32>
    %240 = math.exp %239 : vector<8x128xf32>
    %cst_68 = arith.constant 1.000000e+00 : f32
    %241 = vector.broadcast %cst_68 : f32 to vector<8x128xf32>
    %242 = arith.addf %241, %240 : vector<8x128xf32>
    %243 = arith.divf %241, %242 : vector<8x128xf32>
    %244 = vector.extract_strided_slice %233 {offsets = [0, 128], sizes = [8, 128], strides = [1, 1]} : vector<8x384xf32> to vector<8x128xf32>
    %245 = vector.extract_strided_slice %235 {offsets = [0, 128], sizes = [8, 128], strides = [1, 1]} : vector<8x384xf32> to vector<8x128xf32>
    %246 = arith.addf %244, %245 : vector<8x128xf32>
    %247 = arith.negf %246 : vector<8x128xf32>
    %248 = math.exp %247 : vector<8x128xf32>
    %cst_69 = arith.constant 1.000000e+00 : f32
    %249 = vector.broadcast %cst_69 : f32 to vector<8x128xf32>
    %250 = arith.addf %249, %248 : vector<8x128xf32>
    %251 = arith.divf %249, %250 : vector<8x128xf32>
    %252 = vector.extract_strided_slice %233 {offsets = [0, 256], sizes = [8, 128], strides = [1, 1]} : vector<8x384xf32> to vector<8x128xf32>
    %253 = vector.extract_strided_slice %235 {offsets = [0, 256], sizes = [8, 128], strides = [1, 1]} : vector<8x384xf32> to vector<8x128xf32>
    %254 = arith.mulf %243, %253 : vector<8x128xf32>
    %255 = arith.addf %252, %254 : vector<8x128xf32>
    %256 = math.tanh %255 : vector<8x128xf32>
    %cst_70 = arith.constant 1.000000e+00 : f32
    %257 = vector.broadcast %cst_70 : f32 to vector<8x128xf32>
    %258 = arith.subf %257, %251 : vector<8x128xf32>
    %259 = arith.mulf %258, %256 : vector<8x128xf32>
    %260 = arith.mulf %251, %232 : vector<8x128xf32>
    %261 = arith.addf %259, %260 : vector<8x128xf32>
    %c0_71 = arith.constant 0 : index
    %c0_72 = arith.constant 0 : index
    %262 = vector.load %arg2[%c0_71, %c0_72] : memref<8x32xf32, #tpu.memory_space<vmem>>, vector<8x32xf32>
    %c0_73 = arith.constant 0 : index
    %c0_74 = arith.constant 0 : index
    %263 = vector.load %arg7[%c0_73, %c0_74] : memref<32x1024xbf16, #tpu.memory_space<vmem>>, vector<32x1024xbf16>
    %264 = arith.extf %263 : vector<32x1024xbf16> to vector<32x1024xf32>
    %cst_75 = arith.constant dense<0.000000e+00> : vector<8x1024xf32>
    %265 = tpu.matmul %262, %264, %cst_75 {dimension_numbers = #tpu.dot_dimension_numbers<[1], [0], [0], [1], [0, 0, 1, 1], [], []>} : vector<8x32xf32>, vector<32x1024xf32>, vector<8x1024xf32> -> vector<8x1024xf32>
    %c0_76 = arith.constant 0 : index
    %c0_77 = arith.constant 0 : index
    %266 = vector.load %arg8[%c0_76, %c0_77] : memref<128x1024xbf16, #tpu.memory_space<vmem>>, vector<128x1024xbf16>
    %267 = arith.extf %266 : vector<128x1024xbf16> to vector<128x1024xf32>
    %cst_78 = arith.constant dense<0.000000e+00> : vector<8x1024xf32>
    %268 = tpu.matmul %261, %267, %cst_78 {dimension_numbers = #tpu.dot_dimension_numbers<[1], [0], [0], [1], [0, 0, 1, 1], [], []>} : vector<8x128xf32>, vector<128x1024xf32>, vector<8x1024xf32> -> vector<8x1024xf32>
    %269 = arith.addf %265, %268 : vector<8x1024xf32>
    %c0_79 = arith.constant 0 : index
    %c0_80 = arith.constant 0 : index
    %270 = vector.load %arg9[%c0_79, %c0_80] : memref<1x1024xf32, #tpu.memory_space<vmem>>, vector<1x1024xf32>
    %271 = vector.broadcast %270 : vector<1x1024xf32> to vector<8x1024xf32>
    %272 = arith.addf %269, %271 : vector<8x1024xf32>
    %cst_81 = arith.constant 0.000000e+00 : f32
    %273 = vector.broadcast %cst_81 : f32 to vector<8x1024xf32>
    %274 = arith.maximumf %272, %273 : vector<8x1024xf32>
    %275 = vector.extract_strided_slice %274 {offsets = [0, 0], sizes = [8, 512], strides = [1, 1]} : vector<8x1024xf32> to vector<8x512xf32>
    %276 = vector.extract_strided_slice %274 {offsets = [0, 512], sizes = [8, 512], strides = [1, 1]} : vector<8x1024xf32> to vector<8x512xf32>
    %c0_82 = arith.constant 0 : index
    %c0_83 = arith.constant 0 : index
    %277 = vector.load %arg10[%c0_82, %c0_83] : memref<512x256xbf16, #tpu.memory_space<vmem>>, vector<512x256xbf16>
    %278 = arith.extf %277 : vector<512x256xbf16> to vector<512x256xf32>
    %cst_84 = arith.constant dense<0.000000e+00> : vector<8x256xf32>
    %279 = tpu.matmul %275, %278, %cst_84 {dimension_numbers = #tpu.dot_dimension_numbers<[1], [0], [0], [1], [0, 0, 1, 1], [], []>} : vector<8x512xf32>, vector<512x256xf32>, vector<8x256xf32> -> vector<8x256xf32>
    %c0_85 = arith.constant 0 : index
    %c0_86 = arith.constant 0 : index
    %280 = vector.load %arg11[%c0_85, %c0_86] : memref<1x256xf32, #tpu.memory_space<vmem>>, vector<1x256xf32>
    %281 = vector.broadcast %280 : vector<1x256xf32> to vector<8x256xf32>
    %282 = arith.addf %279, %281 : vector<8x256xf32>
    %cst_87 = arith.constant 0.000000e+00 : f32
    %283 = vector.broadcast %cst_87 : f32 to vector<8x256xf32>
    %284 = arith.maximumf %282, %283 : vector<8x256xf32>
    %c0_88 = arith.constant 0 : index
    %c0_89 = arith.constant 0 : index
    %285 = vector.load %arg12[%c0_88, %c0_89] : memref<512x256xbf16, #tpu.memory_space<vmem>>, vector<512x256xbf16>
    %286 = arith.extf %285 : vector<512x256xbf16> to vector<512x256xf32>
    %cst_90 = arith.constant dense<0.000000e+00> : vector<8x256xf32>
    %287 = tpu.matmul %276, %286, %cst_90 {dimension_numbers = #tpu.dot_dimension_numbers<[1], [0], [0], [1], [0, 0, 1, 1], [], []>} : vector<8x512xf32>, vector<512x256xf32>, vector<8x256xf32> -> vector<8x256xf32>
    %c0_91 = arith.constant 0 : index
    %c0_92 = arith.constant 0 : index
    %288 = vector.load %arg13[%c0_91, %c0_92] : memref<1x256xf32, #tpu.memory_space<vmem>>, vector<1x256xf32>
    %289 = vector.broadcast %288 : vector<1x256xf32> to vector<8x256xf32>
    %290 = arith.addf %287, %289 : vector<8x256xf32>
    %cst_93 = arith.constant 0.000000e+00 : f32
    %291 = vector.broadcast %cst_93 : f32 to vector<8x256xf32>
    %292 = arith.maximumf %290, %291 : vector<8x256xf32>
    %c0_94 = arith.constant 0 : index
    %c0_95 = arith.constant 0 : index
    %293 = vector.load %arg14[%c0_94, %c0_95] : memref<256x128xbf16, #tpu.memory_space<vmem>>, vector<256x128xbf16>
    %294 = arith.extf %293 : vector<256x128xbf16> to vector<256x128xf32>
    %cst_96 = arith.constant dense<0.000000e+00> : vector<8x128xf32>
    %295 = tpu.matmul %284, %294, %cst_96 {dimension_numbers = #tpu.dot_dimension_numbers<[1], [0], [0], [1], [0, 0, 1, 1], [], []>} : vector<8x256xf32>, vector<256x128xf32>, vector<8x128xf32> -> vector<8x128xf32>
    %c0_97 = arith.constant 0 : index
    %c0_98 = arith.constant 0 : index
    %296 = vector.load %arg15[%c0_97, %c0_98] : memref<1x128xf32, #tpu.memory_space<vmem>>, vector<1x128xf32>
    %297 = vector.broadcast %296 : vector<1x128xf32> to vector<8x128xf32>
    %298 = arith.addf %295, %297 : vector<8x128xf32>
    %c0_99 = arith.constant 0 : index
    %c0_100 = arith.constant 0 : index
    %299 = vector.load %arg18[%c0_99, %c0_100] : memref<8x256xf32, #tpu.memory_space<vmem>>, vector<8x128xf32>
    tpu.vector_store %arg18[%c0_99, %c0_100], %298 {strides = array<i32>} : memref<8x256xf32, #tpu.memory_space<vmem>>, vector<8x128xf32>,
    %c0_101 = arith.constant 0 : index
    %c0_102 = arith.constant 0 : index
    %300 = vector.load %arg16[%c0_101, %c0_102] : memref<256x128xbf16, #tpu.memory_space<vmem>>, vector<256x128xbf16>
    %301 = arith.extf %300 : vector<256x128xbf16> to vector<256x128xf32>
    %cst_103 = arith.constant dense<0.000000e+00> : vector<8x128xf32>
    %302 = tpu.matmul %292, %301, %cst_103 {dimension_numbers = #tpu.dot_dimension_numbers<[1], [0], [0], [1], [0, 0, 1, 1], [], []>} : vector<8x256xf32>, vector<256x128xf32>, vector<8x128xf32> -> vector<8x128xf32>
    %c0_104 = arith.constant 0 : index
    %c0_105 = arith.constant 0 : index
    %303 = vector.load %arg17[%c0_104, %c0_105] : memref<1x128xf32, #tpu.memory_space<vmem>>, vector<1x128xf32>
    %304 = vector.broadcast %303 : vector<1x128xf32> to vector<8x128xf32>
    %305 = arith.addf %302, %304 : vector<8x128xf32>
    %c0_106 = arith.constant 0 : index
    %c128 = arith.constant 128 : index
    %306 = vector.load %arg18[%c0_106, %c128] : memref<8x256xf32, #tpu.memory_space<vmem>>, vector<8x128xf32>
    tpu.vector_store %arg18[%c0_106, %c128], %305 {strides = array<i32>} : memref<8x256xf32, #tpu.memory_space<vmem>>, vector<8x128xf32>,
    return
  }
}

</mosaic_0001>

<llo_original>
// kernel: tpu_custom_call.1
$region0: #{tpu_custom_call.1}
  #allocation0 [shape = 'u32[]', space=smem, size = 0x4, offset = 0x4, fixed_abs, tag = 'smem constant byte address 0x4 - core index']
  #allocation1 [shape = 'u32[144,128]{1,0:T(1,128)}', space=vmem, size = 0x12000, scoped, tag = 'internal scratch']
  #allocation2 [shape = 'f32[64,384]{1,0:T(8,128)}', space=vmem, size = 0x18000, scoped, tag = 'scratch operand']
  %s0 = inlined_call_operand.vmem [shape: f32[64,2], index: 0, kind: input, shape index: {}]
  %s1 = inlined_call_operand.vmem [shape: f32[64,2], index: 1, kind: input, shape index: {}]
  %s2 = inlined_call_operand.vmem [shape: f32[8,32], index: 2, kind: input, shape index: {}]
  %s3 = inlined_call_operand.hbm [shape: f32[1,384], index: 3, kind: input, shape index: {}]
  %s4 = inlined_call_operand.hbm [shape: f32[1,384], index: 4, kind: input, shape index: {}]
  %s5 = inlined_call_operand.hbm [shape: f32[128,384], index: 5, kind: input, shape index: {}]
  %s6 = inlined_call_operand.hbm [shape: f32[128,384], index: 6, kind: input, shape index: {}]
  %s7 = inlined_call_operand.vmem [shape: bf16[32,1024], index: 7, kind: input, shape index: {}]
  %s8 = inlined_call_operand.hbm [shape: bf16[128,1024], index: 8, kind: input, shape index: {}]
  %s9 = inlined_call_operand.vmem [shape: f32[1,1024], index: 9, kind: input, shape index: {}]
  %s10 = inlined_call_operand.hbm [shape: bf16[512,256], index: 10, kind: input, shape index: {}]
  %s11 = inlined_call_operand.vmem [shape: f32[1,256], index: 11, kind: input, shape index: {}]
  %s12 = inlined_call_operand.hbm [shape: bf16[512,256], index: 12, kind: input, shape index: {}]
  %s13 = inlined_call_operand.vmem [shape: f32[1,256], index: 13, kind: input, shape index: {}]
  %s14 = inlined_call_operand.hbm [shape: bf16[256,128], index: 14, kind: input, shape index: {}]
  %s15 = inlined_call_operand.vmem [shape: f32[1,128], index: 15, kind: input, shape index: {}]
  %s16 = inlined_call_operand.hbm [shape: bf16[256,128], index: 16, kind: input, shape index: {}]
  %s17 = inlined_call_operand.vmem [shape: f32[1,128], index: 17, kind: input, shape index: {}]
  %s18 = inlined_call_operand.hbm [shape: f32[8,256], index: 18, kind: output, shape index: {}]
  %s19 = sld [smem:[#allocation0]]
  $region118: #{tpu_custom_call.1} parent=0
    _
  %s21 = ssub.s32 1, %s19
  %s22 = scalar_select 0, %s21, %s19
  $region1: #{tpu_custom_call.1} parent=0
    #allocation3 [shape = 'u8[1536]{0}', space=vmem, size = 0x800, scoped, tag = 'input window, operand 3, single buffered']
    #allocation4 [shape = 's32[1]{0}', space=sflag, size = 0x4, scoped, tag = 'scoped memory for tpu_custom_call.1']
    #allocation5 [shape = 's32[1]{0}', space=sflag, size = 0x4, scoped, tag = 'scoped memory for tpu_custom_call.1']
    #allocation6 [shape = 'u8[1536]{0}', space=vmem, size = 0x800, scoped, tag = 'input window, operand 4, single buffered']
    #allocation7 [shape = 's32[1]{0}', space=sflag, size = 0x4, scoped, tag = 'scoped memory for tpu_custom_call.1']
    #allocation8 [shape = 'u8[196608]{0}', space=vmem, size = 0x30000, scoped, tag = 'input window, operand 5, single buffered']
    #allocation9 [shape = 'u8[196608]{0}', space=vmem, size = 0x30000, scoped, tag = 'input window, operand 6, single buffered']
    #allocation10 [shape = 's32[1]{0}', space=sflag, size = 0x4, scoped, tag = 'scoped memory for tpu_custom_call.1']
    #allocation11 [shape = 'u8[262144]{0}', space=vmem, size = 0x40000, scoped, tag = 'input window, operand 8, single buffered']
    #allocation12 [shape = 'u8[262144]{0}', space=vmem, size = 0x40000, scoped, tag = 'input window, operand 10, single buffered']
    #allocation13 [shape = 's32[1]{0}', space=sflag, size = 0x4, scoped, tag = 'scoped memory for tpu_custom_call.1']
    #allocation14 [shape = 'u8[262144]{0}', space=vmem, size = 0x40000, scoped, tag = 'input window, operand 12, single buffered']
    #allocation15 [shape = 'u8[65536]{0}', space=vmem, size = 0x10000, scoped, tag = 'input window, operand 14, single buffered']
    #allocation16 [shape = 's32[1]{0}', space=sflag, size = 0x4, scoped, tag = 'scoped memory for tpu_custom_call.1']
    #allocation17 [shape = 'u8[65536]{0}', space=vmem, size = 0x10000, scoped, tag = 'input window, operand 16, single buffered']
    #allocation18 [shape = 'u8[8192]{0}', space=vmem, size = 0x2000, scoped, tag = 'output window, operand 0, single buffered']
    %23 = vsyncpa [#allocation4], 0
    %24 = vsyncpa [#allocation7], 0
    %25 = vsyncpa [#allocation10], 0
    %26 = vsyncpa [#allocation13], 0
    %27 = vsyncpa [#allocation16], 0
    %28 = vsyncpa [#allocation5], 0
    // Predicated region
    $region2: #{tpu_custom_call.1} parent=1 // pred_check
      _
    $region3: #{tpu_custom_call.1} parent=1 // pred_check_branch
      %30 = sbr.rel (0) target = $region5
    $region4: #{tpu_custom_call.1} parent=1 // pred_region
      _
    $region5: #{tpu_custom_call.1} parent=1 // pred_fallthru
      _
    // Predicated region
    $region6: #{tpu_custom_call.1} parent=1 // pred_check
      _
    $region7: #{tpu_custom_call.1} parent=1 // pred_check_branch
      %32 = sbr.rel (0) target = $region9
    $region8: #{tpu_custom_call.1} parent=1 // pred_region
      _
    $region9: #{tpu_custom_call.1} parent=1 // pred_fallthru
      _
    // Predicated region
    $region10: #{tpu_custom_call.1} parent=1 // pred_check
      _
    $region11: #{tpu_custom_call.1} parent=1 // pred_check_branch
      %34 = sbr.rel (0) target = $region13
    $region12: #{tpu_custom_call.1} parent=1 // pred_region
      _
    $region13: #{tpu_custom_call.1} parent=1 // pred_fallthru
      _
    // Predicated region
    $region14: #{tpu_custom_call.1} parent=1 // pred_check
      _
    $region15: #{tpu_custom_call.1} parent=1 // pred_check_branch
      %36 = sbr.rel (0) target = $region17
    $region16: #{tpu_custom_call.1} parent=1 // pred_region
      %s38 = ssub.s32 48, 48
      %39 = vsyncadd [#allocation4], %s38
      %s41 = sshll.u32 [#allocation3], 4
      %s42 = int_to_ptr.vmem [resolvable:$true] %s41
      %44 = dma.hbm_to_vmem [thread:$0]  %s3, 48, %s42, [#allocation4]
    $region17: #{tpu_custom_call.1} parent=1 // pred_fallthru
      _
    // Predicated region
    $region18: #{tpu_custom_call.1} parent=1 // pred_check
      _
    $region19: #{tpu_custom_call.1} parent=1 // pred_check_branch
      %46 = sbr.rel (0) target = $region21
    $region20: #{tpu_custom_call.1} parent=1 // pred_region
      %s48 = ssub.s32 48, 48
      %49 = vsyncadd [#allocation7], %s48
      %s51 = sshll.u32 [#allocation6], 4
      %s52 = int_to_ptr.vmem [resolvable:$true] %s51
      %54 = dma.hbm_to_vmem [thread:$0]  %s4, 48, %s52, [#allocation7]
    $region21: #{tpu_custom_call.1} parent=1 // pred_fallthru
      _
    // Predicated region
    $region22: #{tpu_custom_call.1} parent=1 // pred_check
      _
    $region23: #{tpu_custom_call.1} parent=1 // pred_check_branch
      %56 = sbr.rel (0) target = $region25
    $region24: #{tpu_custom_call.1} parent=1 // pred_region
      %s58 = ssub.s32 6144, 6144
      %59 = vsyncadd [#allocation7], %s58
      %s60 = sshll.u32 [#allocation8], 4
      %s61 = int_to_ptr.vmem [resolvable:$true] %s60
      %66 = dma.hbm_to_vmem [thread:$0]  %s5, 6144, %s61, [#allocation7], 384, 384, 24
    $region25: #{tpu_custom_call.1} parent=1 // pred_fallthru
      _
    // Predicated region
    $region26: #{tpu_custom_call.1} parent=1 // pred_check
      _
    $region27: #{tpu_custom_call.1} parent=1 // pred_check_branch
      %68 = sbr.rel (0) target = $region29
    $region28: #{tpu_custom_call.1} parent=1 // pred_region
      %s70 = ssub.s32 6144, 6144
      %71 = vsyncadd [#allocation10], %s70
      %s72 = sshll.u32 [#allocation9], 4
      %s73 = int_to_ptr.vmem [resolvable:$true] %s72
      %78 = dma.hbm_to_vmem [thread:$0]  %s6, 6144, %s73, [#allocation10], 384, 384, 24
    $region29: #{tpu_custom_call.1} parent=1 // pred_fallthru
      _
    // Predicated region
    $region30: #{tpu_custom_call.1} parent=1 // pred_check
      _
    $region31: #{tpu_custom_call.1} parent=1 // pred_check_branch
      %80 = sbr.rel (0) target = $region33
    $region32: #{tpu_custom_call.1} parent=1 // pred_region
      _
    $region33: #{tpu_custom_call.1} parent=1 // pred_fallthru
      _
    // Predicated region
    $region34: #{tpu_custom_call.1} parent=1 // pred_check
      _
    $region35: #{tpu_custom_call.1} parent=1 // pred_check_branch
      %82 = sbr.rel (0) target = $region37
    $region36: #{tpu_custom_call.1} parent=1 // pred_region
      %s84 = ssub.s32 8192, 8192
      %85 = vsyncadd [#allocation10], %s84
      %s86 = sshll.u32 [#allocation11], 4
      %s87 = int_to_ptr.vmem [resolvable:$true] %s86
      %92 = dma.hbm_to_vmem [thread:$0]  %s8, 8192, %s87, [#allocation10], 512, 512, 32
    $region37: #{tpu_custom_call.1} parent=1 // pred_fallthru
      _
    // Predicated region
    $region38: #{tpu_custom_call.1} parent=1 // pred_check
      _
    $region39: #{tpu_custom_call.1} parent=1 // pred_check_branch
      %94 = sbr.rel (0) target = $region41
    $region40: #{tpu_custom_call.1} parent=1 // pred_region
      _
    $region41: #{tpu_custom_call.1} parent=1 // pred_fallthru
      _
    // Predicated region
    $region42: #{tpu_custom_call.1} parent=1 // pred_check
      _
    $region43: #{tpu_custom_call.1} parent=1 // pred_check_branch
      %96 = sbr.rel (0) target = $region45
    $region44: #{tpu_custom_call.1} parent=1 // pred_region
      %s98 = ssub.s32 8192, 8192
      %99 = vsyncadd [#allocation13], %s98
      %s100 = sshll.u32 [#allocation12], 4
      %s101 = int_to_ptr.vmem [resolvable:$true] %s100
      %106 = dma.hbm_to_vmem [thread:$0]  %s10, 8192, %s101, [#allocation13], 128, 128, 8
    $region45: #{tpu_custom_call.1} parent=1 // pred_fallthru
      _
    // Predicated region
    $region46: #{tpu_custom_call.1} parent=1 // pred_check
      _
    $region47: #{tpu_custom_call.1} parent=1 // pred_check_branch
      %108 = sbr.rel (0) target = $region49
    $region48: #{tpu_custom_call.1} parent=1 // pred_region
      _
    $region49: #{tpu_custom_call.1} parent=1 // pred_fallthru
      _
    // Predicated region
    $region50: #{tpu_custom_call.1} parent=1 // pred_check
      _
    $region51: #{tpu_custom_call.1} parent=1 // pred_check_branch
      %110 = sbr.rel (0) target = $region53
    $region52: #{tpu_custom_call.1} parent=1 // pred_region
      %s112 = ssub.s32 8192, 8192
      %113 = vsyncadd [#allocation13], %s112
      %s114 = sshll.u32 [#allocation14], 4
      %s115 = int_to_ptr.vmem [resolvable:$true] %s114
      %120 = dma.hbm_to_vmem [thread:$0]  %s12, 8192, %s115, [#allocation13], 128, 128, 8
    $region53: #{tpu_custom_call.1} parent=1 // pred_fallthru
      _
    // Predicated region
    $region54: #{tpu_custom_call.1} parent=1 // pred_check
      _
    $region55: #{tpu_custom_call.1} parent=1 // pred_check_branch
      %122 = sbr.rel (0) target = $region57
    $region56: #{tpu_custom_call.1} parent=1 // pred_region
      _
    $region57: #{tpu_custom_call.1} parent=1 // pred_fallthru
      _
    // Predicated region
    $region58: #{tpu_custom_call.1} parent=1 // pred_check
      _
    $region59: #{tpu_custom_call.1} parent=1 // pred_check_branch
      %124 = sbr.rel (0) target = $region61
    $region60: #{tpu_custom_call.1} parent=1 // pred_region
      %s126 = ssub.s32 2048, 2048
      %127 = vsyncadd [#allocation16], %s126
      %s128 = sshll.u32 [#allocation15], 4
      %s129 = int_to_ptr.vmem [resolvable:$true] %s128
      %134 = dma.hbm_to_vmem [thread:$0]  %s14, 2048, %s129, [#allocation16], 64, 64, 4
    $region61: #{tpu_custom_call.1} parent=1 // pred_fallthru
      _
    // Predicated region
    $region62: #{tpu_custom_call.1} parent=1 // pred_check
      _
    $region63: #{tpu_custom_call.1} parent=1 // pred_check_branch
      %136 = sbr.rel (0) target = $region65
    $region64: #{tpu_custom_call.1} parent=1 // pred_region
      _
    $region65: #{tpu_custom_call.1} parent=1 // pred_fallthru
      _
    // Predicated region
    $region66: #{tpu_custom_call.1} parent=1 // pred_check
      _
    $region67: #{tpu_custom_call.1} parent=1 // pred_check_branch
      %138 = sbr.rel (0) target = $region69
    $region68: #{tpu_custom_call.1} parent=1 // pred_region
      %s140 = ssub.s32 2048, 2048
      %141 = vsyncadd [#allocation16], %s140
      %s142 = sshll.u32 [#allocation17], 4
      %s143 = int_to_ptr.vmem [resolvable:$true] %s142
      %148 = dma.hbm_to_vmem [thread:$0]  %s16, 2048, %s143, [#allocation16], 64, 64, 4
    $region69: #{tpu_custom_call.1} parent=1 // pred_fallthru
      _
    // Predicated region
    $region70: #{tpu_custom_call.1} parent=1 // pred_check
      _
    $region71: #{tpu_custom_call.1} parent=1 // pred_check_branch
      %150 = sbr.rel (0) target = $region73
    $region72: #{tpu_custom_call.1} parent=1 // pred_region
      _
    $region73: #{tpu_custom_call.1} parent=1 // pred_fallthru
      _
    // Predicated region
    $region74: #{tpu_custom_call.1} parent=1 // pred_check
      _
    $region75: #{tpu_custom_call.1} parent=1 // pred_check_branch
      %152 = sbr.rel (0) target = $region77
    $region76: #{tpu_custom_call.1} parent=1 // pred_region
      %153 = dma.done [#allocation4], 48
    $region77: #{tpu_custom_call.1} parent=1 // pred_fallthru
      _
    // Predicated region
    $region78: #{tpu_custom_call.1} parent=1 // pred_check
      _
    $region79: #{tpu_custom_call.1} parent=1 // pred_check_branch
      %155 = sbr.rel (0) target = $region81
    $region80: #{tpu_custom_call.1} parent=1 // pred_region
      %156 = dma.done [#allocation7], 48
    $region81: #{tpu_custom_call.1} parent=1 // pred_fallthru
      _
    // Predicated region
    $region82: #{tpu_custom_call.1} parent=1 // pred_check
      _
    $region83: #{tpu_custom_call.1} parent=1 // pred_check_branch
      %158 = sbr.rel (0) target = $region85
    $region84: #{tpu_custom_call.1} parent=1 // pred_region
      %159 = dma.done [#allocation7], 6144
    $region85: #{tpu_custom_call.1} parent=1 // pred_fallthru
      _
    // Predicated region
    $region86: #{tpu_custom_call.1} parent=1 // pred_check
      _
    $region87: #{tpu_custom_call.1} parent=1 // pred_check_branch
      %161 = sbr.rel (0) target = $region89
    $region88: #{tpu_custom_call.1} parent=1 // pred_region
      %162 = dma.done [#allocation10], 6144
    $region89: #{tpu_custom_call.1} parent=1 // pred_fallthru
      _
    // Predicated region
    $region90: #{tpu_custom_call.1} parent=1 // pred_check
      _
    $region91: #{tpu_custom_call.1} parent=1 // pred_check_branch
      %164 = sbr.rel (0) target = $region93
    $region92: #{tpu_custom_call.1} parent=1 // pred_region
      %165 = dma.done [#allocation10], 8192
    $region93: #{tpu_custom_call.1} parent=1 // pred_fallthru
      _
    // Predicated region
    $region94: #{tpu_custom_call.1} parent=1 // pred_check
      _
    $region95: #{tpu_custom_call.1} parent=1 // pred_check_branch
      %167 = sbr.rel (0) target = $region97
    $region96: #{tpu_custom_call.1} parent=1 // pred_region
      %168 = dma.done [#allocation13], 8192
    $region97: #{tpu_custom_call.1} parent=1 // pred_fallthru
      _
    // Predicated region
    $region98: #{tpu_custom_call.1} parent=1 // pred_check
      _
    $region99: #{tpu_custom_call.1} parent=1 // pred_check_branch
      %170 = sbr.rel (0) target = $region101
    $region100: #{tpu_custom_call.1} parent=1 // pred_region
      %171 = dma.done [#allocation13], 8192
    $region101: #{tpu_custom_call.1} parent=1 // pred_fallthru
      _
    // Predicated region
    $region102: #{tpu_custom_call.1} parent=1 // pred_check
      _
    $region103: #{tpu_custom_call.1} parent=1 // pred_check_branch
      %173 = sbr.rel (0) target = $region105
    $region104: #{tpu_custom_call.1} parent=1 // pred_region
      %174 = dma.done [#allocation16], 2048
    $region105: #{tpu_custom_call.1} parent=1 // pred_fallthru
      _
    // Predicated region
    $region106: #{tpu_custom_call.1} parent=1 // pred_check
      _
    $region107: #{tpu_custom_call.1} parent=1 // pred_check_branch
      %176 = sbr.rel (0) target = $region109
    $region108: #{tpu_custom_call.1} parent=1 // pred_region
      %177 = dma.done [#allocation16], 2048
    $region109: #{tpu_custom_call.1} parent=1 // pred_fallthru
      _
    %v178 = vld [vmem:[%s0] sm:$0xff]
    %v179 = vld [vmem:[%s0 + $0x8] sm:$0xff]
    %v180 = vld [vmem:[%s0 + $0x10] sm:$0xff]
    %v181 = vld [vmem:[%s0 + $0x18] sm:$0xff]
    %v182 = vld [vmem:[%s0 + $0x20] sm:$0xff]
    %v183 = vld [vmem:[%s0 + $0x28] sm:$0xff]
    %v184 = vld [vmem:[%s0 + $0x30] sm:$0xff]
    %v185 = vld [vmem:[%s0 + $0x38] sm:$0xff]
    %v186 = vld [vmem:[%s1] sm:$0xff]
    %v187 = vld [vmem:[%s1 + $0x8] sm:$0xff]
    %v188 = vld [vmem:[%s1 + $0x10] sm:$0xff]
    %v189 = vld [vmem:[%s1 + $0x18] sm:$0xff]
    %v190 = vld [vmem:[%s1 + $0x20] sm:$0xff]
    %v191 = vld [vmem:[%s1 + $0x28] sm:$0xff]
    %v192 = vld [vmem:[%s1 + $0x30] sm:$0xff]
    %v193 = vld [vmem:[%s1 + $0x38] sm:$0xff]
    %v194 = vsub.f32 %v178, %v186
    %v195 = vsub.f32 %v179, %v187
    %v196 = vsub.f32 %v180, %v188
    %v197 = vsub.f32 %v181, %v189
    %v198 = vsub.f32 %v182, %v190
    %v199 = vsub.f32 %v183, %v191
    %v200 = vsub.f32 %v184, %v192
    %v201 = vsub.f32 %v185, %v193
    %v202 = vld [vmem:[#allocation3] sm:$0x7]
    %204 = vset.pattern.permute.xlu0 0
    %205 = vperm.xlu0 %204, %v194
    %v206 = vpop.permute.xlu0 %205
    %209 = vset.pattern.permute.xlu0 0
    %210 = vperm.xlu0 %209, %v195
    %v211 = vpop.permute.xlu0 %210
    %214 = vset.pattern.permute.xlu0 0
    %215 = vperm.xlu0 %214, %v196
    %v216 = vpop.permute.xlu0 %215
    %219 = vset.pattern.permute.xlu0 0
    %220 = vperm.xlu0 %219, %v197
    %v221 = vpop.permute.xlu0 %220
    %224 = vset.pattern.permute.xlu0 0
    %225 = vperm.xlu0 %224, %v198
    %v226 = vpop.permute.xlu0 %225
    %229 = vset.pattern.permute.xlu0 0
    %230 = vperm.xlu0 %229, %v199
    %v231 = vpop.permute.xlu0 %230
    %234 = vset.pattern.permute.xlu0 0
    %235 = vperm.xlu0 %234, %v200
    %v236 = vpop.permute.xlu0 %235
    %239 = vset.pattern.permute.xlu0 0
    %240 = vperm.xlu0 %239, %v201
    %v241 = vpop.permute.xlu0 %240
    %v244 = vlaneseq
    %v245 = vshrl.u32 %v244, 7
    %v246 = vsub.s32 0, %v245
    %v247 = vrot.slane %v202, %v246
    %v248 = vlaneseq
    %v249 = vshrl.u32 %v248, 7
    %v250 = vsub.s32 1, %v249
    %v251 = vrot.slane %v202, %v250
    %v252 = vlaneseq
    %v253 = vshrl.u32 %v252, 7
    %v254 = vsub.s32 2, %v253
    %v255 = vrot.slane %v202, %v254
    %v259 = vmul.f32 %v206, %v247
    %v260 = vmul.f32 %v206, %v251
    %v261 = vmul.f32 %v211, %v247
    %v262 = vmul.f32 %v211, %v251
    %v263 = vmul.f32 %v211, %v255
    %v264 = vmul.f32 %v216, %v247
    %v265 = vmul.f32 %v216, %v251
    %v266 = vmul.f32 %v216, %v255
    %v267 = vmul.f32 %v221, %v247
    %v268 = vmul.f32 %v221, %v251
    %v269 = vmul.f32 %v221, %v255
    %v270 = vmul.f32 %v226, %v247
    %v271 = vmul.f32 %v226, %v251
    %v272 = vmul.f32 %v226, %v255
    %v273 = vmul.f32 %v231, %v247
    %v274 = vmul.f32 %v231, %v251
    %v275 = vmul.f32 %v231, %v255
    %v276 = vmul.f32 %v236, %v247
    %v277 = vmul.f32 %v236, %v251
    %v278 = vmul.f32 %v236, %v255
    %v279 = vmul.f32 %v241, %v251
    %v280 = vmul.f32 %v241, %v255
    %v281 = vld [vmem:[#allocation6] sm:$0x7]
    %282 = vset.pattern.permute.xlu0 1
    %283 = vperm.xlu0 %282, %v194
    %v284 = vpop.permute.xlu0 %283
    %286 = vset.pattern.permute.xlu0 1
    %287 = vperm.xlu0 %286, %v195
    %v288 = vpop.permute.xlu0 %287
    %290 = vset.pattern.permute.xlu0 1
    %291 = vperm.xlu0 %290, %v196
    %v292 = vpop.permute.xlu0 %291
    %294 = vset.pattern.permute.xlu0 1
    %295 = vperm.xlu0 %294, %v197
    %v296 = vpop.permute.xlu0 %295
    %298 = vset.pattern.permute.xlu0 1
    %299 = vperm.xlu0 %298, %v198
    %v300 = vpop.permute.xlu0 %299
    %302 = vset.pattern.permute.xlu0 1
    %303 = vperm.xlu0 %302, %v199
    %v304 = vpop.permute.xlu0 %303
    %306 = vset.pattern.permute.xlu0 1
    %307 = vperm.xlu0 %306, %v200
    %v308 = vpop.permute.xlu0 %307
    %310 = vset.pattern.permute.xlu0 1
    %311 = vperm.xlu0 %310, %v201
    %v312 = vpop.permute.xlu0 %311
    %v315 = vlaneseq
    %v316 = vshrl.u32 %v315, 7
    %v317 = vsub.s32 0, %v316
    %v318 = vrot.slane %v281, %v317
    %v319 = vlaneseq
    %v320 = vshrl.u32 %v319, 7
    %v321 = vsub.s32 1, %v320
    %v322 = vrot.slane %v281, %v321
    %v323 = vlaneseq
    %v324 = vshrl.u32 %v323, 7
    %v325 = vsub.s32 2, %v324
    %v326 = vrot.slane %v281, %v325
    %v330 = vmul.f32 %v284, %v318
    %v331 = vmul.f32 %v284, %v322
    %v332 = vmul.f32 %v288, %v318
    %v333 = vmul.f32 %v288, %v322
    %v334 = vmul.f32 %v288, %v326
    %v335 = vmul.f32 %v292, %v318
    %v336 = vmul.f32 %v292, %v322
    %v337 = vmul.f32 %v292, %v326
    %v338 = vmul.f32 %v296, %v318
    %v339 = vmul.f32 %v296, %v322
    %v340 = vmul.f32 %v296, %v326
    %v341 = vmul.f32 %v300, %v318
    %v342 = vmul.f32 %v300, %v322
    %v343 = vmul.f32 %v300, %v326
    %v344 = vmul.f32 %v304, %v318
    %v345 = vmul.f32 %v304, %v322
    %v346 = vmul.f32 %v304, %v326
    %v347 = vmul.f32 %v308, %v318
    %v348 = vmul.f32 %v308, %v322
    %v349 = vmul.f32 %v308, %v326
    %v350 = vmul.f32 %v312, %v322
    %v351 = vmul.f32 %v312, %v326
    %v352 = vadd.f32 %v259, %v330
    %v353 = vadd.f32 %v260, %v331
    %v354 = vadd.f32 %v261, %v332
    %v355 = vadd.f32 %v262, %v333
    %v356 = vadd.f32 %v263, %v334
    %v357 = vadd.f32 %v264, %v335
    %v358 = vadd.f32 %v265, %v336
    %v359 = vadd.f32 %v266, %v337
    %v360 = vadd.f32 %v267, %v338
    %v361 = vadd.f32 %v268, %v339
    %v362 = vadd.f32 %v269, %v340
    %v363 = vadd.f32 %v270, %v341
    %v364 = vadd.f32 %v271, %v342
    %v365 = vadd.f32 %v272, %v343
    %v366 = vadd.f32 %v273, %v344
    %v367 = vadd.f32 %v274, %v345
    %v368 = vadd.f32 %v275, %v346
    %v369 = vadd.f32 %v276, %v347
    %v370 = vadd.f32 %v277, %v348
    %v371 = vadd.f32 %v278, %v349
    %v372 = vadd.f32 %v279, %v350
    %v373 = vadd.f32 %v280, %v351
    %v374 = vadd.f32 %v353, 0.0
    %v375 = vadd.f32 %v352, %v355
    %v376 = vadd.f32 %v354, %v358
    %v377 = vadd.f32 %v357, %v361
    %v378 = vadd.f32 %v360, %v364
    %v379 = vadd.f32 %v363, %v367
    %v380 = vadd.f32 %v366, %v370
    %v381 = vadd.f32 %v369, %v372
    %v382 = vadd.f32 %v374, %v356
    %v383 = vadd.f32 %v375, %v359
    %v384 = vadd.f32 %v376, %v362
    %v385 = vadd.f32 %v377, %v365
    %v386 = vadd.f32 %v378, %v368
    %v387 = vadd.f32 %v379, %v371
    %v388 = vadd.f32 %v380, %v373
    %v389 = vadd.f32 %v381, 0.0
    %v390 = vmax.f32 %v382, 0.0
    %v391 = vmax.f32 %v383, 0.0
    %v392 = vmax.f32 %v384, 0.0
    %v393 = vmax.f32 %v385, 0.0
    %v394 = vmax.f32 %v386, 0.0
    %v395 = vmax.f32 %v387, 0.0
    %v396 = vmax.f32 %v388, 0.0
    %v397 = vmax.f32 %v389, 0.0
    %v398 = vld [vmem:[#allocation8] sm:$0xff]
    %v399 = vld [vmem:[#allocation8 + $0x8] sm:$0xff]
    %v400 = vld [vmem:[#allocation8 + $0x10] sm:$0xff]
    %v401 = vld [vmem:[#allocation8 + $0x18] sm:$0xff]
    %v402 = vld [vmem:[#allocation8 + $0x20] sm:$0xff]
    %v403 = vld [vmem:[#allocation8 + $0x28] sm:$0xff]
    %v404 = vld [vmem:[#allocation8 + $0x30] sm:$0xff]
    %v405 = vld [vmem:[#allocation8 + $0x38] sm:$0xff]
    %v406 = vld [vmem:[#allocation8 + $0x40] sm:$0xff]
    %v407 = vld [vmem:[#allocation8 + $0x48] sm:$0xff]
    %v408 = vld [vmem:[#allocation8 + $0x50] sm:$0xff]
    %v409 = vld [vmem:[#allocation8 + $0x58] sm:$0xff]
    %v410 = vld [vmem:[#allocation8 + $0x60] sm:$0xff]
    %v411 = vld [vmem:[#allocation8 + $0x68] sm:$0xff]
    %v412 = vld [vmem:[#allocation8 + $0x70] sm:$0xff]
    %v413 = vld [vmem:[#allocation8 + $0x78] sm:$0xff]
    %v414 = vld [vmem:[#allocation8 + $0x80] sm:$0xff]
    %v415 = vld [vmem:[#allocation8 + $0x88] sm:$0xff]
    %v416 = vld [vmem:[#allocation8 + $0x90] sm:$0xff]
    %v417 = vld [vmem:[#allocation8 + $0x98] sm:$0xff]
    %v418 = vld [vmem:[#allocation8 + $0xa0] sm:$0xff]
    %v419 = vld [vmem:[#allocation8 + $0xa8] sm:$0xff]
    %v420 = vld [vmem:[#allocation8 + $0xb0] sm:$0xff]
    %v421 = vld [vmem:[#allocation8 + $0xb8] sm:$0xff]
    %v422 = vld [vmem:[#allocation8 + $0xc0] sm:$0xff]
    %v423 = vld [vmem:[#allocation8 + $0xc8] sm:$0xff]
    %v424 = vld [vmem:[#allocation8 + $0xd0] sm:$0xff]
    %v425 = vld [vmem:[#allocation8 + $0xd8] sm:$0xff]
    %v426 = vld [vmem:[#allocation8 + $0xe0] sm:$0xff]
    %v427 = vld [vmem:[#allocation8 + $0xe8] sm:$0xff]
    %v428 = vld [vmem:[#allocation8 + $0xf0] sm:$0xff]
    %v429 = vld [vmem:[#allocation8 + $0xf8] sm:$0xff]
    %v430 = vld [vmem:[#allocation8 + $0x100] sm:$0xff]
    %v431 = vld [vmem:[#allocation8 + $0x108] sm:$0xff]
    %v432 = vld [vmem:[#allocation8 + $0x110] sm:$0xff]
    %v433 = vld [vmem:[#allocation8 + $0x118] sm:$0xff]
    %v434 = vld [vmem:[#allocation8 + $0x120] sm:$0xff]
    %v435 = vld [vmem:[#allocation8 + $0x128] sm:$0xff]
    %v436 = vld [vmem:[#allocation8 + $0x130] sm:$0xff]
    %v437 = vld [vmem:[#allocation8 + $0x138] sm:$0xff]
    %v438 = vld [vmem:[#allocation8 + $0x140] sm:$0xff]
    %v439 = vld [vmem:[#allocation8 + $0x148] sm:$0xff]
    %v440 = vld [vmem:[#allocation8 + $0x150] sm:$0xff]
    %v441 = vld [vmem:[#allocation8 + $0x158] sm:$0xff]
    %v442 = vld [vmem:[#allocation8 + $0x160] sm:$0xff]
    %v443 = vld [vmem:[#allocation8 + $0x168] sm:$0xff]
    %v444 = vld [vmem:[#allocation8 + $0x170] sm:$0xff]
    %v445 = vld [vmem:[#allocation8 + $0x178] sm:$0xff]
    %446 = vmatprep.subr.mxu0 %v444
    %447 = vmatpush1.msra.mxu0 %v443
    %448 = vmatprep.subr.mxu0 %v441
    %449 = vmatpush1.msra.mxu0 %v440
    %450 = vmatprep.subr.mxu0 %v438
    %451 = vmatpush1.msra.mxu0 %v437
    %452 = vmatprep.subr.mxu0 %v435
    %453 = vmatpush1.msra.mxu0 %v434
    %454 = vmatprep.subr.mxu0 %v432
    %455 = vmatpush1.msra.mxu0 %v431
    %456 = vmatprep.subr.mxu0 %v429
    %457 = vmatpush1.msra.mxu0 %v428
    %458 = vmatprep.subr.mxu0 %v426
    %459 = vmatpush1.msra.mxu0 %v425
    %460 = vmatprep.subr.mxu0 %v423
    %461 = vmatpush1.msra.mxu0 %v422
    %462 = vmatprep.subr.mxu0 %v420
    %463 = vmatpush1.msra.mxu0 %v419
    %464 = vmatprep.subr.mxu0 %v417
    %465 = vmatpush1.msra.mxu0 %v416
    %466 = vmatprep.subr.mxu0 %v414
    %467 = vmatpush1.msra.mxu0 %v413
    %468 = vmatprep.subr.mxu0 %v411
    %469 = vmatpush1.msra.mxu0 %v410
    %470 = vmatprep.subr.mxu0 %v408
    %471 = vmatpush1.msra.mxu0 %v407
    %472 = vmatprep.subr.mxu0 %v405
    %473 = vmatpush1.msra.mxu0 %v404
    %474 = vmatprep.subr.mxu0 %v402
    %475 = vmatpush1.msra.mxu0 %v401
    %476 = vmatprep.subr.mxu0 %v399
    %477 = vmatpush1.msra.mxu0 %v398
    %478 = vmatprep.subr.mxu0 0.0
    %479 = vmatpush2.msra.mxu0 0.0
    %480 = vmatprep.subr.mxu0 0.0
    %481 = vmatpush2.msra.mxu0 0.0
    %482 = vmatprep.subr.mxu0 0.0
    %483 = vmatpush2.msra.mxu0 0.0
    %484 = vmatprep.subr.mxu0 0.0
    %485 = vmatpush2.msra.mxu0 0.0
    %486 = vmatprep.subr.mxu0 0.0
    %487 = vmatpush2.msra.mxu0 0.0
    %488 = vmatprep.subr.mxu0 0.0
    %489 = vmatpush2.msra.mxu0 0.0
    %490 = vmatprep.subr.mxu0 0.0
    %491 = vmatpush2.msra.mxu0 0.0
    %492 = vmatprep.subr.mxu0 0.0
    %493 = vmatpush2.msra.mxu0 0.0
    %494 = vmatprep.subr.mxu0 0.0
    %495 = vmatpush2.msra.mxu0 0.0
    %496 = vmatprep.subr.mxu0 0.0
    %497 = vmatpush2.msra.mxu0 0.0
    %498 = vmatprep.subr.mxu0 0.0
    %499 = vmatpush2.msra.mxu0 0.0
    %500 = vmatprep.subr.mxu0 0.0
    %501 = vmatpush2.msra.mxu0 0.0
    %502 = vmatprep.subr.mxu0 0.0
    %503 = vmatpush2.msra.mxu0 0.0
    %504 = vmatprep.subr.mxu0 0.0
    %505 = vmatpush2.msra.mxu0 0.0
    %506 = vmatprep.subr.mxu0 0.0
    %507 = vmatpush2.msra.mxu0 0.0
    %508 = vmatprep.subr.mxu0 0.0
    %509 = vmatpush2.msra.mxu0 0.0
    %510 = vmatprep.mubr.f32.mxu0 0.0
    %511 = vmatmul.mubr.f32.gmra.mxu0 %v390
    %v512 = vpop.f32.mrf.mxu0
    %v513 = vadd.f32 0.0, %v512
    %v514 = vpop.f32.mrf.mxu0
    %v515 = vadd.f32 0.0, %v514
    %516 = vmatprep.mubr.f32.mxu0 0.0
    %517 = vmatmul.mubr.f32.gmra.mxu0 %v391
    %v518 = vpop.f32.mrf.mxu0
    %v519 = vadd.f32 0.0, %v518
    %v520 = vpop.f32.mrf.mxu0
    %v521 = vadd.f32 0.0, %v520
    %522 = vmatprep.mubr.f32.mxu0 0.0
    %523 = vmatmul.mubr.f32.gmra.mxu0 %v392
    %v524 = vpop.f32.mrf.mxu0
    %v525 = vadd.f32 0.0, %v524
    %v526 = vpop.f32.mrf.mxu0
    %v527 = vadd.f32 0.0, %v526
    %528 = vmatprep.mubr.f32.mxu0 0.0
    %529 = vmatmul.mubr.f32.gmra.mxu0 %v393
    %v530 = vpop.f32.mrf.mxu0
    %v531 = vadd.f32 0.0, %v530
    %v532 = vpop.f32.mrf.mxu0
    %v533 = vadd.f32 0.0, %v532
    %534 = vmatprep.mubr.f32.mxu0 0.0
    %535 = vmatmul.mubr.f32.gmra.mxu0 %v394
    %v536 = vpop.f32.mrf.mxu0
    %v537 = vadd.f32 0.0, %v536
    %v538 = vpop.f32.mrf.mxu0
    %v539 = vadd.f32 0.0, %v538
    %540 = vmatprep.mubr.f32.mxu0 0.0
    %541 = vmatmul.mubr.f32.gmra.mxu0 %v395
    %v542 = vpop.f32.mrf.mxu0
    %v543 = vadd.f32 0.0, %v542
    %v544 = vpop.f32.mrf.mxu0
    %v545 = vadd.f32 0.0, %v544
    %546 = vmatprep.mubr.f32.mxu0 0.0
    %547 = vmatmul.mubr.f32.gmra.mxu0 %v396
    %v548 = vpop.f32.mrf.mxu0
    %v549 = vadd.f32 0.0, %v548
    %v550 = vpop.f32.mrf.mxu0
    %v551 = vadd.f32 0.0, %v550
    %552 = vmatprep.mubr.f32.mxu0 0.0
    %553 = vmatmul.mubr.f32.gmra.mxu0 %v397
    %v554 = vpop.f32.mrf.mxu0
    %v555 = vadd.f32 0.0, %v554
    %v556 = vpop.f32.mrf.mxu0
    %v557 = vadd.f32 0.0, %v556
    %558 = vdwg.mxu0
    %559 = vmatprep.subr.mxu0 0.0
    %560 = vmatpush1.msra.mxu0 %v445
    %561 = vmatprep.subr.mxu0 0.0
    %562 = vmatpush1.msra.mxu0 %v442
    %563 = vmatprep.subr.mxu0 0.0
    %564 = vmatpush1.msra.mxu0 %v439
    %565 = vmatprep.subr.mxu0 0.0
    %566 = vmatpush1.msra.mxu0 %v436
    %567 = vmatprep.subr.mxu0 0.0
    %568 = vmatpush1.msra.mxu0 %v433
    %569 = vmatprep.subr.mxu0 0.0
    %570 = vmatpush1.msra.mxu0 %v430
    %571 = vmatprep.subr.mxu0 0.0
    %572 = vmatpush1.msra.mxu0 %v427
    %573 = vmatprep.subr.mxu0 0.0
    %574 = vmatpush1.msra.mxu0 %v424
    %575 = vmatprep.subr.mxu0 0.0
    %576 = vmatpush1.msra.mxu0 %v421
    %577 = vmatprep.subr.mxu0 0.0
    %578 = vmatpush1.msra.mxu0 %v418
    %579 = vmatprep.subr.mxu0 0.0
    %580 = vmatpush1.msra.mxu0 %v415
    %581 = vmatprep.subr.mxu0 0.0
    %582 = vmatpush1.msra.mxu0 %v412
    %583 = vmatprep.subr.mxu0 0.0
    %584 = vmatpush1.msra.mxu0 %v409
    %585 = vmatprep.subr.mxu0 0.0
    %586 = vmatpush1.msra.mxu0 %v406
    %587 = vmatprep.subr.mxu0 0.0
    %588 = vmatpush1.msra.mxu0 %v403
    %589 = vmatprep.subr.mxu0 0.0
    %590 = vmatpush1.msra.mxu0 %v400
    %591 = vmatprep.subr.mxu0 0.0
    %592 = vmatpush2.msra.mxu0 0.0
    %593 = vmatprep.subr.mxu0 0.0
    %594 = vmatpush2.msra.mxu0 0.0
    %595 = vmatprep.subr.mxu0 0.0
    %596 = vmatpush2.msra.mxu0 0.0
    %597 = vmatprep.subr.mxu0 0.0
    %598 = vmatpush2.msra.mxu0 0.0
    %599 = vmatprep.subr.mxu0 0.0
    %600 = vmatpush2.msra.mxu0 0.0
    %601 = vmatprep.subr.mxu0 0.0
    %602 = vmatpush2.msra.mxu0 0.0
    %603 = vmatprep.subr.mxu0 0.0
    %604 = vmatpush2.msra.mxu0 0.0
    %605 = vmatprep.subr.mxu0 0.0
    %606 = vmatpush2.msra.mxu0 0.0
    %607 = vmatprep.subr.mxu0 0.0
    %608 = vmatpush2.msra.mxu0 0.0
    %609 = vmatprep.subr.mxu0 0.0
    %610 = vmatpush2.msra.mxu0 0.0
    %611 = vmatprep.subr.mxu0 0.0
    %612 = vmatpush2.msra.mxu0 0.0
    %613 = vmatprep.subr.mxu0 0.0
    %614 = vmatpush2.msra.mxu0 0.0
    %615 = vmatprep.subr.mxu0 0.0
    %616 = vmatpush2.msra.mxu0 0.0
    %617 = vmatprep.subr.mxu0 0.0
    %618 = vmatpush2.msra.mxu0 0.0
    %619 = vmatprep.subr.mxu0 0.0
    %620 = vmatpush2.msra.mxu0 0.0
    %621 = vmatprep.subr.mxu0 0.0
    %622 = vmatpush2.msra.mxu0 0.0
    %623 = vmatprep.mubr.f32.mxu0 0.0
    %624 = vmatmul.mubr.f32.gmra.mxu0 %v390
    %v625 = vpop.f32.mrf.mxu0
    %v626 = vadd.f32 0.0, %v625
    %v627 = vpop.f32.mrf.mxu0
    %628 = vmatprep.mubr.f32.mxu0 0.0
    %629 = vmatmul.mubr.f32.gmra.mxu0 %v391
    %v630 = vpop.f32.mrf.mxu0
    %v631 = vadd.f32 0.0, %v630
    %v632 = vpop.f32.mrf.mxu0
    %633 = vmatprep.mubr.f32.mxu0 0.0
    %634 = vmatmul.mubr.f32.gmra.mxu0 %v392
    %v635 = vpop.f32.mrf.mxu0
    %v636 = vadd.f32 0.0, %v635
    %v637 = vpop.f32.mrf.mxu0
    %638 = vmatprep.mubr.f32.mxu0 0.0
    %639 = vmatmul.mubr.f32.gmra.mxu0 %v393
    %v640 = vpop.f32.mrf.mxu0
    %v641 = vadd.f32 0.0, %v640
    %v642 = vpop.f32.mrf.mxu0
    %643 = vmatprep.mubr.f32.mxu0 0.0
    %644 = vmatmul.mubr.f32.gmra.mxu0 %v394
    %v645 = vpop.f32.mrf.mxu0
    %v646 = vadd.f32 0.0, %v645
    %v647 = vpop.f32.mrf.mxu0
    %648 = vmatprep.mubr.f32.mxu0 0.0
    %649 = vmatmul.mubr.f32.gmra.mxu0 %v395
    %v650 = vpop.f32.mrf.mxu0
    %v651 = vadd.f32 0.0, %v650
    %v652 = vpop.f32.mrf.mxu0
    %653 = vmatprep.mubr.f32.mxu0 0.0
    %654 = vmatmul.mubr.f32.gmra.mxu0 %v396
    %v655 = vpop.f32.mrf.mxu0
    %v656 = vadd.f32 0.0, %v655
    %v657 = vpop.f32.mrf.mxu0
    %658 = vmatprep.mubr.f32.mxu0 0.0
    %659 = vmatmul.mubr.f32.gmra.mxu0 %v397
    %v660 = vpop.f32.mrf.mxu0
    %v661 = vadd.f32 0.0, %v660
    %v662 = vpop.f32.mrf.mxu0
    %663 = vdwg.mxu0
    %664 = vst [vmem:[#allocation2] sm:$0xff] %v513
    %665 = vst [vmem:[#allocation2 + $0x8] sm:$0xff] %v515
    %666 = vst [vmem:[#allocation2 + $0x10] sm:$0xff] %v626
    %667 = vst [vmem:[#allocation2 + $0x18] sm:$0xff] %v519
    %668 = vst [vmem:[#allocation2 + $0x20] sm:$0xff] %v521
    %669 = vst [vmem:[#allocation2 + $0x28] sm:$0xff] %v631
    %670 = vst [vmem:[#allocation2 + $0x30] sm:$0xff] %v525
    %671 = vst [vmem:[#allocation2 + $0x38] sm:$0xff] %v527
    %672 = vst [vmem:[#allocation2 + $0x40] sm:$0xff] %v636
    %673 = vst [vmem:[#allocation2 + $0x48] sm:$0xff] %v531
    %674 = vst [vmem:[#allocation2 + $0x50] sm:$0xff] %v533
    %675 = vst [vmem:[#allocation2 + $0x58] sm:$0xff] %v641
    %676 = vst [vmem:[#allocation2 + $0x60] sm:$0xff] %v537
    %677 = vst [vmem:[#allocation2 + $0x68] sm:$0xff] %v539
    %678 = vst [vmem:[#allocation2 + $0x70] sm:$0xff] %v646
    %679 = vst [vmem:[#allocation2 + $0x78] sm:$0xff] %v543
    %680 = vst [vmem:[#allocation2 + $0x80] sm:$0xff] %v545
    %681 = vst [vmem:[#allocation2 + $0x88] sm:$0xff] %v651
    %682 = vst [vmem:[#allocation2 + $0x90] sm:$0xff] %v549
    %683 = vst [vmem:[#allocation2 + $0x98] sm:$0xff] %v551
    %684 = vst [vmem:[#allocation2 + $0xa0] sm:$0xff] %v656
    %685 = vst [vmem:[#allocation2 + $0xa8] sm:$0xff] %v555
    %686 = vst [vmem:[#allocation2 + $0xb0] sm:$0xff] %v557
    %687 = vst [vmem:[#allocation2 + $0xb8] sm:$0xff] %v661
    %v688 = vld [vmem:[#allocation2] sm:$0xff]
    %v689 = vld [vmem:[#allocation2 + $0x8] sm:$0xff]
    %v690 = vld [vmem:[#allocation2 + $0x10] sm:$0xff]
    %v691 = vld [vmem:[#allocation9] sm:$0xff]
    %v692 = vld [vmem:[#allocation9 + $0x8] sm:$0xff]
    %v693 = vld [vmem:[#allocation9 + $0x10] sm:$0xff]
    %v694 = vld [vmem:[#allocation9 + $0x18] sm:$0xff]
    %v695 = vld [vmem:[#allocation9 + $0x20] sm:$0xff]
    %v696 = vld [vmem:[#allocation9 + $0x28] sm:$0xff]
    %v697 = vld [vmem:[#allocation9 + $0x30] sm:$0xff]
    %v698 = vld [vmem:[#allocation9 + $0x38] sm:$0xff]
    %v699 = vld [vmem:[#allocation9 + $0x40] sm:$0xff]
    %v700 = vld [vmem:[#allocation9 + $0x48] sm:$0xff]
    %v701 = vld [vmem:[#allocation9 + $0x50] sm:$0xff]
    %v702 = vld [vmem:[#allocation9 + $0x58] sm:$0xff]
    %v703 = vld [vmem:[#allocation9 + $0x60] sm:$0xff]
    %v704 = vld [vmem:[#allocation9 + $0x68] sm:$0xff]
    %v705 = vld [vmem:[#allocation9 + $0x70] sm:$0xff]
    %v706 = vld [vmem:[#allocation9 + $0x78] sm:$0xff]
    %v707 = vld [vmem:[#allocation9 + $0x80] sm:$0xff]
    %v708 = vld [vmem:[#allocation9 + $0x88] sm:$0xff]
    %v709 = vld [vmem:[#allocation9 + $0x90] sm:$0xff]
    %v710 = vld [vmem:[#allocation9 + $0x98] sm:$0xff]
    %v711 = vld [vmem:[#allocation9 + $0xa0] sm:$0xff]
    %v712 = vld [vmem:[#allocation9 + $0xa8] sm:$0xff]
    %v713 = vld [vmem:[#allocation9 + $0xb0] sm:$0xff]
    %v714 = vld [vmem:[#allocation9 + $0xb8] sm:$0xff]
    %v715 = vld [vmem:[#allocation9 + $0xc0] sm:$0xff]
    %v716 = vld [vmem:[#allocation9 + $0xc8] sm:$0xff]
    %v717 = vld [vmem:[#allocation9 + $0xd0] sm:$0xff]
    %v718 = vld [vmem:[#allocation9 + $0xd8] sm:$0xff]
    %v719 = vld [vmem:[#allocation9 + $0xe0] sm:$0xff]
    %v720 = vld [vmem:[#allocation9 + $0xe8] sm:$0xff]
    %v721 = vld [vmem:[#allocation9 + $0xf0] sm:$0xff]
    %v722 = vld [vmem:[#allocation9 + $0xf8] sm:$0xff]
    %v723 = vld [vmem:[#allocation9 + $0x100] sm:$0xff]
    %v724 = vld [vmem:[#allocation9 + $0x108] sm:$0xff]
    %v725 = vld [vmem:[#allocation9 + $0x110] sm:$0xff]
    %v726 = vld [vmem:[#allocation9 + $0x118] sm:$0xff]
    %v727 = vld [vmem:[#allocation9 + $0x120] sm:$0xff]
    %v728 = vld [vmem:[#allocation9 + $0x128] sm:$0xff]
    %v729 = vld [vmem:[#allocation9 + $0x130] sm:$0xff]
    %v730 = vld [vmem:[#allocation9 + $0x138] sm:$0xff]
    %v731 = vld [vmem:[#allocation9 + $0x140] sm:$0xff]
    %v732 = vld [vmem:[#allocation9 + $0x148] sm:$0xff]
    %v733 = vld [vmem:[#allocation9 + $0x150] sm:$0xff]
    %v734 = vld [vmem:[#allocation9 + $0x158] sm:$0xff]
    %v735 = vld [vmem:[#allocation9 + $0x160] sm:$0xff]
    %v736 = vld [vmem:[#allocation9 + $0x168] sm:$0xff]
    %v737 = vld [vmem:[#allocation9 + $0x170] sm:$0xff]
    %v738 = vld [vmem:[#allocation9 + $0x178] sm:$0xff]
    %739 = vmatprep.subr.mxu0 %v737
    %740 = vmatpush1.msra.mxu0 %v736
    %741 = vmatprep.subr.mxu0 %v734
    %742 = vmatpush1.msra.mxu0 %v733
    %743 = vmatprep.subr.mxu0 %v731
    %744 = vmatpush1.msra.mxu0 %v730
    %745 = vmatprep.subr.mxu0 %v728
    %746 = vmatpush1.msra.mxu0 %v727
    %747 = vmatprep.subr.mxu0 %v725
    %748 = vmatpush1.msra.mxu0 %v724
    %749 = vmatprep.subr.mxu0 %v722
    %750 = vmatpush1.msra.mxu0 %v721
    %751 = vmatprep.subr.mxu0 %v719
    %752 = vmatpush1.msra.mxu0 %v718
    %753 = vmatprep.subr.mxu0 %v716
    %754 = vmatpush1.msra.mxu0 %v715
    %755 = vmatprep.subr.mxu0 %v713
    %756 = vmatpush1.msra.mxu0 %v712
    %757 = vmatprep.subr.mxu0 %v710
    %758 = vmatpush1.msra.mxu0 %v709
    %759 = vmatprep.subr.mxu0 %v707
    %760 = vmatpush1.msra.mxu0 %v706
    %761 = vmatprep.subr.mxu0 %v704
    %762 = vmatpush1.msra.mxu0 %v703
    %763 = vmatprep.subr.mxu0 %v701
    %764 = vmatpush1.msra.mxu0 %v700
    %765 = vmatprep.subr.mxu0 %v698
    %766 = vmatpush1.msra.mxu0 %v697
    %767 = vmatprep.subr.mxu0 %v695
    %768 = vmatpush1.msra.mxu0 %v694
    %769 = vmatprep.subr.mxu0 %v692
    %770 = vmatpush1.msra.mxu0 %v691
    %771 = vmatprep.subr.mxu0 0.0
    %772 = vmatpush2.msra.mxu0 0.0
    %773 = vmatprep.subr.mxu0 0.0
    %774 = vmatpush2.msra.mxu0 0.0
    %775 = vmatprep.subr.mxu0 0.0
    %776 = vmatpush2.msra.mxu0 0.0
    %777 = vmatprep.subr.mxu0 0.0
    %778 = vmatpush2.msra.mxu0 0.0
    %779 = vmatprep.subr.mxu0 0.0
    %780 = vmatpush2.msra.mxu0 0.0
    %781 = vmatprep.subr.mxu0 0.0
    %782 = vmatpush2.msra.mxu0 0.0
    %783 = vmatprep.subr.mxu0 0.0
    %784 = vmatpush2.msra.mxu0 0.0
    %785 = vmatprep.subr.mxu0 0.0
    %786 = vmatpush2.msra.mxu0 0.0
    %787 = vmatprep.subr.mxu0 0.0
    %788 = vmatpush2.msra.mxu0 0.0
    %789 = vmatprep.subr.mxu0 0.0
    %790 = vmatpush2.msra.mxu0 0.0
    %791 = vmatprep.subr.mxu0 0.0
    %792 = vmatpush2.msra.mxu0 0.0
    %793 = vmatprep.subr.mxu0 0.0
    %794 = vmatpush2.msra.mxu0 0.0
    %795 = vmatprep.subr.mxu0 0.0
    %796 = vmatpush2.msra.mxu0 0.0
    %797 = vmatprep.subr.mxu0 0.0
    %798 = vmatpush2.msra.mxu0 0.0
    %799 = vmatprep.subr.mxu0 0.0
    %800 = vmatpush2.msra.mxu0 0.0
    %801 = vmatprep.subr.mxu0 0.0
    %802 = vmatpush2.msra.mxu0 0.0
    %803 = vmatprep.mubr.f32.mxu0 0.0
    %804 = vmatmul.mubr.f32.gmra.mxu0 0.0
    %v805 = vpop.f32.mrf.mxu0
    %v806 = vadd.f32 0.0, %v805
    %v807 = vpop.f32.mrf.mxu0
    %v808 = vadd.f32 0.0, %v807
    %809 = vdwg.mxu0
    %810 = vmatprep.subr.mxu0 0.0
    %811 = vmatpush1.msra.mxu0 %v738
    %812 = vmatprep.subr.mxu0 0.0
    %813 = vmatpush1.msra.mxu0 %v735
    %814 = vmatprep.subr.mxu0 0.0
    %815 = vmatpush1.msra.mxu0 %v732
    %816 = vmatprep.subr.mxu0 0.0
    %817 = vmatpush1.msra.mxu0 %v729
    %818 = vmatprep.subr.mxu0 0.0
    %819 = vmatpush1.msra.mxu0 %v726
    %820 = vmatprep.subr.mxu0 0.0
    %821 = vmatpush1.msra.mxu0 %v723
    %822 = vmatprep.subr.mxu0 0.0
    %823 = vmatpush1.msra.mxu0 %v720
    %824 = vmatprep.subr.mxu0 0.0
    %825 = vmatpush1.msra.mxu0 %v717
    %826 = vmatprep.subr.mxu0 0.0
    %827 = vmatpush1.msra.mxu0 %v714
    %828 = vmatprep.subr.mxu0 0.0
    %829 = vmatpush1.msra.mxu0 %v711
    %830 = vmatprep.subr.mxu0 0.0
    %831 = vmatpush1.msra.mxu0 %v708
    %832 = vmatprep.subr.mxu0 0.0
    %833 = vmatpush1.msra.mxu0 %v705
    %834 = vmatprep.subr.mxu0 0.0
    %835 = vmatpush1.msra.mxu0 %v702
    %836 = vmatprep.subr.mxu0 0.0
    %837 = vmatpush1.msra.mxu0 %v699
    %838 = vmatprep.subr.mxu0 0.0
    %839 = vmatpush1.msra.mxu0 %v696
    %840 = vmatprep.subr.mxu0 0.0
    %841 = vmatpush1.msra.mxu0 %v693
    %842 = vmatprep.subr.mxu0 0.0
    %843 = vmatpush2.msra.mxu0 0.0
    %844 = vmatprep.subr.mxu0 0.0
    %845 = vmatpush2.msra.mxu0 0.0
    %846 = vmatprep.subr.mxu0 0.0
    %847 = vmatpush2.msra.mxu0 0.0
    %848 = vmatprep.subr.mxu0 0.0
    %849 = vmatpush2.msra.mxu0 0.0
    %850 = vmatprep.subr.mxu0 0.0
    %851 = vmatpush2.msra.mxu0 0.0
    %852 = vmatprep.subr.mxu0 0.0
    %853 = vmatpush2.msra.mxu0 0.0
    %854 = vmatprep.subr.mxu0 0.0
    %855 = vmatpush2.msra.mxu0 0.0
    %856 = vmatprep.subr.mxu0 0.0
    %857 = vmatpush2.msra.mxu0 0.0
    %858 = vmatprep.subr.mxu0 0.0
    %859 = vmatpush2.msra.mxu0 0.0
    %860 = vmatprep.subr.mxu0 0.0
    %861 = vmatpush2.msra.mxu0 0.0
    %862 = vmatprep.subr.mxu0 0.0
    %863 = vmatpush2.msra.mxu0 0.0
    %864 = vmatprep.subr.mxu0 0.0
    %865 = vmatpush2.msra.mxu0 0.0
    %866 = vmatprep.subr.mxu0 0.0
    %867 = vmatpush2.msra.mxu0 0.0
    %868 = vmatprep.subr.mxu0 0.0
    %869 = vmatpush2.msra.mxu0 0.0
    %870 = vmatprep.subr.mxu0 0.0
    %871 = vmatpush2.msra.mxu0 0.0
    %872 = vmatprep.subr.mxu0 0.0
    %873 = vmatpush2.msra.mxu0 0.0
    %874 = vmatprep.mubr.f32.mxu0 0.0
    %875 = vmatmul.mubr.f32.gmra.mxu0 0.0
    %v876 = vpop.f32.mrf.mxu0
    %v877 = vadd.f32 0.0, %v876
    %v878 = vpop.f32.mrf.mxu0
    %879 = vdwg.mxu0
    %v880 = vadd.f32 %v688, %v806
    %v881 = vxor.u32 %v880, 2147483648
    %v882 = vmul.f32 %v881, 1.442695
    %v883 = vpow.pop %v882
    %v884 = vadd.f32 %v883, 1.0
    %v885 = vrcp.pop %v884
    %v886 = vmul.f32 1.0, %v885
    %v887 = vadd.f32 %v689, %v808
    %v888 = vxor.u32 %v887, 2147483648
    %v889 = vmul.f32 %v888, 1.442695
    %v890 = vpow.pop %v889
    %v891 = vadd.f32 %v890, 1.0
    %v892 = vrcp.pop %v891
    %v893 = vmul.f32 1.0, %v892
    %v894 = vmul.f32 %v886, %v877
    %v895 = vadd.f32 %v690, %v894
    %v896 = vtanh.pop %v895
    %v897 = vsub.f32 1.0, %v893
    %v898 = vmul.f32 %v897, %v896
    %v899 = vmul.f32 %v893, 0.0
    %v900 = vadd.f32 %v898, %v899
    %v901 = vld [vmem:[#allocation2 + $0x18] sm:$0xff]
    %v902 = vld [vmem:[#allocation2 + $0x20] sm:$0xff]
    %v903 = vld [vmem:[#allocation2 + $0x28] sm:$0xff]
    %904 = vmatprep.subr.mxu0 %v737
    %905 = vmatpush1.msra.mxu0 %v736
    %906 = vmatprep.subr.mxu0 %v734
    %907 = vmatpush1.msra.mxu0 %v733
    %908 = vmatprep.subr.mxu0 %v731
    %909 = vmatpush1.msra.mxu0 %v730
    %910 = vmatprep.subr.mxu0 %v728
    %911 = vmatpush1.msra.mxu0 %v727
    %912 = vmatprep.subr.mxu0 %v725
    %913 = vmatpush1.msra.mxu0 %v724
    %914 = vmatprep.subr.mxu0 %v722
    %915 = vmatpush1.msra.mxu0 %v721
    %916 = vmatprep.subr.mxu0 %v719
    %917 = vmatpush1.msra.mxu0 %v718
    %918 = vmatprep.subr.mxu0 %v716
    %919 = vmatpush1.msra.mxu0 %v715
    %920 = vmatprep.subr.mxu0 %v713
    %921 = vmatpush1.msra.mxu0 %v712
    %922 = vmatprep.subr.mxu0 %v710
    %923 = vmatpush1.msra.mxu0 %v709
    %924 = vmatprep.subr.mxu0 %v707
    %925 = vmatpush1.msra.mxu0 %v706
    %926 = vmatprep.subr.mxu0 %v704
    %927 = vmatpush1.msra.mxu0 %v703
    %928 = vmatprep.subr.mxu0 %v701
    %929 = vmatpush1.msra.mxu0 %v700
    %930 = vmatprep.subr.mxu0 %v698
    %931 = vmatpush1.msra.mxu0 %v697
    %932 = vmatprep.subr.mxu0 %v695
    %933 = vmatpush1.msra.mxu0 %v694
    %934 = vmatprep.subr.mxu0 %v692
    %935 = vmatpush1.msra.mxu0 %v691
    %936 = vmatprep.subr.mxu0 0.0
    %937 = vmatpush2.msra.mxu0 0.0
    %938 = vmatprep.subr.mxu0 0.0
    %939 = vmatpush2.msra.mxu0 0.0
    %940 = vmatprep.subr.mxu0 0.0
    %941 = vmatpush2.msra.mxu0 0.0
    %942 = vmatprep.subr.mxu0 0.0
    %943 = vmatpush2.msra.mxu0 0.0
    %944 = vmatprep.subr.mxu0 0.0
    %945 = vmatpush2.msra.mxu0 0.0
    %946 = vmatprep.subr.mxu0 0.0
    %947 = vmatpush2.msra.mxu0 0.0
    %948 = vmatprep.subr.mxu0 0.0
    %949 = vmatpush2.msra.mxu0 0.0
    %950 = vmatprep.subr.mxu0 0.0
    %951 = vmatpush2.msra.mxu0 0.0
    %952 = vmatprep.subr.mxu0 0.0
    %953 = vmatpush2.msra.mxu0 0.0
    %954 = vmatprep.subr.mxu0 0.0
    %955 = vmatpush2.msra.mxu0 0.0
    %956 = vmatprep.subr.mxu0 0.0
    %957 = vmatpush2.msra.mxu0 0.0
    %958 = vmatprep.subr.mxu0 0.0
    %959 = vmatpush2.msra.mxu0 0.0
    %960 = vmatprep.subr.mxu0 0.0
    %961 = vmatpush2.msra.mxu0 0.0
    %962 = vmatprep.subr.mxu0 0.0
    %963 = vmatpush2.msra.mxu0 0.0
    %964 = vmatprep.subr.mxu0 0.0
    %965 = vmatpush2.msra.mxu0 0.0
    %966 = vmatprep.subr.mxu0 0.0
    %967 = vmatpush2.msra.mxu0 0.0
    %968 = vmatprep.mubr.f32.mxu0 0.0
    %969 = vmatmul.mubr.f32.gmra.mxu0 %v900
    %v970 = vpop.f32.mrf.mxu0
    %v971 = vadd.f32 0.0, %v970
    %v972 = vpop.f32.mrf.mxu0
    %v973 = vadd.f32 0.0, %v972
    %974 = vdwg.mxu0
    %975 = vmatprep.subr.mxu0 0.0
    %976 = vmatpush1.msra.mxu0 %v738
    %977 = vmatprep.subr.mxu0 0.0
    %978 = vmatpush1.msra.mxu0 %v735
    %979 = vmatprep.subr.mxu0 0.0
    %980 = vmatpush1.msra.mxu0 %v732
    %981 = vmatprep.subr.mxu0 0.0
    %982 = vmatpush1.msra.mxu0 %v729
    %983 = vmatprep.subr.mxu0 0.0
    %984 = vmatpush1.msra.mxu0 %v726
    %985 = vmatprep.subr.mxu0 0.0
    %986 = vmatpush1.msra.mxu0 %v723
    %987 = vmatprep.subr.mxu0 0.0
    %988 = vmatpush1.msra.mxu0 %v720
    %989 = vmatprep.subr.mxu0 0.0
    %990 = vmatpush1.msra.mxu0 %v717
    %991 = vmatprep.subr.mxu0 0.0
    %992 = vmatpush1.msra.mxu0 %v714
    %993 = vmatprep.subr.mxu0 0.0
    %994 = vmatpush1.msra.mxu0 %v711
    %995 = vmatprep.subr.mxu0 0.0
    %996 = vmatpush1.msra.mxu0 %v708
    %997 = vmatprep.subr.mxu0 0.0
    %998 = vmatpush1.msra.mxu0 %v705
    %999 = vmatprep.subr.mxu0 0.0
    %1000 = vmatpush1.msra.mxu0 %v702
    %1001 = vmatprep.subr.mxu0 0.0
    %1002 = vmatpush1.msra.mxu0 %v699
    %1003 = vmatprep.subr.mxu0 0.0
    %1004 = vmatpush1.msra.mxu0 %v696
    %1005 = vmatprep.subr.mxu0 0.0
    %1006 = vmatpush1.msra.mxu0 %v693
    %1007 = vmatprep.subr.mxu0 0.0
    %1008 = vmatpush2.msra.mxu0 0.0
    %1009 = vmatprep.subr.mxu0 0.0
    %1010 = vmatpush2.msra.mxu0 0.0
    %1011 = vmatprep.subr.mxu0 0.0
    %1012 = vmatpush2.msra.mxu0 0.0
    %1013 = vmatprep.subr.mxu0 0.0
    %1014 = vmatpush2.msra.mxu0 0.0
    %1015 = vmatprep.subr.mxu0 0.0
    %1016 = vmatpush2.msra.mxu0 0.0
    %1017 = vmatprep.subr.mxu0 0.0
    %1018 = vmatpush2.msra.mxu0 0.0
    %1019 = vmatprep.subr.mxu0 0.0
    %1020 = vmatpush2.msra.mxu0 0.0
    %1021 = vmatprep.subr.mxu0 0.0
    %1022 = vmatpush2.msra.mxu0 0.0
    %1023 = vmatprep.subr.mxu0 0.0
    %1024 = vmatpush2.msra.mxu0 0.0
    %1025 = vmatprep.subr.mxu0 0.0
    %1026 = vmatpush2.msra.mxu0 0.0
    %1027 = vmatprep.subr.mxu0 0.0
    %1028 = vmatpush2.msra.mxu0 0.0
    %1029 = vmatprep.subr.mxu0 0.0
    %1030 = vmatpush2.msra.mxu0 0.0
    %1031 = vmatprep.subr.mxu0 0.0
    %1032 = vmatpush2.msra.mxu0 0.0
    %1033 = vmatprep.subr.mxu0 0.0
    %1034 = vmatpush2.msra.mxu0 0.0
    %1035 = vmatprep.subr.mxu0 0.0
    %1036 = vmatpush2.msra.mxu0 0.0
    %1037 = vmatprep.subr.mxu0 0.0
    %1038 = vmatpush2.msra.mxu0 0.0
    %1039 = vmatprep.mubr.f32.mxu0 0.0
    %1040 = vmatmul.mubr.f32.gmra.mxu0 %v900
    %v1041 = vpop.f32.mrf.mxu0
    %v1042 = vadd.f32 0.0, %v1041
    %v1043 = vpop.f32.mrf.mxu0
    %1044 = vdwg.mxu0
    %v1045 = vadd.f32 %v901, %v971
    %v1046 = vxor.u32 %v1045, 2147483648
    %v1047 = vmul.f32 %v1046, 1.442695
    %v1048 = vpow.pop %v1047
    %v1049 = vadd.f32 %v1048, 1.0
    %v1050 = vrcp.pop %v1049
    %v1051 = vmul.f32 1.0, %v1050
    %v1052 = vadd.f32 %v902, %v973
    %v1053 = vxor.u32 %v1052, 2147483648
    %v1054 = vmul.f32 %v1053, 1.442695
    %v1055 = vpow.pop %v1054
    %v1056 = vadd.f32 %v1055, 1.0
    %v1057 = vrcp.pop %v1056
    %v1058 = vmul.f32 1.0, %v1057
    %v1059 = vmul.f32 %v1051, %v1042
    %v1060 = vadd.f32 %v903, %v1059
    %v1061 = vtanh.pop %v1060
    %v1062 = vsub.f32 1.0, %v1058
    %v1063 = vmul.f32 %v1062, %v1061
    %v1064 = vmul.f32 %v1058, %v900
    %v1065 = vadd.f32 %v1063, %v1064
    %v1066 = vld [vmem:[#allocation2 + $0x30] sm:$0xff]
    %v1067 = vld [vmem:[#allocation2 + $0x38] sm:$0xff]
    %v1068 = vld [vmem:[#allocation2 + $0x40] sm:$0xff]
    %1069 = vmatprep.subr.mxu0 %v737
    %1070 = vmatpush1.msra.mxu0 %v736
    %1071 = vmatprep.subr.mxu0 %v734
    %1072 = vmatpush1.msra.mxu0 %v733
    %1073 = vmatprep.subr.mxu0 %v731
    %1074 = vmatpush1.msra.mxu0 %v730
    %1075 = vmatprep.subr.mxu0 %v728
    %1076 = vmatpush1.msra.mxu0 %v727
    %1077 = vmatprep.subr.mxu0 %v725
    %1078 = vmatpush1.msra.mxu0 %v724
    %1079 = vmatprep.subr.mxu0 %v722
    %1080 = vmatpush1.msra.mxu0 %v721
    %1081 = vmatprep.subr.mxu0 %v719
    %1082 = vmatpush1.msra.mxu0 %v718
    %1083 = vmatprep.subr.mxu0 %v716
    %1084 = vmatpush1.msra.mxu0 %v715
    %1085 = vmatprep.subr.mxu0 %v713
    %1086 = vmatpush1.msra.mxu0 %v712
    %1087 = vmatprep.subr.mxu0 %v710
    %1088 = vmatpush1.msra.mxu0 %v709
    %1089 = vmatprep.subr.mxu0 %v707
    %1090 = vmatpush1.msra.mxu0 %v706
    %1091 = vmatprep.subr.mxu0 %v704
    %1092 = vmatpush1.msra.mxu0 %v703
    %1093 = vmatprep.subr.mxu0 %v701
    %1094 = vmatpush1.msra.mxu0 %v700
    %1095 = vmatprep.subr.mxu0 %v698
    %1096 = vmatpush1.msra.mxu0 %v697
    %1097 = vmatprep.subr.mxu0 %v695
    %1098 = vmatpush1.msra.mxu0 %v694
    %1099 = vmatprep.subr.mxu0 %v692
    %1100 = vmatpush1.msra.mxu0 %v691
    %1101 = vmatprep.subr.mxu0 0.0
    %1102 = vmatpush2.msra.mxu0 0.0
    %1103 = vmatprep.subr.mxu0 0.0
    %1104 = vmatpush2.msra.mxu0 0.0
    %1105 = vmatprep.subr.mxu0 0.0
    %1106 = vmatpush2.msra.mxu0 0.0
    %1107 = vmatprep.subr.mxu0 0.0
    %1108 = vmatpush2.msra.mxu0 0.0
    %1109 = vmatprep.subr.mxu0 0.0
    %1110 = vmatpush2.msra.mxu0 0.0
    %1111 = vmatprep.subr.mxu0 0.0
    %1112 = vmatpush2.msra.mxu0 0.0
    %1113 = vmatprep.subr.mxu0 0.0
    %1114 = vmatpush2.msra.mxu0 0.0
    %1115 = vmatprep.subr.mxu0 0.0
    %1116 = vmatpush2.msra.mxu0 0.0
    %1117 = vmatprep.subr.mxu0 0.0
    %1118 = vmatpush2.msra.mxu0 0.0
    %1119 = vmatprep.subr.mxu0 0.0
    %1120 = vmatpush2.msra.mxu0 0.0
    %1121 = vmatprep.subr.mxu0 0.0
    %1122 = vmatpush2.msra.mxu0 0.0
    %1123 = vmatprep.subr.mxu0 0.0
    %1124 = vmatpush2.msra.mxu0 0.0
    %1125 = vmatprep.subr.mxu0 0.0
    %1126 = vmatpush2.msra.mxu0 0.0
    %1127 = vmatprep.subr.mxu0 0.0
    %1128 = vmatpush2.msra.mxu0 0.0
    %1129 = vmatprep.subr.mxu0 0.0
    %1130 = vmatpush2.msra.mxu0 0.0
    %1131 = vmatprep.subr.mxu0 0.0
    %1132 = vmatpush2.msra.mxu0 0.0
    %1133 = vmatprep.mubr.f32.mxu0 0.0
    %1134 = vmatmul.mubr.f32.gmra.mxu0 %v1065
    %v1135 = vpop.f32.mrf.mxu0
    %v1136 = vadd.f32 0.0, %v1135
    %v1137 = vpop.f32.mrf.mxu0
    %v1138 = vadd.f32 0.0, %v1137
    %1139 = vdwg.mxu0
    %1140 = vmatprep.subr.mxu0 0.0
    %1141 = vmatpush1.msra.mxu0 %v738
    %1142 = vmatprep.subr.mxu0 0.0
    %1143 = vmatpush1.msra.mxu0 %v735
    %1144 = vmatprep.subr.mxu0 0.0
    %1145 = vmatpush1.msra.mxu0 %v732
    %1146 = vmatprep.subr.mxu0 0.0
    %1147 = vmatpush1.msra.mxu0 %v729
    %1148 = vmatprep.subr.mxu0 0.0
    %1149 = vmatpush1.msra.mxu0 %v726
    %1150 = vmatprep.subr.mxu0 0.0
    %1151 = vmatpush1.msra.mxu0 %v723
    %1152 = vmatprep.subr.mxu0 0.0
    %1153 = vmatpush1.msra.mxu0 %v720
    %1154 = vmatprep.subr.mxu0 0.0
    %1155 = vmatpush1.msra.mxu0 %v717
    %1156 = vmatprep.subr.mxu0 0.0
    %1157 = vmatpush1.msra.mxu0 %v714
    %1158 = vmatprep.subr.mxu0 0.0
    %1159 = vmatpush1.msra.mxu0 %v711
    %1160 = vmatprep.subr.mxu0 0.0
    %1161 = vmatpush1.msra.mxu0 %v708
    %1162 = vmatprep.subr.mxu0 0.0
    %1163 = vmatpush1.msra.mxu0 %v705
    %1164 = vmatprep.subr.mxu0 0.0
    %1165 = vmatpush1.msra.mxu0 %v702
    %1166 = vmatprep.subr.mxu0 0.0
    %1167 = vmatpush1.msra.mxu0 %v699
    %1168 = vmatprep.subr.mxu0 0.0
    %1169 = vmatpush1.msra.mxu0 %v696
    %1170 = vmatprep.subr.mxu0 0.0
    %1171 = vmatpush1.msra.mxu0 %v693
    %1172 = vmatprep.subr.mxu0 0.0
    %1173 = vmatpush2.msra.mxu0 0.0
    %1174 = vmatprep.subr.mxu0 0.0
    %1175 = vmatpush2.msra.mxu0 0.0
    %1176 = vmatprep.subr.mxu0 0.0
    %1177 = vmatpush2.msra.mxu0 0.0
    %1178 = vmatprep.subr.mxu0 0.0
    %1179 = vmatpush2.msra.mxu0 0.0
    %1180 = vmatprep.subr.mxu0 0.0
    %1181 = vmatpush2.msra.mxu0 0.0
    %1182 = vmatprep.subr.mxu0 0.0
    %1183 = vmatpush2.msra.mxu0 0.0
    %1184 = vmatprep.subr.mxu0 0.0
    %1185 = vmatpush2.msra.mxu0 0.0
    %1186 = vmatprep.subr.mxu0 0.0
    %1187 = vmatpush2.msra.mxu0 0.0
    %1188 = vmatprep.subr.mxu0 0.0
    %1189 = vmatpush2.msra.mxu0 0.0
    %1190 = vmatprep.subr.mxu0 0.0
    %1191 = vmatpush2.msra.mxu0 0.0
    %1192 = vmatprep.subr.mxu0 0.0
    %1193 = vmatpush2.msra.mxu0 0.0
    %1194 = vmatprep.subr.mxu0 0.0
    %1195 = vmatpush2.msra.mxu0 0.0
    %1196 = vmatprep.subr.mxu0 0.0
    %1197 = vmatpush2.msra.mxu0 0.0
    %1198 = vmatprep.subr.mxu0 0.0
    %1199 = vmatpush2.msra.mxu0 0.0
    %1200 = vmatprep.subr.mxu0 0.0
    %1201 = vmatpush2.msra.mxu0 0.0
    %1202 = vmatprep.subr.mxu0 0.0
    %1203 = vmatpush2.msra.mxu0 0.0
    %1204 = vmatprep.mubr.f32.mxu0 0.0
    %1205 = vmatmul.mubr.f32.gmra.mxu0 %v1065
    %v1206 = vpop.f32.mrf.mxu0
    %v1207 = vadd.f32 0.0, %v1206
    %v1208 = vpop.f32.mrf.mxu0
    %1209 = vdwg.mxu0
    %v1210 = vadd.f32 %v1066, %v1136
    %v1211 = vxor.u32 %v1210, 2147483648
    %v1212 = vmul.f32 %v1211, 1.442695
    %v1213 = vpow.pop %v1212
    %v1214 = vadd.f32 %v1213, 1.0
    %v1215 = vrcp.pop %v1214
    %v1216 = vmul.f32 1.0, %v1215
    %v1217 = vadd.f32 %v1067, %v1138
    %v1218 = vxor.u32 %v1217, 2147483648
    %v1219 = vmul.f32 %v1218, 1.442695
    %v1220 = vpow.pop %v1219
    %v1221 = vadd.f32 %v1220, 1.0
    %v1222 = vrcp.pop %v1221
    %v1223 = vmul.f32 1.0, %v1222
    %v1224 = vmul.f32 %v1216, %v1207
    %v1225 = vadd.f32 %v1068, %v1224
    %v1226 = vtanh.pop %v1225
    %v1227 = vsub.f32 1.0, %v1223
    %v1228 = vmul.f32 %v1227, %v1226
    %v1229 = vmul.f32 %v1223, %v1065
    %v1230 = vadd.f32 %v1228, %v1229
    %v1231 = vld [vmem:[#allocation2 + $0x48] sm:$0xff]
    %v1232 = vld [vmem:[#allocation2 + $0x50] sm:$0xff]
    %v1233 = vld [vmem:[#allocation2 + $0x58] sm:$0xff]
    %1234 = vmatprep.subr.mxu0 %v737
    %1235 = vmatpush1.msra.mxu0 %v736
    %1236 = vmatprep.subr.mxu0 %v734
    %1237 = vmatpush1.msra.mxu0 %v733
    %1238 = vmatprep.subr.mxu0 %v731
    %1239 = vmatpush1.msra.mxu0 %v730
    %1240 = vmatprep.subr.mxu0 %v728
    %1241 = vmatpush1.msra.mxu0 %v727
    %1242 = vmatprep.subr.mxu0 %v725
    %1243 = vmatpush1.msra.mxu0 %v724
    %1244 = vmatprep.subr.mxu0 %v722
    %1245 = vmatpush1.msra.mxu0 %v721
    %1246 = vmatprep.subr.mxu0 %v719
    %1247 = vmatpush1.msra.mxu0 %v718
    %1248 = vmatprep.subr.mxu0 %v716
    %1249 = vmatpush1.msra.mxu0 %v715
    %1250 = vmatprep.subr.mxu0 %v713
    %1251 = vmatpush1.msra.mxu0 %v712
    %1252 = vmatprep.subr.mxu0 %v710
    %1253 = vmatpush1.msra.mxu0 %v709
    %1254 = vmatprep.subr.mxu0 %v707
    %1255 = vmatpush1.msra.mxu0 %v706
    %1256 = vmatprep.subr.mxu0 %v704
    %1257 = vmatpush1.msra.mxu0 %v703
    %1258 = vmatprep.subr.mxu0 %v701
    %1259 = vmatpush1.msra.mxu0 %v700
    %1260 = vmatprep.subr.mxu0 %v698
    %1261 = vmatpush1.msra.mxu0 %v697
    %1262 = vmatprep.subr.mxu0 %v695
    %1263 = vmatpush1.msra.mxu0 %v694
    %1264 = vmatprep.subr.mxu0 %v692
    %1265 = vmatpush1.msra.mxu0 %v691
    %1266 = vmatprep.subr.mxu0 0.0
    %1267 = vmatpush2.msra.mxu0 0.0
    %1268 = vmatprep.subr.mxu0 0.0
    %1269 = vmatpush2.msra.mxu0 0.0
    %1270 = vmatprep.subr.mxu0 0.0
    %1271 = vmatpush2.msra.mxu0 0.0
    %1272 = vmatprep.subr.mxu0 0.0
    %1273 = vmatpush2.msra.mxu0 0.0
    %1274 = vmatprep.subr.mxu0 0.0
    %1275 = vmatpush2.msra.mxu0 0.0
    %1276 = vmatprep.subr.mxu0 0.0
    %1277 = vmatpush2.msra.mxu0 0.0
    %1278 = vmatprep.subr.mxu0 0.0
    %1279 = vmatpush2.msra.mxu0 0.0
    %1280 = vmatprep.subr.mxu0 0.0
    %1281 = vmatpush2.msra.mxu0 0.0
    %1282 = vmatprep.subr.mxu0 0.0
    %1283 = vmatpush2.msra.mxu0 0.0
    %1284 = vmatprep.subr.mxu0 0.0
    %1285 = vmatpush2.msra.mxu0 0.0
    %1286 = vmatprep.subr.mxu0 0.0
    %1287 = vmatpush2.msra.mxu0 0.0
    %1288 = vmatprep.subr.mxu0 0.0
    %1289 = vmatpush2.msra.mxu0 0.0
    %1290 = vmatprep.subr.mxu0 0.0
    %1291 = vmatpush2.msra.mxu0 0.0
    %1292 = vmatprep.subr.mxu0 0.0
    %1293 = vmatpush2.msra.mxu0 0.0
    %1294 = vmatprep.subr.mxu0 0.0
    %1295 = vmatpush2.msra.mxu0 0.0
    %1296 = vmatprep.subr.mxu0 0.0
    %1297 = vmatpush2.msra.mxu0 0.0
    %1298 = vmatprep.mubr.f32.mxu0 0.0
    %1299 = vmatmul.mubr.f32.gmra.mxu0 %v1230
    %v1300 = vpop.f32.mrf.mxu0
    %v1301 = vadd.f32 0.0, %v1300
    %v1302 = vpop.f32.mrf.mxu0
    %v1303 = vadd.f32 0.0, %v1302
    %1304 = vdwg.mxu0
    %1305 = vmatprep.subr.mxu0 0.0
    %1306 = vmatpush1.msra.mxu0 %v738
    %1307 = vmatprep.subr.mxu0 0.0
    %1308 = vmatpush1.msra.mxu0 %v735
    %1309 = vmatprep.subr.mxu0 0.0
    %1310 = vmatpush1.msra.mxu0 %v732
    %1311 = vmatprep.subr.mxu0 0.0
    %1312 = vmatpush1.msra.mxu0 %v729
    %1313 = vmatprep.subr.mxu0 0.0
    %1314 = vmatpush1.msra.mxu0 %v726
    %1315 = vmatprep.subr.mxu0 0.0
    %1316 = vmatpush1.msra.mxu0 %v723
    %1317 = vmatprep.subr.mxu0 0.0
    %1318 = vmatpush1.msra.mxu0 %v720
    %1319 = vmatprep.subr.mxu0 0.0
    %1320 = vmatpush1.msra.mxu0 %v717
    %1321 = vmatprep.subr.mxu0 0.0
    %1322 = vmatpush1.msra.mxu0 %v714
    %1323 = vmatprep.subr.mxu0 0.0
    %1324 = vmatpush1.msra.mxu0 %v711
    %1325 = vmatprep.subr.mxu0 0.0
    %1326 = vmatpush1.msra.mxu0 %v708
    %1327 = vmatprep.subr.mxu0 0.0
    %1328 = vmatpush1.msra.mxu0 %v705
    %1329 = vmatprep.subr.mxu0 0.0
    %1330 = vmatpush1.msra.mxu0 %v702
    %1331 = vmatprep.subr.mxu0 0.0
    %1332 = vmatpush1.msra.mxu0 %v699
    %1333 = vmatprep.subr.mxu0 0.0
    %1334 = vmatpush1.msra.mxu0 %v696
    %1335 = vmatprep.subr.mxu0 0.0
    %1336 = vmatpush1.msra.mxu0 %v693
    %1337 = vmatprep.subr.mxu0 0.0
    %1338 = vmatpush2.msra.mxu0 0.0
    %1339 = vmatprep.subr.mxu0 0.0
    %1340 = vmatpush2.msra.mxu0 0.0
    %1341 = vmatprep.subr.mxu0 0.0
    %1342 = vmatpush2.msra.mxu0 0.0
    %1343 = vmatprep.subr.mxu0 0.0
    %1344 = vmatpush2.msra.mxu0 0.0
    %1345 = vmatprep.subr.mxu0 0.0
    %1346 = vmatpush2.msra.mxu0 0.0
    %1347 = vmatprep.subr.mxu0 0.0
    %1348 = vmatpush2.msra.mxu0 0.0
    %1349 = vmatprep.subr.mxu0 0.0
    %1350 = vmatpush2.msra.mxu0 0.0
    %1351 = vmatprep.subr.mxu0 0.0
    %1352 = vmatpush2.msra.mxu0 0.0
    %1353 = vmatprep.subr.mxu0 0.0
    %1354 = vmatpush2.msra.mxu0 0.0
    %1355 = vmatprep.subr.mxu0 0.0
    %1356 = vmatpush2.msra.mxu0 0.0
    %1357 = vmatprep.subr.mxu0 0.0
    %1358 = vmatpush2.msra.mxu0 0.0
    %1359 = vmatprep.subr.mxu0 0.0
    %1360 = vmatpush2.msra.mxu0 0.0
    %1361 = vmatprep.subr.mxu0 0.0
    %1362 = vmatpush2.msra.mxu0 0.0
    %1363 = vmatprep.subr.mxu0 0.0
    %1364 = vmatpush2.msra.mxu0 0.0
    %1365 = vmatprep.subr.mxu0 0.0
    %1366 = vmatpush2.msra.mxu0 0.0
    %1367 = vmatprep.subr.mxu0 0.0
    %1368 = vmatpush2.msra.mxu0 0.0
    %1369 = vmatprep.mubr.f32.mxu0 0.0
    %1370 = vmatmul.mubr.f32.gmra.mxu0 %v1230
    %v1371 = vpop.f32.mrf.mxu0
    %v1372 = vadd.f32 0.0, %v1371
    %v1373 = vpop.f32.mrf.mxu0
    %1374 = vdwg.mxu0
    %v1375 = vadd.f32 %v1231, %v1301
    %v1376 = vxor.u32 %v1375, 2147483648
    %v1377 = vmul.f32 %v1376, 1.442695
    %v1378 = vpow.pop %v1377
    %v1379 = vadd.f32 %v1378, 1.0
    %v1380 = vrcp.pop %v1379
    %v1381 = vmul.f32 1.0, %v1380
    %v1382 = vadd.f32 %v1232, %v1303
    %v1383 = vxor.u32 %v1382, 2147483648
    %v1384 = vmul.f32 %v1383, 1.442695
    %v1385 = vpow.pop %v1384
    %v1386 = vadd.f32 %v1385, 1.0
    %v1387 = vrcp.pop %v1386
    %v1388 = vmul.f32 1.0, %v1387
    %v1389 = vmul.f32 %v1381, %v1372
    %v1390 = vadd.f32 %v1233, %v1389
    %v1391 = vtanh.pop %v1390
    %v1392 = vsub.f32 1.0, %v1388
    %v1393 = vmul.f32 %v1392, %v1391
    %v1394 = vmul.f32 %v1388, %v1230
    %v1395 = vadd.f32 %v1393, %v1394
    %v1396 = vld [vmem:[#allocation2 + $0x60] sm:$0xff]
    %v1397 = vld [vmem:[#allocation2 + $0x68] sm:$0xff]
    %v1398 = vld [vmem:[#allocation2 + $0x70] sm:$0xff]
    %1399 = vmatprep.subr.mxu0 %v737
    %1400 = vmatpush1.msra.mxu0 %v736
    %1401 = vmatprep.subr.mxu0 %v734
    %1402 = vmatpush1.msra.mxu0 %v733
    %1403 = vmatprep.subr.mxu0 %v731
    %1404 = vmatpush1.msra.mxu0 %v730
    %1405 = vmatprep.subr.mxu0 %v728
    %1406 = vmatpush1.msra.mxu0 %v727
    %1407 = vmatprep.subr.mxu0 %v725
    %1408 = vmatpush1.msra.mxu0 %v724
    %1409 = vmatprep.subr.mxu0 %v722
    %1410 = vmatpush1.msra.mxu0 %v721
    %1411 = vmatprep.subr.mxu0 %v719
    %1412 = vmatpush1.msra.mxu0 %v718
    %1413 = vmatprep.subr.mxu0 %v716
    %1414 = vmatpush1.msra.mxu0 %v715
    %1415 = vmatprep.subr.mxu0 %v713
    %1416 = vmatpush1.msra.mxu0 %v712
    %1417 = vmatprep.subr.mxu0 %v710
    %1418 = vmatpush1.msra.mxu0 %v709
    %1419 = vmatprep.subr.mxu0 %v707
    %1420 = vmatpush1.msra.mxu0 %v706
    %1421 = vmatprep.subr.mxu0 %v704
    %1422 = vmatpush1.msra.mxu0 %v703
    %1423 = vmatprep.subr.mxu0 %v701
    %1424 = vmatpush1.msra.mxu0 %v700
    %1425 = vmatprep.subr.mxu0 %v698
    %1426 = vmatpush1.msra.mxu0 %v697
    %1427 = vmatprep.subr.mxu0 %v695
    %1428 = vmatpush1.msra.mxu0 %v694
    %1429 = vmatprep.subr.mxu0 %v692
    %1430 = vmatpush1.msra.mxu0 %v691
    %1431 = vmatprep.subr.mxu0 0.0
    %1432 = vmatpush2.msra.mxu0 0.0
    %1433 = vmatprep.subr.mxu0 0.0
    %1434 = vmatpush2.msra.mxu0 0.0
    %1435 = vmatprep.subr.mxu0 0.0
    %1436 = vmatpush2.msra.mxu0 0.0
    %1437 = vmatprep.subr.mxu0 0.0
    %1438 = vmatpush2.msra.mxu0 0.0
    %1439 = vmatprep.subr.mxu0 0.0
    %1440 = vmatpush2.msra.mxu0 0.0
    %1441 = vmatprep.subr.mxu0 0.0
    %1442 = vmatpush2.msra.mxu0 0.0
    %1443 = vmatprep.subr.mxu0 0.0
    %1444 = vmatpush2.msra.mxu0 0.0
    %1445 = vmatprep.subr.mxu0 0.0
    %1446 = vmatpush2.msra.mxu0 0.0
    %1447 = vmatprep.subr.mxu0 0.0
    %1448 = vmatpush2.msra.mxu0 0.0
    %1449 = vmatprep.subr.mxu0 0.0
    %1450 = vmatpush2.msra.mxu0 0.0
    %1451 = vmatprep.subr.mxu0 0.0
    %1452 = vmatpush2.msra.mxu0 0.0
    %1453 = vmatprep.subr.mxu0 0.0
    %1454 = vmatpush2.msra.mxu0 0.0
    %1455 = vmatprep.subr.mxu0 0.0
    %1456 = vmatpush2.msra.mxu0 0.0
    %1457 = vmatprep.subr.mxu0 0.0
    %1458 = vmatpush2.msra.mxu0 0.0
    %1459 = vmatprep.subr.mxu0 0.0
    %1460 = vmatpush2.msra.mxu0 0.0
    %1461 = vmatprep.subr.mxu0 0.0
    %1462 = vmatpush2.msra.mxu0 0.0
    %1463 = vmatprep.mubr.f32.mxu0 0.0
    %1464 = vmatmul.mubr.f32.gmra.mxu0 %v1395
    %v1465 = vpop.f32.mrf.mxu0
    %v1466 = vadd.f32 0.0, %v1465
    %v1467 = vpop.f32.mrf.mxu0
    %v1468 = vadd.f32 0.0, %v1467
    %1469 = vdwg.mxu0
    %1470 = vmatprep.subr.mxu0 0.0
    %1471 = vmatpush1.msra.mxu0 %v738
    %1472 = vmatprep.subr.mxu0 0.0
    %1473 = vmatpush1.msra.mxu0 %v735
    %1474 = vmatprep.subr.mxu0 0.0
    %1475 = vmatpush1.msra.mxu0 %v732
    %1476 = vmatprep.subr.mxu0 0.0
    %1477 = vmatpush1.msra.mxu0 %v729
    %1478 = vmatprep.subr.mxu0 0.0
    %1479 = vmatpush1.msra.mxu0 %v726
    %1480 = vmatprep.subr.mxu0 0.0
    %1481 = vmatpush1.msra.mxu0 %v723
    %1482 = vmatprep.subr.mxu0 0.0
    %1483 = vmatpush1.msra.mxu0 %v720
    %1484 = vmatprep.subr.mxu0 0.0
    %1485 = vmatpush1.msra.mxu0 %v717
    %1486 = vmatprep.subr.mxu0 0.0
    %1487 = vmatpush1.msra.mxu0 %v714
    %1488 = vmatprep.subr.mxu0 0.0
    %1489 = vmatpush1.msra.mxu0 %v711
    %1490 = vmatprep.subr.mxu0 0.0
    %1491 = vmatpush1.msra.mxu0 %v708
    %1492 = vmatprep.subr.mxu0 0.0
    %1493 = vmatpush1.msra.mxu0 %v705
    %1494 = vmatprep.subr.mxu0 0.0
    %1495 = vmatpush1.msra.mxu0 %v702
    %1496 = vmatprep.subr.mxu0 0.0
    %1497 = vmatpush1.msra.mxu0 %v699
    %1498 = vmatprep.subr.mxu0 0.0
    %1499 = vmatpush1.msra.mxu0 %v696
    %1500 = vmatprep.subr.mxu0 0.0
    %1501 = vmatpush1.msra.mxu0 %v693
    %1502 = vmatprep.subr.mxu0 0.0
    %1503 = vmatpush2.msra.mxu0 0.0
    %1504 = vmatprep.subr.mxu0 0.0
    %1505 = vmatpush2.msra.mxu0 0.0
    %1506 = vmatprep.subr.mxu0 0.0
    %1507 = vmatpush2.msra.mxu0 0.0
    %1508 = vmatprep.subr.mxu0 0.0
    %1509 = vmatpush2.msra.mxu0 0.0
    %1510 = vmatprep.subr.mxu0 0.0
    %1511 = vmatpush2.msra.mxu0 0.0
    %1512 = vmatprep.subr.mxu0 0.0
    %1513 = vmatpush2.msra.mxu0 0.0
    %1514 = vmatprep.subr.mxu0 0.0
    %1515 = vmatpush2.msra.mxu0 0.0
    %1516 = vmatprep.subr.mxu0 0.0
    %1517 = vmatpush2.msra.mxu0 0.0
    %1518 = vmatprep.subr.mxu0 0.0
    %1519 = vmatpush2.msra.mxu0 0.0
    %1520 = vmatprep.subr.mxu0 0.0
    %1521 = vmatpush2.msra.mxu0 0.0
    %1522 = vmatprep.subr.mxu0 0.0
    %1523 = vmatpush2.msra.mxu0 0.0
    %1524 = vmatprep.subr.mxu0 0.0
    %1525 = vmatpush2.msra.mxu0 0.0
    %1526 = vmatprep.subr.mxu0 0.0
    %1527 = vmatpush2.msra.mxu0 0.0
    %1528 = vmatprep.subr.mxu0 0.0
    %1529 = vmatpush2.msra.mxu0 0.0
    %1530 = vmatprep.subr.mxu0 0.0
    %1531 = vmatpush2.msra.mxu0 0.0
    %1532 = vmatprep.subr.mxu0 0.0
    %1533 = vmatpush2.msra.mxu0 0.0
    %1534 = vmatprep.mubr.f32.mxu0 0.0
    %1535 = vmatmul.mubr.f32.gmra.mxu0 %v1395
    %v1536 = vpop.f32.mrf.mxu0
    %v1537 = vadd.f32 0.0, %v1536
    %v1538 = vpop.f32.mrf.mxu0
    %1539 = vdwg.mxu0
    %v1540 = vadd.f32 %v1396, %v1466
    %v1541 = vxor.u32 %v1540, 2147483648
    %v1542 = vmul.f32 %v1541, 1.442695
    %v1543 = vpow.pop %v1542
    %v1544 = vadd.f32 %v1543, 1.0
    %v1545 = vrcp.pop %v1544
    %v1546 = vmul.f32 1.0, %v1545
    %v1547 = vadd.f32 %v1397, %v1468
    %v1548 = vxor.u32 %v1547, 2147483648
    %v1549 = vmul.f32 %v1548, 1.442695
    %v1550 = vpow.pop %v1549
    %v1551 = vadd.f32 %v1550, 1.0
    %v1552 = vrcp.pop %v1551
    %v1553 = vmul.f32 1.0, %v1552
    %v1554 = vmul.f32 %v1546, %v1537
    %v1555 = vadd.f32 %v1398, %v1554
    %v1556 = vtanh.pop %v1555
    %v1557 = vsub.f32 1.0, %v1553
    %v1558 = vmul.f32 %v1557, %v1556
    %v1559 = vmul.f32 %v1553, %v1395
    %v1560 = vadd.f32 %v1558, %v1559
    %v1561 = vld [vmem:[#allocation2 + $0x78] sm:$0xff]
    %v1562 = vld [vmem:[#allocation2 + $0x80] sm:$0xff]
    %v1563 = vld [vmem:[#allocation2 + $0x88] sm:$0xff]
    %1564 = vmatprep.subr.mxu0 %v737
    %1565 = vmatpush1.msra.mxu0 %v736
    %1566 = vmatprep.subr.mxu0 %v734
    %1567 = vmatpush1.msra.mxu0 %v733
    %1568 = vmatprep.subr.mxu0 %v731
    %1569 = vmatpush1.msra.mxu0 %v730
    %1570 = vmatprep.subr.mxu0 %v728
    %1571 = vmatpush1.msra.mxu0 %v727
    %1572 = vmatprep.subr.mxu0 %v725
    %1573 = vmatpush1.msra.mxu0 %v724
    %1574 = vmatprep.subr.mxu0 %v722
    %1575 = vmatpush1.msra.mxu0 %v721
    %1576 = vmatprep.subr.mxu0 %v719
    %1577 = vmatpush1.msra.mxu0 %v718
    %1578 = vmatprep.subr.mxu0 %v716
    %1579 = vmatpush1.msra.mxu0 %v715
    %1580 = vmatprep.subr.mxu0 %v713
    %1581 = vmatpush1.msra.mxu0 %v712
    %1582 = vmatprep.subr.mxu0 %v710
    %1583 = vmatpush1.msra.mxu0 %v709
    %1584 = vmatprep.subr.mxu0 %v707
    %1585 = vmatpush1.msra.mxu0 %v706
    %1586 = vmatprep.subr.mxu0 %v704
    %1587 = vmatpush1.msra.mxu0 %v703
    %1588 = vmatprep.subr.mxu0 %v701
    %1589 = vmatpush1.msra.mxu0 %v700
    %1590 = vmatprep.subr.mxu0 %v698
    %1591 = vmatpush1.msra.mxu0 %v697
    %1592 = vmatprep.subr.mxu0 %v695
    %1593 = vmatpush1.msra.mxu0 %v694
    %1594 = vmatprep.subr.mxu0 %v692
    %1595 = vmatpush1.msra.mxu0 %v691
    %1596 = vmatprep.subr.mxu0 0.0
    %1597 = vmatpush2.msra.mxu0 0.0
    %1598 = vmatprep.subr.mxu0 0.0
    %1599 = vmatpush2.msra.mxu0 0.0
    %1600 = vmatprep.subr.mxu0 0.0
    %1601 = vmatpush2.msra.mxu0 0.0
    %1602 = vmatprep.subr.mxu0 0.0
    %1603 = vmatpush2.msra.mxu0 0.0
    %1604 = vmatprep.subr.mxu0 0.0
    %1605 = vmatpush2.msra.mxu0 0.0
    %1606 = vmatprep.subr.mxu0 0.0
    %1607 = vmatpush2.msra.mxu0 0.0
    %1608 = vmatprep.subr.mxu0 0.0
    %1609 = vmatpush2.msra.mxu0 0.0
    %1610 = vmatprep.subr.mxu0 0.0
    %1611 = vmatpush2.msra.mxu0 0.0
    %1612 = vmatprep.subr.mxu0 0.0
    %1613 = vmatpush2.msra.mxu0 0.0
    %1614 = vmatprep.subr.mxu0 0.0
    %1615 = vmatpush2.msra.mxu0 0.0
    %1616 = vmatprep.subr.mxu0 0.0
    %1617 = vmatpush2.msra.mxu0 0.0
    %1618 = vmatprep.subr.mxu0 0.0
    %1619 = vmatpush2.msra.mxu0 0.0
    %1620 = vmatprep.subr.mxu0 0.0
    %1621 = vmatpush2.msra.mxu0 0.0
    %1622 = vmatprep.subr.mxu0 0.0
    %1623 = vmatpush2.msra.mxu0 0.0
    %1624 = vmatprep.subr.mxu0 0.0
    %1625 = vmatpush2.msra.mxu0 0.0
    %1626 = vmatprep.subr.mxu0 0.0
    %1627 = vmatpush2.msra.mxu0 0.0
    %1628 = vmatprep.mubr.f32.mxu0 0.0
    %1629 = vmatmul.mubr.f32.gmra.mxu0 %v1560
    %v1630 = vpop.f32.mrf.mxu0
    %v1631 = vadd.f32 0.0, %v1630
    %v1632 = vpop.f32.mrf.mxu0
    %v1633 = vadd.f32 0.0, %v1632
    %1634 = vdwg.mxu0
    %1635 = vmatprep.subr.mxu0 0.0
    %1636 = vmatpush1.msra.mxu0 %v738
    %1637 = vmatprep.subr.mxu0 0.0
    %1638 = vmatpush1.msra.mxu0 %v735
    %1639 = vmatprep.subr.mxu0 0.0
    %1640 = vmatpush1.msra.mxu0 %v732
    %1641 = vmatprep.subr.mxu0 0.0
    %1642 = vmatpush1.msra.mxu0 %v729
    %1643 = vmatprep.subr.mxu0 0.0
    %1644 = vmatpush1.msra.mxu0 %v726
    %1645 = vmatprep.subr.mxu0 0.0
    %1646 = vmatpush1.msra.mxu0 %v723
    %1647 = vmatprep.subr.mxu0 0.0
    %1648 = vmatpush1.msra.mxu0 %v720
    %1649 = vmatprep.subr.mxu0 0.0
    %1650 = vmatpush1.msra.mxu0 %v717
    %1651 = vmatprep.subr.mxu0 0.0
    %1652 = vmatpush1.msra.mxu0 %v714
    %1653 = vmatprep.subr.mxu0 0.0
    %1654 = vmatpush1.msra.mxu0 %v711
    %1655 = vmatprep.subr.mxu0 0.0
    %1656 = vmatpush1.msra.mxu0 %v708
    %1657 = vmatprep.subr.mxu0 0.0
    %1658 = vmatpush1.msra.mxu0 %v705
    %1659 = vmatprep.subr.mxu0 0.0
    %1660 = vmatpush1.msra.mxu0 %v702
    %1661 = vmatprep.subr.mxu0 0.0
    %1662 = vmatpush1.msra.mxu0 %v699
    %1663 = vmatprep.subr.mxu0 0.0
    %1664 = vmatpush1.msra.mxu0 %v696
    %1665 = vmatprep.subr.mxu0 0.0
    %1666 = vmatpush1.msra.mxu0 %v693
    %1667 = vmatprep.subr.mxu0 0.0
    %1668 = vmatpush2.msra.mxu0 0.0
    %1669 = vmatprep.subr.mxu0 0.0
    %1670 = vmatpush2.msra.mxu0 0.0
    %1671 = vmatprep.subr.mxu0 0.0
    %1672 = vmatpush2.msra.mxu0 0.0
    %1673 = vmatprep.subr.mxu0 0.0
    %1674 = vmatpush2.msra.mxu0 0.0
    %1675 = vmatprep.subr.mxu0 0.0
    %1676 = vmatpush2.msra.mxu0 0.0
    %1677 = vmatprep.subr.mxu0 0.0
    %1678 = vmatpush2.msra.mxu0 0.0
    %1679 = vmatprep.subr.mxu0 0.0
    %1680 = vmatpush2.msra.mxu0 0.0
    %1681 = vmatprep.subr.mxu0 0.0
    %1682 = vmatpush2.msra.mxu0 0.0
    %1683 = vmatprep.subr.mxu0 0.0
    %1684 = vmatpush2.msra.mxu0 0.0
    %1685 = vmatprep.subr.mxu0 0.0
    %1686 = vmatpush2.msra.mxu0 0.0
    %1687 = vmatprep.subr.mxu0 0.0
    %1688 = vmatpush2.msra.mxu0 0.0
    %1689 = vmatprep.subr.mxu0 0.0
    %1690 = vmatpush2.msra.mxu0 0.0
    %1691 = vmatprep.subr.mxu0 0.0
    %1692 = vmatpush2.msra.mxu0 0.0
    %1693 = vmatprep.subr.mxu0 0.0
    %1694 = vmatpush2.msra.mxu0 0.0
    %1695 = vmatprep.subr.mxu0 0.0
    %1696 = vmatpush2.msra.mxu0 0.0
    %1697 = vmatprep.subr.mxu0 0.0
    %1698 = vmatpush2.msra.mxu0 0.0
    %1699 = vmatprep.mubr.f32.mxu0 0.0
    %1700 = vmatmul.mubr.f32.gmra.mxu0 %v1560
    %v1701 = vpop.f32.mrf.mxu0
    %v1702 = vadd.f32 0.0, %v1701
    %v1703 = vpop.f32.mrf.mxu0
    %1704 = vdwg.mxu0
    %v1705 = vadd.f32 %v1561, %v1631
    %v1706 = vxor.u32 %v1705, 2147483648
    %v1707 = vmul.f32 %v1706, 1.442695
    %v1708 = vpow.pop %v1707
    %v1709 = vadd.f32 %v1708, 1.0
    %v1710 = vrcp.pop %v1709
    %v1711 = vmul.f32 1.0, %v1710
    %v1712 = vadd.f32 %v1562, %v1633
    %v1713 = vxor.u32 %v1712, 2147483648
    %v1714 = vmul.f32 %v1713, 1.442695
    %v1715 = vpow.pop %v1714
    %v1716 = vadd.f32 %v1715, 1.0
    %v1717 = vrcp.pop %v1716
    %v1718 = vmul.f32 1.0, %v1717
    %v1719 = vmul.f32 %v1711, %v1702
    %v1720 = vadd.f32 %v1563, %v1719
    %v1721 = vtanh.pop %v1720
    %v1722 = vsub.f32 1.0, %v1718
    %v1723 = vmul.f32 %v1722, %v1721
    %v1724 = vmul.f32 %v1718, %v1560
    %v1725 = vadd.f32 %v1723, %v1724
    %v1726 = vld [vmem:[#allocation2 + $0x90] sm:$0xff]
    %v1727 = vld [vmem:[#allocation2 + $0x98] sm:$0xff]
    %v1728 = vld [vmem:[#allocation2 + $0xa0] sm:$0xff]
    %1729 = vmatprep.subr.mxu0 %v737
    %1730 = vmatpush1.msra.mxu0 %v736
    %1731 = vmatprep.subr.mxu0 %v734
    %1732 = vmatpush1.msra.mxu0 %v733
    %1733 = vmatprep.subr.mxu0 %v731
    %1734 = vmatpush1.msra.mxu0 %v730
    %1735 = vmatprep.subr.mxu0 %v728
    %1736 = vmatpush1.msra.mxu0 %v727
    %1737 = vmatprep.subr.mxu0 %v725
    %1738 = vmatpush1.msra.mxu0 %v724
    %1739 = vmatprep.subr.mxu0 %v722
    %1740 = vmatpush1.msra.mxu0 %v721
    %1741 = vmatprep.subr.mxu0 %v719
    %1742 = vmatpush1.msra.mxu0 %v718
    %1743 = vmatprep.subr.mxu0 %v716
    %1744 = vmatpush1.msra.mxu0 %v715
    %1745 = vmatprep.subr.mxu0 %v713
    %1746 = vmatpush1.msra.mxu0 %v712
    %1747 = vmatprep.subr.mxu0 %v710
    %1748 = vmatpush1.msra.mxu0 %v709
    %1749 = vmatprep.subr.mxu0 %v707
    %1750 = vmatpush1.msra.mxu0 %v706
    %1751 = vmatprep.subr.mxu0 %v704
    %1752 = vmatpush1.msra.mxu0 %v703
    %1753 = vmatprep.subr.mxu0 %v701
    %1754 = vmatpush1.msra.mxu0 %v700
    %1755 = vmatprep.subr.mxu0 %v698
    %1756 = vmatpush1.msra.mxu0 %v697
    %1757 = vmatprep.subr.mxu0 %v695
    %1758 = vmatpush1.msra.mxu0 %v694
    %1759 = vmatprep.subr.mxu0 %v692
    %1760 = vmatpush1.msra.mxu0 %v691
    %1761 = vmatprep.subr.mxu0 0.0
    %1762 = vmatpush2.msra.mxu0 0.0
    %1763 = vmatprep.subr.mxu0 0.0
    %1764 = vmatpush2.msra.mxu0 0.0
    %1765 = vmatprep.subr.mxu0 0.0
    %1766 = vmatpush2.msra.mxu0 0.0
    %1767 = vmatprep.subr.mxu0 0.0
    %1768 = vmatpush2.msra.mxu0 0.0
    %1769 = vmatprep.subr.mxu0 0.0
    %1770 = vmatpush2.msra.mxu0 0.0
    %1771 = vmatprep.subr.mxu0 0.0
    %1772 = vmatpush2.msra.mxu0 0.0
    %1773 = vmatprep.subr.mxu0 0.0
    %1774 = vmatpush2.msra.mxu0 0.0
    %1775 = vmatprep.subr.mxu0 0.0
    %1776 = vmatpush2.msra.mxu0 0.0
    %1777 = vmatprep.subr.mxu0 0.0
    %1778 = vmatpush2.msra.mxu0 0.0
    %1779 = vmatprep.subr.mxu0 0.0
    %1780 = vmatpush2.msra.mxu0 0.0
    %1781 = vmatprep.subr.mxu0 0.0
    %1782 = vmatpush2.msra.mxu0 0.0
    %1783 = vmatprep.subr.mxu0 0.0
    %1784 = vmatpush2.msra.mxu0 0.0
    %1785 = vmatprep.subr.mxu0 0.0
    %1786 = vmatpush2.msra.mxu0 0.0
    %1787 = vmatprep.subr.mxu0 0.0
    %1788 = vmatpush2.msra.mxu0 0.0
    %1789 = vmatprep.subr.mxu0 0.0
    %1790 = vmatpush2.msra.mxu0 0.0
    %1791 = vmatprep.subr.mxu0 0.0
    %1792 = vmatpush2.msra.mxu0 0.0
    %1793 = vmatprep.mubr.f32.mxu0 0.0
    %1794 = vmatmul.mubr.f32.gmra.mxu0 %v1725
    %v1795 = vpop.f32.mrf.mxu0
    %v1796 = vadd.f32 0.0, %v1795
    %v1797 = vpop.f32.mrf.mxu0
    %v1798 = vadd.f32 0.0, %v1797
    %1799 = vdwg.mxu0
    %1800 = vmatprep.subr.mxu0 0.0
    %1801 = vmatpush1.msra.mxu0 %v738
    %1802 = vmatprep.subr.mxu0 0.0
    %1803 = vmatpush1.msra.mxu0 %v735
    %1804 = vmatprep.subr.mxu0 0.0
    %1805 = vmatpush1.msra.mxu0 %v732
    %1806 = vmatprep.subr.mxu0 0.0
    %1807 = vmatpush1.msra.mxu0 %v729
    %1808 = vmatprep.subr.mxu0 0.0
    %1809 = vmatpush1.msra.mxu0 %v726
    %1810 = vmatprep.subr.mxu0 0.0
    %1811 = vmatpush1.msra.mxu0 %v723
    %1812 = vmatprep.subr.mxu0 0.0
    %1813 = vmatpush1.msra.mxu0 %v720
    %1814 = vmatprep.subr.mxu0 0.0
    %1815 = vmatpush1.msra.mxu0 %v717
    %1816 = vmatprep.subr.mxu0 0.0
    %1817 = vmatpush1.msra.mxu0 %v714
    %1818 = vmatprep.subr.mxu0 0.0
    %1819 = vmatpush1.msra.mxu0 %v711
    %1820 = vmatprep.subr.mxu0 0.0
    %1821 = vmatpush1.msra.mxu0 %v708
    %1822 = vmatprep.subr.mxu0 0.0
    %1823 = vmatpush1.msra.mxu0 %v705
    %1824 = vmatprep.subr.mxu0 0.0
    %1825 = vmatpush1.msra.mxu0 %v702
    %1826 = vmatprep.subr.mxu0 0.0
    %1827 = vmatpush1.msra.mxu0 %v699
    %1828 = vmatprep.subr.mxu0 0.0
    %1829 = vmatpush1.msra.mxu0 %v696
    %1830 = vmatprep.subr.mxu0 0.0
    %1831 = vmatpush1.msra.mxu0 %v693
    %1832 = vmatprep.subr.mxu0 0.0
    %1833 = vmatpush2.msra.mxu0 0.0
    %1834 = vmatprep.subr.mxu0 0.0
    %1835 = vmatpush2.msra.mxu0 0.0
    %1836 = vmatprep.subr.mxu0 0.0
    %1837 = vmatpush2.msra.mxu0 0.0
    %1838 = vmatprep.subr.mxu0 0.0
    %1839 = vmatpush2.msra.mxu0 0.0
    %1840 = vmatprep.subr.mxu0 0.0
    %1841 = vmatpush2.msra.mxu0 0.0
    %1842 = vmatprep.subr.mxu0 0.0
    %1843 = vmatpush2.msra.mxu0 0.0
    %1844 = vmatprep.subr.mxu0 0.0
    %1845 = vmatpush2.msra.mxu0 0.0
    %1846 = vmatprep.subr.mxu0 0.0
    %1847 = vmatpush2.msra.mxu0 0.0
    %1848 = vmatprep.subr.mxu0 0.0
    %1849 = vmatpush2.msra.mxu0 0.0
    %1850 = vmatprep.subr.mxu0 0.0
    %1851 = vmatpush2.msra.mxu0 0.0
    %1852 = vmatprep.subr.mxu0 0.0
    %1853 = vmatpush2.msra.mxu0 0.0
    %1854 = vmatprep.subr.mxu0 0.0
    %1855 = vmatpush2.msra.mxu0 0.0
    %1856 = vmatprep.subr.mxu0 0.0
    %1857 = vmatpush2.msra.mxu0 0.0
    %1858 = vmatprep.subr.mxu0 0.0
    %1859 = vmatpush2.msra.mxu0 0.0
    %1860 = vmatprep.subr.mxu0 0.0
    %1861 = vmatpush2.msra.mxu0 0.0
    %1862 = vmatprep.subr.mxu0 0.0
    %1863 = vmatpush2.msra.mxu0 0.0
    %1864 = vmatprep.mubr.f32.mxu0 0.0
    %1865 = vmatmul.mubr.f32.gmra.mxu0 %v1725
    %v1866 = vpop.f32.mrf.mxu0
    %v1867 = vadd.f32 0.0, %v1866
    %v1868 = vpop.f32.mrf.mxu0
    %1869 = vdwg.mxu0
    %v1870 = vadd.f32 %v1726, %v1796
    %v1871 = vxor.u32 %v1870, 2147483648
    %v1872 = vmul.f32 %v1871, 1.442695
    %v1873 = vpow.pop %v1872
    %v1874 = vadd.f32 %v1873, 1.0
    %v1875 = vrcp.pop %v1874
    %v1876 = vmul.f32 1.0, %v1875
    %v1877 = vadd.f32 %v1727, %v1798
    %v1878 = vxor.u32 %v1877, 2147483648
    %v1879 = vmul.f32 %v1878, 1.442695
    %v1880 = vpow.pop %v1879
    %v1881 = vadd.f32 %v1880, 1.0
    %v1882 = vrcp.pop %v1881
    %v1883 = vmul.f32 1.0, %v1882
    %v1884 = vmul.f32 %v1876, %v1867
    %v1885 = vadd.f32 %v1728, %v1884
    %v1886 = vtanh.pop %v1885
    %v1887 = vsub.f32 1.0, %v1883
    %v1888 = vmul.f32 %v1887, %v1886
    %v1889 = vmul.f32 %v1883, %v1725
    %v1890 = vadd.f32 %v1888, %v1889
    %v1891 = vld [vmem:[#allocation2 + $0xa8] sm:$0xff]
    %v1892 = vld [vmem:[#allocation2 + $0xb0] sm:$0xff]
    %v1893 = vld [vmem:[#allocation2 + $0xb8] sm:$0xff]
    %1894 = vmatprep.subr.mxu0 %v737
    %1895 = vmatpush1.msra.mxu0 %v736
    %1896 = vmatprep.subr.mxu0 %v734
    %1897 = vmatpush1.msra.mxu0 %v733
    %1898 = vmatprep.subr.mxu0 %v731
    %1899 = vmatpush1.msra.mxu0 %v730
    %1900 = vmatprep.subr.mxu0 %v728
    %1901 = vmatpush1.msra.mxu0 %v727
    %1902 = vmatprep.subr.mxu0 %v725
    %1903 = vmatpush1.msra.mxu0 %v724
    %1904 = vmatprep.subr.mxu0 %v722
    %1905 = vmatpush1.msra.mxu0 %v721
    %1906 = vmatprep.subr.mxu0 %v719
    %1907 = vmatpush1.msra.mxu0 %v718
    %1908 = vmatprep.subr.mxu0 %v716
    %1909 = vmatpush1.msra.mxu0 %v715
    %1910 = vmatprep.subr.mxu0 %v713
    %1911 = vmatpush1.msra.mxu0 %v712
    %1912 = vmatprep.subr.mxu0 %v710
    %1913 = vmatpush1.msra.mxu0 %v709
    %1914 = vmatprep.subr.mxu0 %v707
    %1915 = vmatpush1.msra.mxu0 %v706
    %1916 = vmatprep.subr.mxu0 %v704
    %1917 = vmatpush1.msra.mxu0 %v703
    %1918 = vmatprep.subr.mxu0 %v701
    %1919 = vmatpush1.msra.mxu0 %v700
    %1920 = vmatprep.subr.mxu0 %v698
    %1921 = vmatpush1.msra.mxu0 %v697
    %1922 = vmatprep.subr.mxu0 %v695
    %1923 = vmatpush1.msra.mxu0 %v694
    %1924 = vmatprep.subr.mxu0 %v692
    %1925 = vmatpush1.msra.mxu0 %v691
    %1926 = vmatprep.subr.mxu0 0.0
    %1927 = vmatpush2.msra.mxu0 0.0
    %1928 = vmatprep.subr.mxu0 0.0
    %1929 = vmatpush2.msra.mxu0 0.0
    %1930 = vmatprep.subr.mxu0 0.0
    %1931 = vmatpush2.msra.mxu0 0.0
    %1932 = vmatprep.subr.mxu0 0.0
    %1933 = vmatpush2.msra.mxu0 0.0
    %1934 = vmatprep.subr.mxu0 0.0
    %1935 = vmatpush2.msra.mxu0 0.0
    %1936 = vmatprep.subr.mxu0 0.0
    %1937 = vmatpush2.msra.mxu0 0.0
    %1938 = vmatprep.subr.mxu0 0.0
    %1939 = vmatpush2.msra.mxu0 0.0
    %1940 = vmatprep.subr.mxu0 0.0
    %1941 = vmatpush2.msra.mxu0 0.0
    %1942 = vmatprep.subr.mxu0 0.0
    %1943 = vmatpush2.msra.mxu0 0.0
    %1944 = vmatprep.subr.mxu0 0.0
    %1945 = vmatpush2.msra.mxu0 0.0
    %1946 = vmatprep.subr.mxu0 0.0
    %1947 = vmatpush2.msra.mxu0 0.0
    %1948 = vmatprep.subr.mxu0 0.0
    %1949 = vmatpush2.msra.mxu0 0.0
    %1950 = vmatprep.subr.mxu0 0.0
    %1951 = vmatpush2.msra.mxu0 0.0
    %1952 = vmatprep.subr.mxu0 0.0
    %1953 = vmatpush2.msra.mxu0 0.0
    %1954 = vmatprep.subr.mxu0 0.0
    %1955 = vmatpush2.msra.mxu0 0.0
    %1956 = vmatprep.subr.mxu0 0.0
    %1957 = vmatpush2.msra.mxu0 0.0
    %1958 = vmatprep.mubr.f32.mxu0 0.0
    %1959 = vmatmul.mubr.f32.gmra.mxu0 %v1890
    %v1960 = vpop.f32.mrf.mxu0
    %v1961 = vadd.f32 0.0, %v1960
    %v1962 = vpop.f32.mrf.mxu0
    %v1963 = vadd.f32 0.0, %v1962
    %1964 = vdwg.mxu0
    %1965 = vmatprep.subr.mxu0 0.0
    %1966 = vmatpush1.msra.mxu0 %v738
    %1967 = vmatprep.subr.mxu0 0.0
    %1968 = vmatpush1.msra.mxu0 %v735
    %1969 = vmatprep.subr.mxu0 0.0
    %1970 = vmatpush1.msra.mxu0 %v732
    %1971 = vmatprep.subr.mxu0 0.0
    %1972 = vmatpush1.msra.mxu0 %v729
    %1973 = vmatprep.subr.mxu0 0.0
    %1974 = vmatpush1.msra.mxu0 %v726
    %1975 = vmatprep.subr.mxu0 0.0
    %1976 = vmatpush1.msra.mxu0 %v723
    %1977 = vmatprep.subr.mxu0 0.0
    %1978 = vmatpush1.msra.mxu0 %v720
    %1979 = vmatprep.subr.mxu0 0.0
    %1980 = vmatpush1.msra.mxu0 %v717
    %1981 = vmatprep.subr.mxu0 0.0
    %1982 = vmatpush1.msra.mxu0 %v714
    %1983 = vmatprep.subr.mxu0 0.0
    %1984 = vmatpush1.msra.mxu0 %v711
    %1985 = vmatprep.subr.mxu0 0.0
    %1986 = vmatpush1.msra.mxu0 %v708
    %1987 = vmatprep.subr.mxu0 0.0
    %1988 = vmatpush1.msra.mxu0 %v705
    %1989 = vmatprep.subr.mxu0 0.0
    %1990 = vmatpush1.msra.mxu0 %v702
    %1991 = vmatprep.subr.mxu0 0.0
    %1992 = vmatpush1.msra.mxu0 %v699
    %1993 = vmatprep.subr.mxu0 0.0
    %1994 = vmatpush1.msra.mxu0 %v696
    %1995 = vmatprep.subr.mxu0 0.0
    %1996 = vmatpush1.msra.mxu0 %v693
    %1997 = vmatprep.subr.mxu0 0.0
    %1998 = vmatpush2.msra.mxu0 0.0
    %1999 = vmatprep.subr.mxu0 0.0
    %2000 = vmatpush2.msra.mxu0 0.0
    %2001 = vmatprep.subr.mxu0 0.0
    %2002 = vmatpush2.msra.mxu0 0.0
    %2003 = vmatprep.subr.mxu0 0.0
    %2004 = vmatpush2.msra.mxu0 0.0
    %2005 = vmatprep.subr.mxu0 0.0
    %2006 = vmatpush2.msra.mxu0 0.0
    %2007 = vmatprep.subr.mxu0 0.0
    %2008 = vmatpush2.msra.mxu0 0.0
    %2009 = vmatprep.subr.mxu0 0.0
    %2010 = vmatpush2.msra.mxu0 0.0
    %2011 = vmatprep.subr.mxu0 0.0
    %2012 = vmatpush2.msra.mxu0 0.0
    %2013 = vmatprep.subr.mxu0 0.0
    %2014 = vmatpush2.msra.mxu0 0.0
    %2015 = vmatprep.subr.mxu0 0.0
    %2016 = vmatpush2.msra.mxu0 0.0
    %2017 = vmatprep.subr.mxu0 0.0
    %2018 = vmatpush2.msra.mxu0 0.0
    %2019 = vmatprep.subr.mxu0 0.0
    %2020 = vmatpush2.msra.mxu0 0.0
    %2021 = vmatprep.subr.mxu0 0.0
    %2022 = vmatpush2.msra.mxu0 0.0
    %2023 = vmatprep.subr.mxu0 0.0
    %2024 = vmatpush2.msra.mxu0 0.0
    %2025 = vmatprep.subr.mxu0 0.0
    %2026 = vmatpush2.msra.mxu0 0.0
    %2027 = vmatprep.subr.mxu0 0.0
    %2028 = vmatpush2.msra.mxu0 0.0
    %2029 = vmatprep.mubr.f32.mxu0 0.0
    %2030 = vmatmul.mubr.f32.gmra.mxu0 %v1890
    %v2031 = vpop.f32.mrf.mxu0
    %v2032 = vadd.f32 0.0, %v2031
    %v2033 = vpop.f32.mrf.mxu0
    %2034 = vdwg.mxu0
    %v2035 = vadd.f32 %v1891, %v1961
    %v2036 = vxor.u32 %v2035, 2147483648
    %v2037 = vmul.f32 %v2036, 1.442695
    %v2038 = vpow.pop %v2037
    %v2039 = vadd.f32 %v2038, 1.0
    %v2040 = vrcp.pop %v2039
    %v2041 = vmul.f32 1.0, %v2040
    %v2042 = vadd.f32 %v1892, %v1963
    %v2043 = vxor.u32 %v2042, 2147483648
    %v2044 = vmul.f32 %v2043, 1.442695
    %v2045 = vpow.pop %v2044
    %v2046 = vadd.f32 %v2045, 1.0
    %v2047 = vrcp.pop %v2046
    %v2048 = vmul.f32 1.0, %v2047
    %v2049 = vmul.f32 %v2041, %v2032
    %v2050 = vadd.f32 %v1893, %v2049
    %v2051 = vtanh.pop %v2050
    %v2052 = vsub.f32 1.0, %v2048
    %v2053 = vmul.f32 %v2052, %v2051
    %v2054 = vmul.f32 %v2048, %v1890
    %v2055 = vadd.f32 %v2053, %v2054
    %v2056 = vld [vmem:[%s2] sm:$0xff]
    %v2057 = vld [vmem:[%s7] sm:$0xff]
    %v2058 = vld [vmem:[%s7 + $0x8] sm:$0xff]
    %v2059 = vld [vmem:[%s7 + $0x10] sm:$0xff]
    %v2060 = vld [vmem:[%s7 + $0x18] sm:$0xff]
    %v2061 = vld [vmem:[%s7 + $0x20] sm:$0xff]
    %v2062 = vld [vmem:[%s7 + $0x28] sm:$0xff]
    %v2063 = vld [vmem:[%s7 + $0x30] sm:$0xff]
    %v2064 = vld [vmem:[%s7 + $0x38] sm:$0xff]
    %v2065 = vld [vmem:[%s7 + $0x40] sm:$0xff]
    %v2066 = vld [vmem:[%s7 + $0x48] sm:$0xff]
    %v2067 = vld [vmem:[%s7 + $0x50] sm:$0xff]
    %v2068 = vld [vmem:[%s7 + $0x58] sm:$0xff]
    %v2069 = vld [vmem:[%s7 + $0x60] sm:$0xff]
    %v2070 = vld [vmem:[%s7 + $0x68] sm:$0xff]
    %v2071 = vld [vmem:[%s7 + $0x70] sm:$0xff]
    %v2072 = vld [vmem:[%s7 + $0x78] sm:$0xff]
    %v2073 = vunpack.c.l.bf16 %v2057
    %v2074 = vunpack.c.h.bf16 %v2057
    %v2075 = vunpack.c.l.bf16 %v2058
    %v2076 = vunpack.c.h.bf16 %v2058
    %v2077 = vunpack.c.l.bf16 %v2059
    %v2078 = vunpack.c.h.bf16 %v2059
    %v2079 = vunpack.c.l.bf16 %v2060
    %v2080 = vunpack.c.h.bf16 %v2060
    %v2081 = vunpack.c.l.bf16 %v2061
    %v2082 = vunpack.c.h.bf16 %v2061
    %v2083 = vunpack.c.l.bf16 %v2062
    %v2084 = vunpack.c.h.bf16 %v2062
    %v2085 = vunpack.c.l.bf16 %v2063
    %v2086 = vunpack.c.h.bf16 %v2063
    %v2087 = vunpack.c.l.bf16 %v2064
    %v2088 = vunpack.c.h.bf16 %v2064
    %v2089 = vunpack.c.l.bf16 %v2065
    %v2090 = vunpack.c.h.bf16 %v2065
    %v2091 = vunpack.c.l.bf16 %v2066
    %v2092 = vunpack.c.h.bf16 %v2066
    %v2093 = vunpack.c.l.bf16 %v2067
    %v2094 = vunpack.c.h.bf16 %v2067
    %v2095 = vunpack.c.l.bf16 %v2068
    %v2096 = vunpack.c.h.bf16 %v2068
    %v2097 = vunpack.c.l.bf16 %v2069
    %v2098 = vunpack.c.h.bf16 %v2069
    %v2099 = vunpack.c.l.bf16 %v2070
    %v2100 = vunpack.c.h.bf16 %v2070
    %v2101 = vunpack.c.l.bf16 %v2071
    %v2102 = vunpack.c.h.bf16 %v2071
    %v2103 = vunpack.c.l.bf16 %v2072
    %v2104 = vunpack.c.h.bf16 %v2072
    %v2105 = vld [vmem:[#allocation11] sm:$0xff]
    %v2106 = vld [vmem:[#allocation11 + $0x8] sm:$0xff]
    %v2107 = vld [vmem:[#allocation11 + $0x10] sm:$0xff]
    %v2108 = vld [vmem:[#allocation11 + $0x18] sm:$0xff]
    %v2109 = vld [vmem:[#allocation11 + $0x20] sm:$0xff]
    %v2110 = vld [vmem:[#allocation11 + $0x28] sm:$0xff]
    %v2111 = vld [vmem:[#allocation11 + $0x30] sm:$0xff]
    %v2112 = vld [vmem:[#allocation11 + $0x38] sm:$0xff]
    %v2113 = vld [vmem:[#allocation11 + $0x40] sm:$0xff]
    %v2114 = vld [vmem:[#allocation11 + $0x48] sm:$0xff]
    %v2115 = vld [vmem:[#allocation11 + $0x50] sm:$0xff]
    %v2116 = vld [vmem:[#allocation11 + $0x58] sm:$0xff]
    %v2117 = vld [vmem:[#allocation11 + $0x60] sm:$0xff]
    %v2118 = vld [vmem:[#allocation11 + $0x68] sm:$0xff]
    %v2119 = vld [vmem:[#allocation11 + $0x70] sm:$0xff]
    %v2120 = vld [vmem:[#allocation11 + $0x78] sm:$0xff]
    %v2121 = vld [vmem:[#allocation11 + $0x80] sm:$0xff]
    %v2122 = vld [vmem:[#allocation11 + $0x88] sm:$0xff]
    %v2123 = vld [vmem:[#allocation11 + $0x90] sm:$0xff]
    %v2124 = vld [vmem:[#allocation11 + $0x98] sm:$0xff]
    %v2125 = vld [vmem:[#allocation11 + $0xa0] sm:$0xff]
    %v2126 = vld [vmem:[#allocation11 + $0xa8] sm:$0xff]
    %v2127 = vld [vmem:[#allocation11 + $0xb0] sm:$0xff]
    %v2128 = vld [vmem:[#allocation11 + $0xb8] sm:$0xff]
    %v2129 = vld [vmem:[#allocation11 + $0xc0] sm:$0xff]
    %v2130 = vld [vmem:[#allocation11 + $0xc8] sm:$0xff]
    %v2131 = vld [vmem:[#allocation11 + $0xd0] sm:$0xff]
    %v2132 = vld [vmem:[#allocation11 + $0xd8] sm:$0xff]
    %v2133 = vld [vmem:[#allocation11 + $0xe0] sm:$0xff]
    %v2134 = vld [vmem:[#allocation11 + $0xe8] sm:$0xff]
    %v2135 = vld [vmem:[#allocation11 + $0xf0] sm:$0xff]
    %v2136 = vld [vmem:[#allocation11 + $0xf8] sm:$0xff]
    %v2137 = vld [vmem:[#allocation11 + $0x100] sm:$0xff]
    %v2138 = vld [vmem:[#allocation11 + $0x108] sm:$0xff]
    %v2139 = vld [vmem:[#allocation11 + $0x110] sm:$0xff]
    %v2140 = vld [vmem:[#allocation11 + $0x118] sm:$0xff]
    %v2141 = vld [vmem:[#allocation11 + $0x120] sm:$0xff]
    %v2142 = vld [vmem:[#allocation11 + $0x128] sm:$0xff]
    %v2143 = vld [vmem:[#allocation11 + $0x130] sm:$0xff]
    %v2144 = vld [vmem:[#allocation11 + $0x138] sm:$0xff]
    %v2145 = vld [vmem:[#allocation11 + $0x140] sm:$0xff]
    %v2146 = vld [vmem:[#allocation11 + $0x148] sm:$0xff]
    %v2147 = vld [vmem:[#allocation11 + $0x150] sm:$0xff]
    %v2148 = vld [vmem:[#allocation11 + $0x158] sm:$0xff]
    %v2149 = vld [vmem:[#allocation11 + $0x160] sm:$0xff]
    %v2150 = vld [vmem:[#allocation11 + $0x168] sm:$0xff]
    %v2151 = vld [vmem:[#allocation11 + $0x170] sm:$0xff]
    %v2152 = vld [vmem:[#allocation11 + $0x178] sm:$0xff]
    %v2153 = vld [vmem:[#allocation11 + $0x180] sm:$0xff]
    %v2154 = vld [vmem:[#allocation11 + $0x188] sm:$0xff]
    %v2155 = vld [vmem:[#allocation11 + $0x190] sm:$0xff]
    %v2156 = vld [vmem:[#allocation11 + $0x198] sm:$0xff]
    %v2157 = vld [vmem:[#allocation11 + $0x1a0] sm:$0xff]
    %v2158 = vld [vmem:[#allocation11 + $0x1a8] sm:$0xff]
    %v2159 = vld [vmem:[#allocation11 + $0x1b0] sm:$0xff]
    %v2160 = vld [vmem:[#allocation11 + $0x1b8] sm:$0xff]
    %v2161 = vld [vmem:[#allocation11 + $0x1c0] sm:$0xff]
    %v2162 = vld [vmem:[#allocation11 + $0x1c8] sm:$0xff]
    %v2163 = vld [vmem:[#allocation11 + $0x1d0] sm:$0xff]
    %v2164 = vld [vmem:[#allocation11 + $0x1d8] sm:$0xff]
    %v2165 = vld [vmem:[#allocation11 + $0x1e0] sm:$0xff]
    %v2166 = vld [vmem:[#allocation11 + $0x1e8] sm:$0xff]
    %v2167 = vld [vmem:[#allocation11 + $0x1f0] sm:$0xff]
    %v2168 = vld [vmem:[#allocation11 + $0x1f8] sm:$0xff]
    %v2169 = vunpack.c.l.bf16 %v2105
    %v2170 = vunpack.c.h.bf16 %v2105
    %v2171 = vunpack.c.l.bf16 %v2106
    %v2172 = vunpack.c.h.bf16 %v2106
    %v2173 = vunpack.c.l.bf16 %v2107
    %v2174 = vunpack.c.h.bf16 %v2107
    %v2175 = vunpack.c.l.bf16 %v2108
    %v2176 = vunpack.c.h.bf16 %v2108
    %v2177 = vunpack.c.l.bf16 %v2109
    %v2178 = vunpack.c.h.bf16 %v2109
    %v2179 = vunpack.c.l.bf16 %v2110
    %v2180 = vunpack.c.h.bf16 %v2110
    %v2181 = vunpack.c.l.bf16 %v2111
    %v2182 = vunpack.c.h.bf16 %v2111
    %v2183 = vunpack.c.l.bf16 %v2112
    %v2184 = vunpack.c.h.bf16 %v2112
    %v2185 = vunpack.c.l.bf16 %v2113
    %v2186 = vunpack.c.h.bf16 %v2113
    %v2187 = vunpack.c.l.bf16 %v2114
    %v2188 = vunpack.c.h.bf16 %v2114
    %v2189 = vunpack.c.l.bf16 %v2115
    %v2190 = vunpack.c.h.bf16 %v2115
    %v2191 = vunpack.c.l.bf16 %v2116
    %v2192 = vunpack.c.h.bf16 %v2116
    %v2193 = vunpack.c.l.bf16 %v2117
    %v2194 = vunpack.c.h.bf16 %v2117
    %v2195 = vunpack.c.l.bf16 %v2118
    %v2196 = vunpack.c.h.bf16 %v2118
    %v2197 = vunpack.c.l.bf16 %v2119
    %v2198 = vunpack.c.h.bf16 %v2119
    %v2199 = vunpack.c.l.bf16 %v2120
    %v2200 = vunpack.c.h.bf16 %v2120
    %v2201 = vunpack.c.l.bf16 %v2121
    %v2202 = vunpack.c.h.bf16 %v2121
    %v2203 = vunpack.c.l.bf16 %v2122
    %v2204 = vunpack.c.h.bf16 %v2122
    %v2205 = vunpack.c.l.bf16 %v2123
    %v2206 = vunpack.c.h.bf16 %v2123
    %v2207 = vunpack.c.l.bf16 %v2124
    %v2208 = vunpack.c.h.bf16 %v2124
    %v2209 = vunpack.c.l.bf16 %v2125
    %v2210 = vunpack.c.h.bf16 %v2125
    %v2211 = vunpack.c.l.bf16 %v2126
    %v2212 = vunpack.c.h.bf16 %v2126
    %v2213 = vunpack.c.l.bf16 %v2127
    %v2214 = vunpack.c.h.bf16 %v2127
    %v2215 = vunpack.c.l.bf16 %v2128
    %v2216 = vunpack.c.h.bf16 %v2128
    %v2217 = vunpack.c.l.bf16 %v2129
    %v2218 = vunpack.c.h.bf16 %v2129
    %v2219 = vunpack.c.l.bf16 %v2130
    %v2220 = vunpack.c.h.bf16 %v2130
    %v2221 = vunpack.c.l.bf16 %v2131
    %v2222 = vunpack.c.h.bf16 %v2131
    %v2223 = vunpack.c.l.bf16 %v2132
    %v2224 = vunpack.c.h.bf16 %v2132
    %v2225 = vunpack.c.l.bf16 %v2133
    %v2226 = vunpack.c.h.bf16 %v2133
    %v2227 = vunpack.c.l.bf16 %v2134
    %v2228 = vunpack.c.h.bf16 %v2134
    %v2229 = vunpack.c.l.bf16 %v2135
    %v2230 = vunpack.c.h.bf16 %v2135
    %v2231 = vunpack.c.l.bf16 %v2136
    %v2232 = vunpack.c.h.bf16 %v2136
    %v2233 = vunpack.c.l.bf16 %v2137
    %v2234 = vunpack.c.h.bf16 %v2137
    %v2235 = vunpack.c.l.bf16 %v2138
    %v2236 = vunpack.c.h.bf16 %v2138
    %v2237 = vunpack.c.l.bf16 %v2139
    %v2238 = vunpack.c.h.bf16 %v2139
    %v2239 = vunpack.c.l.bf16 %v2140
    %v2240 = vunpack.c.h.bf16 %v2140
    %v2241 = vunpack.c.l.bf16 %v2141
    %v2242 = vunpack.c.h.bf16 %v2141
    %v2243 = vunpack.c.l.bf16 %v2142
    %v2244 = vunpack.c.h.bf16 %v2142
    %v2245 = vunpack.c.l.bf16 %v2143
    %v2246 = vunpack.c.h.bf16 %v2143
    %v2247 = vunpack.c.l.bf16 %v2144
    %v2248 = vunpack.c.h.bf16 %v2144
    %v2249 = vunpack.c.l.bf16 %v2145
    %v2250 = vunpack.c.h.bf16 %v2145
    %v2251 = vunpack.c.l.bf16 %v2146
    %v2252 = vunpack.c.h.bf16 %v2146
    %v2253 = vunpack.c.l.bf16 %v2147
    %v2254 = vunpack.c.h.bf16 %v2147
    %v2255 = vunpack.c.l.bf16 %v2148
    %v2256 = vunpack.c.h.bf16 %v2148
    %v2257 = vunpack.c.l.bf16 %v2149
    %v2258 = vunpack.c.h.bf16 %v2149
    %v2259 = vunpack.c.l.bf16 %v2150
    %v2260 = vunpack.c.h.bf16 %v2150
    %v2261 = vunpack.c.l.bf16 %v2151
    %v2262 = vunpack.c.h.bf16 %v2151
    %v2263 = vunpack.c.l.bf16 %v2152
    %v2264 = vunpack.c.h.bf16 %v2152
    %v2265 = vunpack.c.l.bf16 %v2153
    %v2266 = vunpack.c.h.bf16 %v2153
    %v2267 = vunpack.c.l.bf16 %v2154
    %v2268 = vunpack.c.h.bf16 %v2154
    %v2269 = vunpack.c.l.bf16 %v2155
    %v2270 = vunpack.c.h.bf16 %v2155
    %v2271 = vunpack.c.l.bf16 %v2156
    %v2272 = vunpack.c.h.bf16 %v2156
    %v2273 = vunpack.c.l.bf16 %v2157
    %v2274 = vunpack.c.h.bf16 %v2157
    %v2275 = vunpack.c.l.bf16 %v2158
    %v2276 = vunpack.c.h.bf16 %v2158
    %v2277 = vunpack.c.l.bf16 %v2159
    %v2278 = vunpack.c.h.bf16 %v2159
    %v2279 = vunpack.c.l.bf16 %v2160
    %v2280 = vunpack.c.h.bf16 %v2160
    %v2281 = vunpack.c.l.bf16 %v2161
    %v2282 = vunpack.c.h.bf16 %v2161
    %v2283 = vunpack.c.l.bf16 %v2162
    %v2284 = vunpack.c.h.bf16 %v2162
    %v2285 = vunpack.c.l.bf16 %v2163
    %v2286 = vunpack.c.h.bf16 %v2163
    %v2287 = vunpack.c.l.bf16 %v2164
    %v2288 = vunpack.c.h.bf16 %v2164
    %v2289 = vunpack.c.l.bf16 %v2165
    %v2290 = vunpack.c.h.bf16 %v2165
    %v2291 = vunpack.c.l.bf16 %v2166
    %v2292 = vunpack.c.h.bf16 %v2166
    %v2293 = vunpack.c.l.bf16 %v2167
    %v2294 = vunpack.c.h.bf16 %v2167
    %v2295 = vunpack.c.l.bf16 %v2168
    %v2296 = vunpack.c.h.bf16 %v2168
    %2297 = vmatprep.subr.mxu0 %v2290
    %2298 = vmatpush1.msra.mxu0 %v2289
    %2299 = vmatprep.subr.mxu0 %v2282
    %2300 = vmatpush1.msra.mxu0 %v2281
    %2301 = vmatprep.subr.mxu0 %v2274
    %2302 = vmatpush1.msra.mxu0 %v2273
    %2303 = vmatprep.subr.mxu0 %v2266
    %2304 = vmatpush1.msra.mxu0 %v2265
    %2305 = vmatprep.subr.mxu0 %v2258
    %2306 = vmatpush1.msra.mxu0 %v2257
    %2307 = vmatprep.subr.mxu0 %v2250
    %2308 = vmatpush1.msra.mxu0 %v2249
    %2309 = vmatprep.subr.mxu0 %v2242
    %2310 = vmatpush1.msra.mxu0 %v2241
    %2311 = vmatprep.subr.mxu0 %v2234
    %2312 = vmatpush1.msra.mxu0 %v2233
    %2313 = vmatprep.subr.mxu0 %v2226
    %2314 = vmatpush1.msra.mxu0 %v2225
    %2315 = vmatprep.subr.mxu0 %v2218
    %2316 = vmatpush1.msra.mxu0 %v2217
    %2317 = vmatprep.subr.mxu0 %v2210
    %2318 = vmatpush1.msra.mxu0 %v2209
    %2319 = vmatprep.subr.mxu0 %v2202
    %2320 = vmatpush1.msra.mxu0 %v2201
    %2321 = vmatprep.subr.mxu0 %v2194
    %2322 = vmatpush1.msra.mxu0 %v2193
    %2323 = vmatprep.subr.mxu0 %v2186
    %2324 = vmatpush1.msra.mxu0 %v2185
    %2325 = vmatprep.subr.mxu0 %v2178
    %2326 = vmatpush1.msra.mxu0 %v2177
    %2327 = vmatprep.subr.mxu0 %v2170
    %2328 = vmatpush1.msra.mxu0 %v2169
    %2329 = vmatprep.subr.mxu0 0.0
    %2330 = vmatpush2.msra.mxu0 0.0
    %2331 = vmatprep.subr.mxu0 0.0
    %2332 = vmatpush2.msra.mxu0 0.0
    %2333 = vmatprep.subr.mxu0 0.0
    %2334 = vmatpush2.msra.mxu0 0.0
    %2335 = vmatprep.subr.mxu0 0.0
    %2336 = vmatpush2.msra.mxu0 0.0
    %2337 = vmatprep.subr.mxu0 0.0
    %2338 = vmatpush2.msra.mxu0 0.0
    %2339 = vmatprep.subr.mxu0 0.0
    %2340 = vmatpush2.msra.mxu0 0.0
    %2341 = vmatprep.subr.mxu0 0.0
    %2342 = vmatpush2.msra.mxu0 0.0
    %2343 = vmatprep.subr.mxu0 0.0
    %2344 = vmatpush2.msra.mxu0 0.0
    %2345 = vmatprep.subr.mxu0 0.0
    %2346 = vmatpush2.msra.mxu0 0.0
    %2347 = vmatprep.subr.mxu0 0.0
    %2348 = vmatpush2.msra.mxu0 0.0
    %2349 = vmatprep.subr.mxu0 0.0
    %2350 = vmatpush2.msra.mxu0 0.0
    %2351 = vmatprep.subr.mxu0 0.0
    %2352 = vmatpush2.msra.mxu0 0.0
    %2353 = vmatprep.subr.mxu0 0.0
    %2354 = vmatpush2.msra.mxu0 0.0
    %2355 = vmatprep.subr.mxu0 0.0
    %2356 = vmatpush2.msra.mxu0 0.0
    %2357 = vmatprep.subr.mxu0 0.0
    %2358 = vmatpush2.msra.mxu0 0.0
    %2359 = vmatprep.subr.mxu0 0.0
    %2360 = vmatpush2.msra.mxu0 0.0
    %2361 = vmatprep.mubr.f32.mxu0 0.0
    %2362 = vmatmul.mubr.f32.gmra.mxu0 %v2055
    %v2363 = vpop.f32.mrf.mxu0
    %v2364 = vadd.f32 0.0, %v2363
    %v2365 = vpop.f32.mrf.mxu0
    %v2366 = vadd.f32 0.0, %v2365
    %2367 = vdwg.mxu0
    %2368 = vmatprep.subr.mxu0 %v2292
    %2369 = vmatpush1.msra.mxu0 %v2291
    %2370 = vmatprep.subr.mxu0 %v2284
    %2371 = vmatpush1.msra.mxu0 %v2283
    %2372 = vmatprep.subr.mxu0 %v2276
    %2373 = vmatpush1.msra.mxu0 %v2275
    %2374 = vmatprep.subr.mxu0 %v2268
    %2375 = vmatpush1.msra.mxu0 %v2267
    %2376 = vmatprep.subr.mxu0 %v2260
    %2377 = vmatpush1.msra.mxu0 %v2259
    %2378 = vmatprep.subr.mxu0 %v2252
    %2379 = vmatpush1.msra.mxu0 %v2251
    %2380 = vmatprep.subr.mxu0 %v2244
    %2381 = vmatpush1.msra.mxu0 %v2243
    %2382 = vmatprep.subr.mxu0 %v2236
    %2383 = vmatpush1.msra.mxu0 %v2235
    %2384 = vmatprep.subr.mxu0 %v2228
    %2385 = vmatpush1.msra.mxu0 %v2227
    %2386 = vmatprep.subr.mxu0 %v2220
    %2387 = vmatpush1.msra.mxu0 %v2219
    %2388 = vmatprep.subr.mxu0 %v2212
    %2389 = vmatpush1.msra.mxu0 %v2211
    %2390 = vmatprep.subr.mxu0 %v2204
    %2391 = vmatpush1.msra.mxu0 %v2203
    %2392 = vmatprep.subr.mxu0 %v2196
    %2393 = vmatpush1.msra.mxu0 %v2195
    %2394 = vmatprep.subr.mxu0 %v2188
    %2395 = vmatpush1.msra.mxu0 %v2187
    %2396 = vmatprep.subr.mxu0 %v2180
    %2397 = vmatpush1.msra.mxu0 %v2179
    %2398 = vmatprep.subr.mxu0 %v2172
    %2399 = vmatpush1.msra.mxu0 %v2171
    %2400 = vmatprep.subr.mxu0 0.0
    %2401 = vmatpush2.msra.mxu0 0.0
    %2402 = vmatprep.subr.mxu0 0.0
    %2403 = vmatpush2.msra.mxu0 0.0
    %2404 = vmatprep.subr.mxu0 0.0
    %2405 = vmatpush2.msra.mxu0 0.0
    %2406 = vmatprep.subr.mxu0 0.0
    %2407 = vmatpush2.msra.mxu0 0.0
    %2408 = vmatprep.subr.mxu0 0.0
    %2409 = vmatpush2.msra.mxu0 0.0
    %2410 = vmatprep.subr.mxu0 0.0
    %2411 = vmatpush2.msra.mxu0 0.0
    %2412 = vmatprep.subr.mxu0 0.0
    %2413 = vmatpush2.msra.mxu0 0.0
    %2414 = vmatprep.subr.mxu0 0.0
    %2415 = vmatpush2.msra.mxu0 0.0
    %2416 = vmatprep.subr.mxu0 0.0
    %2417 = vmatpush2.msra.mxu0 0.0
    %2418 = vmatprep.subr.mxu0 0.0
    %2419 = vmatpush2.msra.mxu0 0.0
    %2420 = vmatprep.subr.mxu0 0.0
    %2421 = vmatpush2.msra.mxu0 0.0
    %2422 = vmatprep.subr.mxu0 0.0
    %2423 = vmatpush2.msra.mxu0 0.0
    %2424 = vmatprep.subr.mxu0 0.0
    %2425 = vmatpush2.msra.mxu0 0.0
    %2426 = vmatprep.subr.mxu0 0.0
    %2427 = vmatpush2.msra.mxu0 0.0
    %2428 = vmatprep.subr.mxu0 0.0
    %2429 = vmatpush2.msra.mxu0 0.0
    %2430 = vmatprep.subr.mxu0 0.0
    %2431 = vmatpush2.msra.mxu0 0.0
    %2432 = vmatprep.mubr.f32.mxu0 0.0
    %2433 = vmatmul.mubr.f32.gmra.mxu0 %v2055
    %v2434 = vpop.f32.mrf.mxu0
    %v2435 = vadd.f32 0.0, %v2434
    %v2436 = vpop.f32.mrf.mxu0
    %v2437 = vadd.f32 0.0, %v2436
    %2438 = vdwg.mxu0
    %2439 = vmatprep.subr.mxu0 %v2294
    %2440 = vmatpush1.msra.mxu0 %v2293
    %2441 = vmatprep.subr.mxu0 %v2286
    %2442 = vmatpush1.msra.mxu0 %v2285
    %2443 = vmatprep.subr.mxu0 %v2278
    %2444 = vmatpush1.msra.mxu0 %v2277
    %2445 = vmatprep.subr.mxu0 %v2270
    %2446 = vmatpush1.msra.mxu0 %v2269
    %2447 = vmatprep.subr.mxu0 %v2262
    %2448 = vmatpush1.msra.mxu0 %v2261
    %2449 = vmatprep.subr.mxu0 %v2254
    %2450 = vmatpush1.msra.mxu0 %v2253
    %2451 = vmatprep.subr.mxu0 %v2246
    %2452 = vmatpush1.msra.mxu0 %v2245
    %2453 = vmatprep.subr.mxu0 %v2238
    %2454 = vmatpush1.msra.mxu0 %v2237
    %2455 = vmatprep.subr.mxu0 %v2230
    %2456 = vmatpush1.msra.mxu0 %v2229
    %2457 = vmatprep.subr.mxu0 %v2222
    %2458 = vmatpush1.msra.mxu0 %v2221
    %2459 = vmatprep.subr.mxu0 %v2214
    %2460 = vmatpush1.msra.mxu0 %v2213
    %2461 = vmatprep.subr.mxu0 %v2206
    %2462 = vmatpush1.msra.mxu0 %v2205
    %2463 = vmatprep.subr.mxu0 %v2198
    %2464 = vmatpush1.msra.mxu0 %v2197
    %2465 = vmatprep.subr.mxu0 %v2190
    %2466 = vmatpush1.msra.mxu0 %v2189
    %2467 = vmatprep.subr.mxu0 %v2182
    %2468 = vmatpush1.msra.mxu0 %v2181
    %2469 = vmatprep.subr.mxu0 %v2174
    %2470 = vmatpush1.msra.mxu0 %v2173
    %2471 = vmatprep.subr.mxu0 0.0
    %2472 = vmatpush2.msra.mxu0 0.0
    %2473 = vmatprep.subr.mxu0 0.0
    %2474 = vmatpush2.msra.mxu0 0.0
    %2475 = vmatprep.subr.mxu0 0.0
    %2476 = vmatpush2.msra.mxu0 0.0
    %2477 = vmatprep.subr.mxu0 0.0
    %2478 = vmatpush2.msra.mxu0 0.0
    %2479 = vmatprep.subr.mxu0 0.0
    %2480 = vmatpush2.msra.mxu0 0.0
    %2481 = vmatprep.subr.mxu0 0.0
    %2482 = vmatpush2.msra.mxu0 0.0
    %2483 = vmatprep.subr.mxu0 0.0
    %2484 = vmatpush2.msra.mxu0 0.0
    %2485 = vmatprep.subr.mxu0 0.0
    %2486 = vmatpush2.msra.mxu0 0.0
    %2487 = vmatprep.subr.mxu0 0.0
    %2488 = vmatpush2.msra.mxu0 0.0
    %2489 = vmatprep.subr.mxu0 0.0
    %2490 = vmatpush2.msra.mxu0 0.0
    %2491 = vmatprep.subr.mxu0 0.0
    %2492 = vmatpush2.msra.mxu0 0.0
    %2493 = vmatprep.subr.mxu0 0.0
    %2494 = vmatpush2.msra.mxu0 0.0
    %2495 = vmatprep.subr.mxu0 0.0
    %2496 = vmatpush2.msra.mxu0 0.0
    %2497 = vmatprep.subr.mxu0 0.0
    %2498 = vmatpush2.msra.mxu0 0.0
    %2499 = vmatprep.subr.mxu0 0.0
    %2500 = vmatpush2.msra.mxu0 0.0
    %2501 = vmatprep.subr.mxu0 0.0
    %2502 = vmatpush2.msra.mxu0 0.0
    %2503 = vmatprep.mubr.f32.mxu0 0.0
    %2504 = vmatmul.mubr.f32.gmra.mxu0 %v2055
    %v2505 = vpop.f32.mrf.mxu0
    %v2506 = vadd.f32 0.0, %v2505
    %v2507 = vpop.f32.mrf.mxu0
    %v2508 = vadd.f32 0.0, %v2507
    %2509 = vdwg.mxu0
    %2510 = vmatprep.subr.mxu0 %v2296
    %2511 = vmatpush1.msra.mxu0 %v2295
    %2512 = vmatprep.subr.mxu0 %v2288
    %2513 = vmatpush1.msra.mxu0 %v2287
    %2514 = vmatprep.subr.mxu0 %v2280
    %2515 = vmatpush1.msra.mxu0 %v2279
    %2516 = vmatprep.subr.mxu0 %v2272
    %2517 = vmatpush1.msra.mxu0 %v2271
    %2518 = vmatprep.subr.mxu0 %v2264
    %2519 = vmatpush1.msra.mxu0 %v2263
    %2520 = vmatprep.subr.mxu0 %v2256
    %2521 = vmatpush1.msra.mxu0 %v2255
    %2522 = vmatprep.subr.mxu0 %v2248
    %2523 = vmatpush1.msra.mxu0 %v2247
    %2524 = vmatprep.subr.mxu0 %v2240
    %2525 = vmatpush1.msra.mxu0 %v2239
    %2526 = vmatprep.subr.mxu0 %v2232
    %2527 = vmatpush1.msra.mxu0 %v2231
    %2528 = vmatprep.subr.mxu0 %v2224
    %2529 = vmatpush1.msra.mxu0 %v2223
    %2530 = vmatprep.subr.mxu0 %v2216
    %2531 = vmatpush1.msra.mxu0 %v2215
    %2532 = vmatprep.subr.mxu0 %v2208
    %2533 = vmatpush1.msra.mxu0 %v2207
    %2534 = vmatprep.subr.mxu0 %v2200
    %2535 = vmatpush1.msra.mxu0 %v2199
    %2536 = vmatprep.subr.mxu0 %v2192
    %2537 = vmatpush1.msra.mxu0 %v2191
    %2538 = vmatprep.subr.mxu0 %v2184
    %2539 = vmatpush1.msra.mxu0 %v2183
    %2540 = vmatprep.subr.mxu0 %v2176
    %2541 = vmatpush1.msra.mxu0 %v2175
    %2542 = vmatprep.subr.mxu0 0.0
    %2543 = vmatpush2.msra.mxu0 0.0
    %2544 = vmatprep.subr.mxu0 0.0
    %2545 = vmatpush2.msra.mxu0 0.0
    %2546 = vmatprep.subr.mxu0 0.0
    %2547 = vmatpush2.msra.mxu0 0.0
    %2548 = vmatprep.subr.mxu0 0.0
    %2549 = vmatpush2.msra.mxu0 0.0
    %2550 = vmatprep.subr.mxu0 0.0
    %2551 = vmatpush2.msra.mxu0 0.0
    %2552 = vmatprep.subr.mxu0 0.0
    %2553 = vmatpush2.msra.mxu0 0.0
    %2554 = vmatprep.subr.mxu0 0.0
    %2555 = vmatpush2.msra.mxu0 0.0
    %2556 = vmatprep.subr.mxu0 0.0
    %2557 = vmatpush2.msra.mxu0 0.0
    %2558 = vmatprep.subr.mxu0 0.0
    %2559 = vmatpush2.msra.mxu0 0.0
    %2560 = vmatprep.subr.mxu0 0.0
    %2561 = vmatpush2.msra.mxu0 0.0
    %2562 = vmatprep.subr.mxu0 0.0
    %2563 = vmatpush2.msra.mxu0 0.0
    %2564 = vmatprep.subr.mxu0 0.0
    %2565 = vmatpush2.msra.mxu0 0.0
    %2566 = vmatprep.subr.mxu0 0.0
    %2567 = vmatpush2.msra.mxu0 0.0
    %2568 = vmatprep.subr.mxu0 0.0
    %2569 = vmatpush2.msra.mxu0 0.0
    %2570 = vmatprep.subr.mxu0 0.0
    %2571 = vmatpush2.msra.mxu0 0.0
    %2572 = vmatprep.subr.mxu0 0.0
    %2573 = vmatpush2.msra.mxu0 0.0
    %2574 = vmatprep.mubr.f32.mxu0 0.0
    %2575 = vmatmul.mubr.f32.gmra.mxu0 %v2055
    %v2576 = vpop.f32.mrf.mxu0
    %v2577 = vadd.f32 0.0, %v2576
    %v2578 = vpop.f32.mrf.mxu0
    %v2579 = vadd.f32 0.0, %v2578
    %2580 = vdwg.mxu0
    %vm2581 = vcmask 261120
    %v2583 = vsel %vm2581, %v2056, 0
    %2585 = vmatprep.subr.mxu0 0.0
    %2586 = vmatpush1.msra.mxu0 0.0
    %2587 = vmatprep.subr.mxu0 0.0
    %2588 = vmatpush1.msra.mxu0 0.0
    %2589 = vmatprep.subr.mxu0 0.0
    %2590 = vmatpush1.msra.mxu0 0.0
    %2591 = vmatprep.subr.mxu0 0.0
    %2592 = vmatpush1.msra.mxu0 0.0
    %2593 = vmatprep.subr.mxu0 0.0
    %2594 = vmatpush1.msra.mxu0 0.0
    %2595 = vmatprep.subr.mxu0 0.0
    %2596 = vmatpush1.msra.mxu0 0.0
    %2597 = vmatprep.subr.mxu0 0.0
    %2598 = vmatpush1.msra.mxu0 0.0
    %2599 = vmatprep.subr.mxu0 0.0
    %2600 = vmatpush1.msra.mxu0 0.0
    %2601 = vmatprep.subr.mxu0 0.0
    %2602 = vmatpush1.msra.mxu0 0.0
    %2603 = vmatprep.subr.mxu0 0.0
    %2604 = vmatpush1.msra.mxu0 0.0
    %2605 = vmatprep.subr.mxu0 0.0
    %2606 = vmatpush1.msra.mxu0 0.0
    %2607 = vmatprep.subr.mxu0 0.0
    %2608 = vmatpush1.msra.mxu0 0.0
    %2609 = vmatprep.subr.mxu0 %v2098
    %2610 = vmatpush1.msra.mxu0 %v2097
    %2611 = vmatprep.subr.mxu0 %v2090
    %2612 = vmatpush1.msra.mxu0 %v2089
    %2613 = vmatprep.subr.mxu0 %v2082
    %2614 = vmatpush1.msra.mxu0 %v2081
    %2615 = vmatprep.subr.mxu0 %v2074
    %2616 = vmatpush1.msra.mxu0 %v2073
    %2617 = vmatprep.subr.mxu0 0.0
    %2618 = vmatpush2.msra.mxu0 0.0
    %2619 = vmatprep.subr.mxu0 0.0
    %2620 = vmatpush2.msra.mxu0 0.0
    %2621 = vmatprep.subr.mxu0 0.0
    %2622 = vmatpush2.msra.mxu0 0.0
    %2623 = vmatprep.subr.mxu0 0.0
    %2624 = vmatpush2.msra.mxu0 0.0
    %2625 = vmatprep.subr.mxu0 0.0
    %2626 = vmatpush2.msra.mxu0 0.0
    %2627 = vmatprep.subr.mxu0 0.0
    %2628 = vmatpush2.msra.mxu0 0.0
    %2629 = vmatprep.subr.mxu0 0.0
    %2630 = vmatpush2.msra.mxu0 0.0
    %2631 = vmatprep.subr.mxu0 0.0
    %2632 = vmatpush2.msra.mxu0 0.0
    %2633 = vmatprep.subr.mxu0 0.0
    %2634 = vmatpush2.msra.mxu0 0.0
    %2635 = vmatprep.subr.mxu0 0.0
    %2636 = vmatpush2.msra.mxu0 0.0
    %2637 = vmatprep.subr.mxu0 0.0
    %2638 = vmatpush2.msra.mxu0 0.0
    %2639 = vmatprep.subr.mxu0 0.0
    %2640 = vmatpush2.msra.mxu0 0.0
    %2641 = vmatprep.subr.mxu0 0.0
    %2642 = vmatpush2.msra.mxu0 0.0
    %2643 = vmatprep.subr.mxu0 0.0
    %2644 = vmatpush2.msra.mxu0 0.0
    %2645 = vmatprep.subr.mxu0 0.0
    %2646 = vmatpush2.msra.mxu0 0.0
    %2647 = vmatprep.subr.mxu0 0.0
    %2648 = vmatpush2.msra.mxu0 0.0
    %2649 = vmatprep.mubr.f32.mxu0 0.0
    %2650 = vmatmul.mubr.f32.gmra.mxu0 %v2583
    %v2651 = vpop.f32.mrf.mxu0
    %v2652 = vadd.f32 %v2364, %v2651
    %v2653 = vpop.f32.mrf.mxu0
    %v2654 = vadd.f32 %v2366, %v2653
    %2655 = vdwg.mxu0
    %2656 = vmatprep.subr.mxu0 0.0
    %2657 = vmatpush1.msra.mxu0 0.0
    %2658 = vmatprep.subr.mxu0 0.0
    %2659 = vmatpush1.msra.mxu0 0.0
    %2660 = vmatprep.subr.mxu0 0.0
    %2661 = vmatpush1.msra.mxu0 0.0
    %2662 = vmatprep.subr.mxu0 0.0
    %2663 = vmatpush1.msra.mxu0 0.0
    %2664 = vmatprep.subr.mxu0 0.0
    %2665 = vmatpush1.msra.mxu0 0.0
    %2666 = vmatprep.subr.mxu0 0.0
    %2667 = vmatpush1.msra.mxu0 0.0
    %2668 = vmatprep.subr.mxu0 0.0
    %2669 = vmatpush1.msra.mxu0 0.0
    %2670 = vmatprep.subr.mxu0 0.0
    %2671 = vmatpush1.msra.mxu0 0.0
    %2672 = vmatprep.subr.mxu0 0.0
    %2673 = vmatpush1.msra.mxu0 0.0
    %2674 = vmatprep.subr.mxu0 0.0
    %2675 = vmatpush1.msra.mxu0 0.0
    %2676 = vmatprep.subr.mxu0 0.0
    %2677 = vmatpush1.msra.mxu0 0.0
    %2678 = vmatprep.subr.mxu0 0.0
    %2679 = vmatpush1.msra.mxu0 0.0
    %2680 = vmatprep.subr.mxu0 %v2100
    %2681 = vmatpush1.msra.mxu0 %v2099
    %2682 = vmatprep.subr.mxu0 %v2092
    %2683 = vmatpush1.msra.mxu0 %v2091
    %2684 = vmatprep.subr.mxu0 %v2084
    %2685 = vmatpush1.msra.mxu0 %v2083
    %2686 = vmatprep.subr.mxu0 %v2076
    %2687 = vmatpush1.msra.mxu0 %v2075
    %2688 = vmatprep.subr.mxu0 0.0
    %2689 = vmatpush2.msra.mxu0 0.0
    %2690 = vmatprep.subr.mxu0 0.0
    %2691 = vmatpush2.msra.mxu0 0.0
    %2692 = vmatprep.subr.mxu0 0.0
    %2693 = vmatpush2.msra.mxu0 0.0
    %2694 = vmatprep.subr.mxu0 0.0
    %2695 = vmatpush2.msra.mxu0 0.0
    %2696 = vmatprep.subr.mxu0 0.0
    %2697 = vmatpush2.msra.mxu0 0.0
    %2698 = vmatprep.subr.mxu0 0.0
    %2699 = vmatpush2.msra.mxu0 0.0
    %2700 = vmatprep.subr.mxu0 0.0
    %2701 = vmatpush2.msra.mxu0 0.0
    %2702 = vmatprep.subr.mxu0 0.0
    %2703 = vmatpush2.msra.mxu0 0.0
    %2704 = vmatprep.subr.mxu0 0.0
    %2705 = vmatpush2.msra.mxu0 0.0
    %2706 = vmatprep.subr.mxu0 0.0
    %2707 = vmatpush2.msra.mxu0 0.0
    %2708 = vmatprep.subr.mxu0 0.0
    %2709 = vmatpush2.msra.mxu0 0.0
    %2710 = vmatprep.subr.mxu0 0.0
    %2711 = vmatpush2.msra.mxu0 0.0
    %2712 = vmatprep.subr.mxu0 0.0
    %2713 = vmatpush2.msra.mxu0 0.0
    %2714 = vmatprep.subr.mxu0 0.0
    %2715 = vmatpush2.msra.mxu0 0.0
    %2716 = vmatprep.subr.mxu0 0.0
    %2717 = vmatpush2.msra.mxu0 0.0
    %2718 = vmatprep.subr.mxu0 0.0
    %2719 = vmatpush2.msra.mxu0 0.0
    %2720 = vmatprep.mubr.f32.mxu0 0.0
    %2721 = vmatmul.mubr.f32.gmra.mxu0 %v2583
    %v2722 = vpop.f32.mrf.mxu0
    %v2723 = vadd.f32 %v2435, %v2722
    %v2724 = vpop.f32.mrf.mxu0
    %v2725 = vadd.f32 %v2437, %v2724
    %2726 = vdwg.mxu0
    %2727 = vmatprep.subr.mxu0 0.0
    %2728 = vmatpush1.msra.mxu0 0.0
    %2729 = vmatprep.subr.mxu0 0.0
    %2730 = vmatpush1.msra.mxu0 0.0
    %2731 = vmatprep.subr.mxu0 0.0
    %2732 = vmatpush1.msra.mxu0 0.0
    %2733 = vmatprep.subr.mxu0 0.0
    %2734 = vmatpush1.msra.mxu0 0.0
    %2735 = vmatprep.subr.mxu0 0.0
    %2736 = vmatpush1.msra.mxu0 0.0
    %2737 = vmatprep.subr.mxu0 0.0
    %2738 = vmatpush1.msra.mxu0 0.0
    %2739 = vmatprep.subr.mxu0 0.0
    %2740 = vmatpush1.msra.mxu0 0.0
    %2741 = vmatprep.subr.mxu0 0.0
    %2742 = vmatpush1.msra.mxu0 0.0
    %2743 = vmatprep.subr.mxu0 0.0
    %2744 = vmatpush1.msra.mxu0 0.0
    %2745 = vmatprep.subr.mxu0 0.0
    %2746 = vmatpush1.msra.mxu0 0.0
    %2747 = vmatprep.subr.mxu0 0.0
    %2748 = vmatpush1.msra.mxu0 0.0
    %2749 = vmatprep.subr.mxu0 0.0
    %2750 = vmatpush1.msra.mxu0 0.0
    %2751 = vmatprep.subr.mxu0 %v2102
    %2752 = vmatpush1.msra.mxu0 %v2101
    %2753 = vmatprep.subr.mxu0 %v2094
    %2754 = vmatpush1.msra.mxu0 %v2093
    %2755 = vmatprep.subr.mxu0 %v2086
    %2756 = vmatpush1.msra.mxu0 %v2085
    %2757 = vmatprep.subr.mxu0 %v2078
    %2758 = vmatpush1.msra.mxu0 %v2077
    %2759 = vmatprep.subr.mxu0 0.0
    %2760 = vmatpush2.msra.mxu0 0.0
    %2761 = vmatprep.subr.mxu0 0.0
    %2762 = vmatpush2.msra.mxu0 0.0
    %2763 = vmatprep.subr.mxu0 0.0
    %2764 = vmatpush2.msra.mxu0 0.0
    %2765 = vmatprep.subr.mxu0 0.0
    %2766 = vmatpush2.msra.mxu0 0.0
    %2767 = vmatprep.subr.mxu0 0.0
    %2768 = vmatpush2.msra.mxu0 0.0
    %2769 = vmatprep.subr.mxu0 0.0
    %2770 = vmatpush2.msra.mxu0 0.0
    %2771 = vmatprep.subr.mxu0 0.0
    %2772 = vmatpush2.msra.mxu0 0.0
    %2773 = vmatprep.subr.mxu0 0.0
    %2774 = vmatpush2.msra.mxu0 0.0
    %2775 = vmatprep.subr.mxu0 0.0
    %2776 = vmatpush2.msra.mxu0 0.0
    %2777 = vmatprep.subr.mxu0 0.0
    %2778 = vmatpush2.msra.mxu0 0.0
    %2779 = vmatprep.subr.mxu0 0.0
    %2780 = vmatpush2.msra.mxu0 0.0
    %2781 = vmatprep.subr.mxu0 0.0
    %2782 = vmatpush2.msra.mxu0 0.0
    %2783 = vmatprep.subr.mxu0 0.0
    %2784 = vmatpush2.msra.mxu0 0.0
    %2785 = vmatprep.subr.mxu0 0.0
    %2786 = vmatpush2.msra.mxu0 0.0
    %2787 = vmatprep.subr.mxu0 0.0
    %2788 = vmatpush2.msra.mxu0 0.0
    %2789 = vmatprep.subr.mxu0 0.0
    %2790 = vmatpush2.msra.mxu0 0.0
    %2791 = vmatprep.mubr.f32.mxu0 0.0
    %2792 = vmatmul.mubr.f32.gmra.mxu0 %v2583
    %v2793 = vpop.f32.mrf.mxu0
    %v2794 = vadd.f32 %v2506, %v2793
    %v2795 = vpop.f32.mrf.mxu0
    %v2796 = vadd.f32 %v2508, %v2795
    %2797 = vdwg.mxu0
    %2798 = vmatprep.subr.mxu0 0.0
    %2799 = vmatpush1.msra.mxu0 0.0
    %2800 = vmatprep.subr.mxu0 0.0
    %2801 = vmatpush1.msra.mxu0 0.0
    %2802 = vmatprep.subr.mxu0 0.0
    %2803 = vmatpush1.msra.mxu0 0.0
    %2804 = vmatprep.subr.mxu0 0.0
    %2805 = vmatpush1.msra.mxu0 0.0
    %2806 = vmatprep.subr.mxu0 0.0
    %2807 = vmatpush1.msra.mxu0 0.0
    %2808 = vmatprep.subr.mxu0 0.0
    %2809 = vmatpush1.msra.mxu0 0.0
    %2810 = vmatprep.subr.mxu0 0.0
    %2811 = vmatpush1.msra.mxu0 0.0
    %2812 = vmatprep.subr.mxu0 0.0
    %2813 = vmatpush1.msra.mxu0 0.0
    %2814 = vmatprep.subr.mxu0 0.0
    %2815 = vmatpush1.msra.mxu0 0.0
    %2816 = vmatprep.subr.mxu0 0.0
    %2817 = vmatpush1.msra.mxu0 0.0
    %2818 = vmatprep.subr.mxu0 0.0
    %2819 = vmatpush1.msra.mxu0 0.0
    %2820 = vmatprep.subr.mxu0 0.0
    %2821 = vmatpush1.msra.mxu0 0.0
    %2822 = vmatprep.subr.mxu0 %v2104
    %2823 = vmatpush1.msra.mxu0 %v2103
    %2824 = vmatprep.subr.mxu0 %v2096
    %2825 = vmatpush1.msra.mxu0 %v2095
    %2826 = vmatprep.subr.mxu0 %v2088
    %2827 = vmatpush1.msra.mxu0 %v2087
    %2828 = vmatprep.subr.mxu0 %v2080
    %2829 = vmatpush1.msra.mxu0 %v2079
    %2830 = vmatprep.subr.mxu0 0.0
    %2831 = vmatpush2.msra.mxu0 0.0
    %2832 = vmatprep.subr.mxu0 0.0
    %2833 = vmatpush2.msra.mxu0 0.0
    %2834 = vmatprep.subr.mxu0 0.0
    %2835 = vmatpush2.msra.mxu0 0.0
    %2836 = vmatprep.subr.mxu0 0.0
    %2837 = vmatpush2.msra.mxu0 0.0
    %2838 = vmatprep.subr.mxu0 0.0
    %2839 = vmatpush2.msra.mxu0 0.0
    %2840 = vmatprep.subr.mxu0 0.0
    %2841 = vmatpush2.msra.mxu0 0.0
    %2842 = vmatprep.subr.mxu0 0.0
    %2843 = vmatpush2.msra.mxu0 0.0
    %2844 = vmatprep.subr.mxu0 0.0
    %2845 = vmatpush2.msra.mxu0 0.0
    %2846 = vmatprep.subr.mxu0 0.0
    %2847 = vmatpush2.msra.mxu0 0.0
    %2848 = vmatprep.subr.mxu0 0.0
    %2849 = vmatpush2.msra.mxu0 0.0
    %2850 = vmatprep.subr.mxu0 0.0
    %2851 = vmatpush2.msra.mxu0 0.0
    %2852 = vmatprep.subr.mxu0 0.0
    %2853 = vmatpush2.msra.mxu0 0.0
    %2854 = vmatprep.subr.mxu0 0.0
    %2855 = vmatpush2.msra.mxu0 0.0
    %2856 = vmatprep.subr.mxu0 0.0
    %2857 = vmatpush2.msra.mxu0 0.0
    %2858 = vmatprep.subr.mxu0 0.0
    %2859 = vmatpush2.msra.mxu0 0.0
    %2860 = vmatprep.subr.mxu0 0.0
    %2861 = vmatpush2.msra.mxu0 0.0
    %2862 = vmatprep.mubr.f32.mxu0 0.0
    %2863 = vmatmul.mubr.f32.gmra.mxu0 %v2583
    %v2864 = vpop.f32.mrf.mxu0
    %v2865 = vadd.f32 %v2577, %v2864
    %v2866 = vpop.f32.mrf.mxu0
    %v2867 = vadd.f32 %v2579, %v2866
    %2868 = vdwg.mxu0
    %v2869 = vld [vmem:[%s9] sm:$0xff]
    %v2871 = vlaneseq
    %v2872 = vshrl.u32 %v2871, 7
    %v2873 = vsub.s32 0, %v2872
    %v2874 = vrot.slane %v2869, %v2873
    %v2875 = vlaneseq
    %v2876 = vshrl.u32 %v2875, 7
    %v2877 = vsub.s32 1, %v2876
    %v2878 = vrot.slane %v2869, %v2877
    %v2879 = vlaneseq
    %v2880 = vshrl.u32 %v2879, 7
    %v2881 = vsub.s32 2, %v2880
    %v2882 = vrot.slane %v2869, %v2881
    %v2883 = vlaneseq
    %v2884 = vshrl.u32 %v2883, 7
    %v2885 = vsub.s32 3, %v2884
    %v2886 = vrot.slane %v2869, %v2885
    %v2887 = vlaneseq
    %v2888 = vshrl.u32 %v2887, 7
    %v2889 = vsub.s32 4, %v2888
    %v2890 = vrot.slane %v2869, %v2889
    %v2891 = vlaneseq
    %v2892 = vshrl.u32 %v2891, 7
    %v2893 = vsub.s32 5, %v2892
    %v2894 = vrot.slane %v2869, %v2893
    %v2895 = vlaneseq
    %v2896 = vshrl.u32 %v2895, 7
    %v2897 = vsub.s32 6, %v2896
    %v2898 = vrot.slane %v2869, %v2897
    %v2899 = vlaneseq
    %v2900 = vshrl.u32 %v2899, 7
    %v2901 = vsub.s32 7, %v2900
    %v2902 = vrot.slane %v2869, %v2901
    %v2911 = vadd.f32 %v2652, %v2874
    %v2912 = vadd.f32 %v2654, %v2878
    %v2913 = vadd.f32 %v2723, %v2882
    %v2914 = vadd.f32 %v2725, %v2886
    %v2915 = vadd.f32 %v2794, %v2890
    %v2916 = vadd.f32 %v2796, %v2894
    %v2917 = vadd.f32 %v2865, %v2898
    %v2918 = vadd.f32 %v2867, %v2902
    %v2919 = vmax.f32 %v2911, 0.0
    %v2920 = vmax.f32 %v2912, 0.0
    %v2921 = vmax.f32 %v2913, 0.0
    %v2922 = vmax.f32 %v2914, 0.0
    %v2923 = vmax.f32 %v2915, 0.0
    %v2924 = vmax.f32 %v2916, 0.0
    %v2925 = vmax.f32 %v2917, 0.0
    %v2926 = vmax.f32 %v2918, 0.0
    %v2927 = vld [vmem:[#allocation12] sm:$0xff]
    %v2928 = vld [vmem:[#allocation12 + $0x8] sm:$0xff]
    %v2929 = vld [vmem:[#allocation12 + $0x10] sm:$0xff]
    %v2930 = vld [vmem:[#allocation12 + $0x18] sm:$0xff]
    %v2931 = vld [vmem:[#allocation12 + $0x20] sm:$0xff]
    %v2932 = vld [vmem:[#allocation12 + $0x28] sm:$0xff]
    %v2933 = vld [vmem:[#allocation12 + $0x30] sm:$0xff]
    %v2934 = vld [vmem:[#allocation12 + $0x38] sm:$0xff]
    %v2935 = vld [vmem:[#allocation12 + $0x40] sm:$0xff]
    %v2936 = vld [vmem:[#allocation12 + $0x48] sm:$0xff]
    %v2937 = vld [vmem:[#allocation12 + $0x50] sm:$0xff]
    %v2938 = vld [vmem:[#allocation12 + $0x58] sm:$0xff]
    %v2939 = vld [vmem:[#allocation12 + $0x60] sm:$0xff]
    %v2940 = vld [vmem:[#allocation12 + $0x68] sm:$0xff]
    %v2941 = vld [vmem:[#allocation12 + $0x70] sm:$0xff]
    %v2942 = vld [vmem:[#allocation12 + $0x78] sm:$0xff]
    %v2943 = vld [vmem:[#allocation12 + $0x80] sm:$0xff]
    %v2944 = vld [vmem:[#allocation12 + $0x88] sm:$0xff]
    %v2945 = vld [vmem:[#allocation12 + $0x90] sm:$0xff]
    %v2946 = vld [vmem:[#allocation12 + $0x98] sm:$0xff]
    %v2947 = vld [vmem:[#allocation12 + $0xa0] sm:$0xff]
    %v2948 = vld [vmem:[#allocation12 + $0xa8] sm:$0xff]
    %v2949 = vld [vmem:[#allocation12 + $0xb0] sm:$0xff]
    %v2950 = vld [vmem:[#allocation12 + $0xb8] sm:$0xff]
    %v2951 = vld [vmem:[#allocation12 + $0xc0] sm:$0xff]
    %v2952 = vld [vmem:[#allocation12 + $0xc8] sm:$0xff]
    %v2953 = vld [vmem:[#allocation12 + $0xd0] sm:$0xff]
    %v2954 = vld [vmem:[#allocation12 + $0xd8] sm:$0xff]
    %v2955 = vld [vmem:[#allocation12 + $0xe0] sm:$0xff]
    %v2956 = vld [vmem:[#allocation12 + $0xe8] sm:$0xff]
    %v2957 = vld [vmem:[#allocation12 + $0xf0] sm:$0xff]
    %v2958 = vld [vmem:[#allocation12 + $0xf8] sm:$0xff]
    %v2959 = vld [vmem:[#allocation12 + $0x100] sm:$0xff]
    %v2960 = vld [vmem:[#allocation12 + $0x108] sm:$0xff]
    %v2961 = vld [vmem:[#allocation12 + $0x110] sm:$0xff]
    %v2962 = vld [vmem:[#allocation12 + $0x118] sm:$0xff]
    %v2963 = vld [vmem:[#allocation12 + $0x120] sm:$0xff]
    %v2964 = vld [vmem:[#allocation12 + $0x128] sm:$0xff]
    %v2965 = vld [vmem:[#allocation12 + $0x130] sm:$0xff]
    %v2966 = vld [vmem:[#allocation12 + $0x138] sm:$0xff]
    %v2967 = vld [vmem:[#allocation12 + $0x140] sm:$0xff]
    %v2968 = vld [vmem:[#allocation12 + $0x148] sm:$0xff]
    %v2969 = vld [vmem:[#allocation12 + $0x150] sm:$0xff]
    %v2970 = vld [vmem:[#allocation12 + $0x158] sm:$0xff]
    %v2971 = vld [vmem:[#allocation12 + $0x160] sm:$0xff]
    %v2972 = vld [vmem:[#allocation12 + $0x168] sm:$0xff]
    %v2973 = vld [vmem:[#allocation12 + $0x170] sm:$0xff]
    %v2974 = vld [vmem:[#allocation12 + $0x178] sm:$0xff]
    %v2975 = vld [vmem:[#allocation12 + $0x180] sm:$0xff]
    %v2976 = vld [vmem:[#allocation12 + $0x188] sm:$0xff]
    %v2977 = vld [vmem:[#allocation12 + $0x190] sm:$0xff]
    %v2978 = vld [vmem:[#allocation12 + $0x198] sm:$0xff]
    %v2979 = vld [vmem:[#allocation12 + $0x1a0] sm:$0xff]
    %v2980 = vld [vmem:[#allocation12 + $0x1a8] sm:$0xff]
    %v2981 = vld [vmem:[#allocation12 + $0x1b0] sm:$0xff]
    %v2982 = vld [vmem:[#allocation12 + $0x1b8] sm:$0xff]
    %v2983 = vld [vmem:[#allocation12 + $0x1c0] sm:$0xff]
    %v2984 = vld [vmem:[#allocation12 + $0x1c8] sm:$0xff]
    %v2985 = vld [vmem:[#allocation12 + $0x1d0] sm:$0xff]
    %v2986 = vld [vmem:[#allocation12 + $0x1d8] sm:$0xff]
    %v2987 = vld [vmem:[#allocation12 + $0x1e0] sm:$0xff]
    %v2988 = vld [vmem:[#allocation12 + $0x1e8] sm:$0xff]
    %v2989 = vld [vmem:[#allocation12 + $0x1f0] sm:$0xff]
    %v2990 = vld [vmem:[#allocation12 + $0x1f8] sm:$0xff]
    %v2991 = vunpack.c.l.bf16 %v2927
    %v2992 = vunpack.c.h.bf16 %v2927
    %v2993 = vunpack.c.l.bf16 %v2928
    %v2994 = vunpack.c.h.bf16 %v2928
    %v2995 = vunpack.c.l.bf16 %v2929
    %v2996 = vunpack.c.h.bf16 %v2929
    %v2997 = vunpack.c.l.bf16 %v2930
    %v2998 = vunpack.c.h.bf16 %v2930
    %v2999 = vunpack.c.l.bf16 %v2931
    %v3000 = vunpack.c.h.bf16 %v2931
    %v3001 = vunpack.c.l.bf16 %v2932
    %v3002 = vunpack.c.h.bf16 %v2932
    %v3003 = vunpack.c.l.bf16 %v2933
    %v3004 = vunpack.c.h.bf16 %v2933
    %v3005 = vunpack.c.l.bf16 %v2934
    %v3006 = vunpack.c.h.bf16 %v2934
    %v3007 = vunpack.c.l.bf16 %v2935
    %v3008 = vunpack.c.h.bf16 %v2935
    %v3009 = vunpack.c.l.bf16 %v2936
    %v3010 = vunpack.c.h.bf16 %v2936
    %v3011 = vunpack.c.l.bf16 %v2937
    %v3012 = vunpack.c.h.bf16 %v2937
    %v3013 = vunpack.c.l.bf16 %v2938
    %v3014 = vunpack.c.h.bf16 %v2938
    %v3015 = vunpack.c.l.bf16 %v2939
    %v3016 = vunpack.c.h.bf16 %v2939
    %v3017 = vunpack.c.l.bf16 %v2940
    %v3018 = vunpack.c.h.bf16 %v2940
    %v3019 = vunpack.c.l.bf16 %v2941
    %v3020 = vunpack.c.h.bf16 %v2941
    %v3021 = vunpack.c.l.bf16 %v2942
    %v3022 = vunpack.c.h.bf16 %v2942
    %v3023 = vunpack.c.l.bf16 %v2943
    %v3024 = vunpack.c.h.bf16 %v2943
    %v3025 = vunpack.c.l.bf16 %v2944
    %v3026 = vunpack.c.h.bf16 %v2944
    %v3027 = vunpack.c.l.bf16 %v2945
    %v3028 = vunpack.c.h.bf16 %v2945
    %v3029 = vunpack.c.l.bf16 %v2946
    %v3030 = vunpack.c.h.bf16 %v2946
    %v3031 = vunpack.c.l.bf16 %v2947
    %v3032 = vunpack.c.h.bf16 %v2947
    %v3033 = vunpack.c.l.bf16 %v2948
    %v3034 = vunpack.c.h.bf16 %v2948
    %v3035 = vunpack.c.l.bf16 %v2949
    %v3036 = vunpack.c.h.bf16 %v2949
    %v3037 = vunpack.c.l.bf16 %v2950
    %v3038 = vunpack.c.h.bf16 %v2950
    %v3039 = vunpack.c.l.bf16 %v2951
    %v3040 = vunpack.c.h.bf16 %v2951
    %v3041 = vunpack.c.l.bf16 %v2952
    %v3042 = vunpack.c.h.bf16 %v2952
    %v3043 = vunpack.c.l.bf16 %v2953
    %v3044 = vunpack.c.h.bf16 %v2953
    %v3045 = vunpack.c.l.bf16 %v2954
    %v3046 = vunpack.c.h.bf16 %v2954
    %v3047 = vunpack.c.l.bf16 %v2955
    %v3048 = vunpack.c.h.bf16 %v2955
    %v3049 = vunpack.c.l.bf16 %v2956
    %v3050 = vunpack.c.h.bf16 %v2956
    %v3051 = vunpack.c.l.bf16 %v2957
    %v3052 = vunpack.c.h.bf16 %v2957
    %v3053 = vunpack.c.l.bf16 %v2958
    %v3054 = vunpack.c.h.bf16 %v2958
    %v3055 = vunpack.c.l.bf16 %v2959
    %v3056 = vunpack.c.h.bf16 %v2959
    %v3057 = vunpack.c.l.bf16 %v2960
    %v3058 = vunpack.c.h.bf16 %v2960
    %v3059 = vunpack.c.l.bf16 %v2961
    %v3060 = vunpack.c.h.bf16 %v2961
    %v3061 = vunpack.c.l.bf16 %v2962
    %v3062 = vunpack.c.h.bf16 %v2962
    %v3063 = vunpack.c.l.bf16 %v2963
    %v3064 = vunpack.c.h.bf16 %v2963
    %v3065 = vunpack.c.l.bf16 %v2964
    %v3066 = vunpack.c.h.bf16 %v2964
    %v3067 = vunpack.c.l.bf16 %v2965
    %v3068 = vunpack.c.h.bf16 %v2965
    %v3069 = vunpack.c.l.bf16 %v2966
    %v3070 = vunpack.c.h.bf16 %v2966
    %v3071 = vunpack.c.l.bf16 %v2967
    %v3072 = vunpack.c.h.bf16 %v2967
    %v3073 = vunpack.c.l.bf16 %v2968
    %v3074 = vunpack.c.h.bf16 %v2968
    %v3075 = vunpack.c.l.bf16 %v2969
    %v3076 = vunpack.c.h.bf16 %v2969
    %v3077 = vunpack.c.l.bf16 %v2970
    %v3078 = vunpack.c.h.bf16 %v2970
    %v3079 = vunpack.c.l.bf16 %v2971
    %v3080 = vunpack.c.h.bf16 %v2971
    %v3081 = vunpack.c.l.bf16 %v2972
    %v3082 = vunpack.c.h.bf16 %v2972
    %v3083 = vunpack.c.l.bf16 %v2973
    %v3084 = vunpack.c.h.bf16 %v2973
    %v3085 = vunpack.c.l.bf16 %v2974
    %v3086 = vunpack.c.h.bf16 %v2974
    %v3087 = vunpack.c.l.bf16 %v2975
    %v3088 = vunpack.c.h.bf16 %v2975
    %v3089 = vunpack.c.l.bf16 %v2976
    %v3090 = vunpack.c.h.bf16 %v2976
    %v3091 = vunpack.c.l.bf16 %v2977
    %v3092 = vunpack.c.h.bf16 %v2977
    %v3093 = vunpack.c.l.bf16 %v2978
    %v3094 = vunpack.c.h.bf16 %v2978
    %v3095 = vunpack.c.l.bf16 %v2979
    %v3096 = vunpack.c.h.bf16 %v2979
    %v3097 = vunpack.c.l.bf16 %v2980
    %v3098 = vunpack.c.h.bf16 %v2980
    %v3099 = vunpack.c.l.bf16 %v2981
    %v3100 = vunpack.c.h.bf16 %v2981
    %v3101 = vunpack.c.l.bf16 %v2982
    %v3102 = vunpack.c.h.bf16 %v2982
    %v3103 = vunpack.c.l.bf16 %v2983
    %v3104 = vunpack.c.h.bf16 %v2983
    %v3105 = vunpack.c.l.bf16 %v2984
    %v3106 = vunpack.c.h.bf16 %v2984
    %v3107 = vunpack.c.l.bf16 %v2985
    %v3108 = vunpack.c.h.bf16 %v2985
    %v3109 = vunpack.c.l.bf16 %v2986
    %v3110 = vunpack.c.h.bf16 %v2986
    %v3111 = vunpack.c.l.bf16 %v2987
    %v3112 = vunpack.c.h.bf16 %v2987
    %v3113 = vunpack.c.l.bf16 %v2988
    %v3114 = vunpack.c.h.bf16 %v2988
    %v3115 = vunpack.c.l.bf16 %v2989
    %v3116 = vunpack.c.h.bf16 %v2989
    %v3117 = vunpack.c.l.bf16 %v2990
    %v3118 = vunpack.c.h.bf16 %v2990
    %v3119 = vld [vmem:[%s11] sm:$0x3]
    %v3121 = vlaneseq
    %v3122 = vshrl.u32 %v3121, 7
    %v3123 = vsub.s32 0, %v3122
    %v3124 = vrot.slane %v3119, %v3123
    %v3125 = vlaneseq
    %v3126 = vshrl.u32 %v3125, 7
    %v3127 = vsub.s32 1, %v3126
    %v3128 = vrot.slane %v3119, %v3127
    %3131 = vmatprep.subr.mxu0 %v3022
    %3132 = vmatpush1.msra.mxu0 %v3021
    %3133 = vmatprep.subr.mxu0 %v3020
    %3134 = vmatpush1.msra.mxu0 %v3019
    %3135 = vmatprep.subr.mxu0 %v3018
    %3136 = vmatpush1.msra.mxu0 %v3017
    %3137 = vmatprep.subr.mxu0 %v3016
    %3138 = vmatpush1.msra.mxu0 %v3015
    %3139 = vmatprep.subr.mxu0 %v3014
    %3140 = vmatpush1.msra.mxu0 %v3013
    %3141 = vmatprep.subr.mxu0 %v3012
    %3142 = vmatpush1.msra.mxu0 %v3011
    %3143 = vmatprep.subr.mxu0 %v3010
    %3144 = vmatpush1.msra.mxu0 %v3009
    %3145 = vmatprep.subr.mxu0 %v3008
    %3146 = vmatpush1.msra.mxu0 %v3007
    %3147 = vmatprep.subr.mxu0 %v3006
    %3148 = vmatpush1.msra.mxu0 %v3005
    %3149 = vmatprep.subr.mxu0 %v3004
    %3150 = vmatpush1.msra.mxu0 %v3003
    %3151 = vmatprep.subr.mxu0 %v3002
    %3152 = vmatpush1.msra.mxu0 %v3001
    %3153 = vmatprep.subr.mxu0 %v3000
    %3154 = vmatpush1.msra.mxu0 %v2999
    %3155 = vmatprep.subr.mxu0 %v2998
    %3156 = vmatpush1.msra.mxu0 %v2997
    %3157 = vmatprep.subr.mxu0 %v2996
    %3158 = vmatpush1.msra.mxu0 %v2995
    %3159 = vmatprep.subr.mxu0 %v2994
    %3160 = vmatpush1.msra.mxu0 %v2993
    %3161 = vmatprep.subr.mxu0 %v2992
    %3162 = vmatpush1.msra.mxu0 %v2991
    %3163 = vmatprep.subr.mxu0 %v3054
    %3164 = vmatpush2.msra.mxu0 %v3053
    %3165 = vmatprep.subr.mxu0 %v3052
    %3166 = vmatpush2.msra.mxu0 %v3051
    %3167 = vmatprep.subr.mxu0 %v3050
    %3168 = vmatpush2.msra.mxu0 %v3049
    %3169 = vmatprep.subr.mxu0 %v3048
    %3170 = vmatpush2.msra.mxu0 %v3047
    %3171 = vmatprep.subr.mxu0 %v3046
    %3172 = vmatpush2.msra.mxu0 %v3045
    %3173 = vmatprep.subr.mxu0 %v3044
    %3174 = vmatpush2.msra.mxu0 %v3043
    %3175 = vmatprep.subr.mxu0 %v3042
    %3176 = vmatpush2.msra.mxu0 %v3041
    %3177 = vmatprep.subr.mxu0 %v3040
    %3178 = vmatpush2.msra.mxu0 %v3039
    %3179 = vmatprep.subr.mxu0 %v3038
    %3180 = vmatpush2.msra.mxu0 %v3037
    %3181 = vmatprep.subr.mxu0 %v3036
    %3182 = vmatpush2.msra.mxu0 %v3035
    %3183 = vmatprep.subr.mxu0 %v3034
    %3184 = vmatpush2.msra.mxu0 %v3033
    %3185 = vmatprep.subr.mxu0 %v3032
    %3186 = vmatpush2.msra.mxu0 %v3031
    %3187 = vmatprep.subr.mxu0 %v3030
    %3188 = vmatpush2.msra.mxu0 %v3029
    %3189 = vmatprep.subr.mxu0 %v3028
    %3190 = vmatpush2.msra.mxu0 %v3027
    %3191 = vmatprep.subr.mxu0 %v3026
    %3192 = vmatpush2.msra.mxu0 %v3025
    %3193 = vmatprep.subr.mxu0 %v3024
    %3194 = vmatpush2.msra.mxu0 %v3023
    %3195 = vmatprep.mubr.f32.mxu0 %v2920
    %3196 = vmatmul.mubr.f32.gmra.mxu0 %v2919
    %v3197 = vpop.f32.mrf.mxu0
    %v3198 = vadd.f32 %v3124, %v3197
    %v3199 = vpop.f32.mrf.mxu0
    %v3200 = vadd.f32 %v3128, %v3199
    %3201 = vdwg.mxu0
    %3202 = vmatprep.subr.mxu0 %v3086
    %3203 = vmatpush1.msra.mxu0 %v3085
    %3204 = vmatprep.subr.mxu0 %v3084
    %3205 = vmatpush1.msra.mxu0 %v3083
    %3206 = vmatprep.subr.mxu0 %v3082
    %3207 = vmatpush1.msra.mxu0 %v3081
    %3208 = vmatprep.subr.mxu0 %v3080
    %3209 = vmatpush1.msra.mxu0 %v3079
    %3210 = vmatprep.subr.mxu0 %v3078
    %3211 = vmatpush1.msra.mxu0 %v3077
    %3212 = vmatprep.subr.mxu0 %v3076
    %3213 = vmatpush1.msra.mxu0 %v3075
    %3214 = vmatprep.subr.mxu0 %v3074
    %3215 = vmatpush1.msra.mxu0 %v3073
    %3216 = vmatprep.subr.mxu0 %v3072
    %3217 = vmatpush1.msra.mxu0 %v3071
    %3218 = vmatprep.subr.mxu0 %v3070
    %3219 = vmatpush1.msra.mxu0 %v3069
    %3220 = vmatprep.subr.mxu0 %v3068
    %3221 = vmatpush1.msra.mxu0 %v3067
    %3222 = vmatprep.subr.mxu0 %v3066
    %3223 = vmatpush1.msra.mxu0 %v3065
    %3224 = vmatprep.subr.mxu0 %v3064
    %3225 = vmatpush1.msra.mxu0 %v3063
    %3226 = vmatprep.subr.mxu0 %v3062
    %3227 = vmatpush1.msra.mxu0 %v3061
    %3228 = vmatprep.subr.mxu0 %v3060
    %3229 = vmatpush1.msra.mxu0 %v3059
    %3230 = vmatprep.subr.mxu0 %v3058
    %3231 = vmatpush1.msra.mxu0 %v3057
    %3232 = vmatprep.subr.mxu0 %v3056
    %3233 = vmatpush1.msra.mxu0 %v3055
    %3234 = vmatprep.subr.mxu0 %v3118
    %3235 = vmatpush2.msra.mxu0 %v3117
    %3236 = vmatprep.subr.mxu0 %v3116
    %3237 = vmatpush2.msra.mxu0 %v3115
    %3238 = vmatprep.subr.mxu0 %v3114
    %3239 = vmatpush2.msra.mxu0 %v3113
    %3240 = vmatprep.subr.mxu0 %v3112
    %3241 = vmatpush2.msra.mxu0 %v3111
    %3242 = vmatprep.subr.mxu0 %v3110
    %3243 = vmatpush2.msra.mxu0 %v3109
    %3244 = vmatprep.subr.mxu0 %v3108
    %3245 = vmatpush2.msra.mxu0 %v3107
    %3246 = vmatprep.subr.mxu0 %v3106
    %3247 = vmatpush2.msra.mxu0 %v3105
    %3248 = vmatprep.subr.mxu0 %v3104
    %3249 = vmatpush2.msra.mxu0 %v3103
    %3250 = vmatprep.subr.mxu0 %v3102
    %3251 = vmatpush2.msra.mxu0 %v3101
    %3252 = vmatprep.subr.mxu0 %v3100
    %3253 = vmatpush2.msra.mxu0 %v3099
    %3254 = vmatprep.subr.mxu0 %v3098
    %3255 = vmatpush2.msra.mxu0 %v3097
    %3256 = vmatprep.subr.mxu0 %v3096
    %3257 = vmatpush2.msra.mxu0 %v3095
    %3258 = vmatprep.subr.mxu0 %v3094
    %3259 = vmatpush2.msra.mxu0 %v3093
    %3260 = vmatprep.subr.mxu0 %v3092
    %3261 = vmatpush2.msra.mxu0 %v3091
    %3262 = vmatprep.subr.mxu0 %v3090
    %3263 = vmatpush2.msra.mxu0 %v3089
    %3264 = vmatprep.subr.mxu0 %v3088
    %3265 = vmatpush2.msra.mxu0 %v3087
    %3266 = vmatprep.mubr.f32.mxu0 %v2922
    %3267 = vmatmul.mubr.f32.gmra.mxu0 %v2921
    %v3268 = vpop.f32.mrf.mxu0
    %v3269 = vadd.f32 %v3198, %v3268
    %v3270 = vpop.f32.mrf.mxu0
    %v3271 = vadd.f32 %v3200, %v3270
    %3272 = vdwg.mxu0
    %v3273 = vmax.f32 %v3269, 0.0
    %v3274 = vmax.f32 %v3271, 0.0
    %v3275 = vld [vmem:[#allocation14] sm:$0xff]
    %v3276 = vld [vmem:[#allocation14 + $0x8] sm:$0xff]
    %v3277 = vld [vmem:[#allocation14 + $0x10] sm:$0xff]
    %v3278 = vld [vmem:[#allocation14 + $0x18] sm:$0xff]
    %v3279 = vld [vmem:[#allocation14 + $0x20] sm:$0xff]
    %v3280 = vld [vmem:[#allocation14 + $0x28] sm:$0xff]
    %v3281 = vld [vmem:[#allocation14 + $0x30] sm:$0xff]
    %v3282 = vld [vmem:[#allocation14 + $0x38] sm:$0xff]
    %v3283 = vld [vmem:[#allocation14 + $0x40] sm:$0xff]
    %v3284 = vld [vmem:[#allocation14 + $0x48] sm:$0xff]
    %v3285 = vld [vmem:[#allocation14 + $0x50] sm:$0xff]
    %v3286 = vld [vmem:[#allocation14 + $0x58] sm:$0xff]
    %v3287 = vld [vmem:[#allocation14 + $0x60] sm:$0xff]
    %v3288 = vld [vmem:[#allocation14 + $0x68] sm:$0xff]
    %v3289 = vld [vmem:[#allocation14 + $0x70] sm:$0xff]
    %v3290 = vld [vmem:[#allocation14 + $0x78] sm:$0xff]
    %v3291 = vld [vmem:[#allocation14 + $0x80] sm:$0xff]
    %v3292 = vld [vmem:[#allocation14 + $0x88] sm:$0xff]
    %v3293 = vld [vmem:[#allocation14 + $0x90] sm:$0xff]
    %v3294 = vld [vmem:[#allocation14 + $0x98] sm:$0xff]
    %v3295 = vld [vmem:[#allocation14 + $0xa0] sm:$0xff]
    %v3296 = vld [vmem:[#allocation14 + $0xa8] sm:$0xff]
    %v3297 = vld [vmem:[#allocation14 + $0xb0] sm:$0xff]
    %v3298 = vld [vmem:[#allocation14 + $0xb8] sm:$0xff]
    %v3299 = vld [vmem:[#allocation14 + $0xc0] sm:$0xff]
    %v3300 = vld [vmem:[#allocation14 + $0xc8] sm:$0xff]
    %v3301 = vld [vmem:[#allocation14 + $0xd0] sm:$0xff]
    %v3302 = vld [vmem:[#allocation14 + $0xd8] sm:$0xff]
    %v3303 = vld [vmem:[#allocation14 + $0xe0] sm:$0xff]
    %v3304 = vld [vmem:[#allocation14 + $0xe8] sm:$0xff]
    %v3305 = vld [vmem:[#allocation14 + $0xf0] sm:$0xff]
    %v3306 = vld [vmem:[#allocation14 + $0xf8] sm:$0xff]
    %v3307 = vld [vmem:[#allocation14 + $0x100] sm:$0xff]
    %v3308 = vld [vmem:[#allocation14 + $0x108] sm:$0xff]
    %v3309 = vld [vmem:[#allocation14 + $0x110] sm:$0xff]
    %v3310 = vld [vmem:[#allocation14 + $0x118] sm:$0xff]
    %v3311 = vld [vmem:[#allocation14 + $0x120] sm:$0xff]
    %v3312 = vld [vmem:[#allocation14 + $0x128] sm:$0xff]
    %v3313 = vld [vmem:[#allocation14 + $0x130] sm:$0xff]
    %v3314 = vld [vmem:[#allocation14 + $0x138] sm:$0xff]
    %v3315 = vld [vmem:[#allocation14 + $0x140] sm:$0xff]
    %v3316 = vld [vmem:[#allocation14 + $0x148] sm:$0xff]
    %v3317 = vld [vmem:[#allocation14 + $0x150] sm:$0xff]
    %v3318 = vld [vmem:[#allocation14 + $0x158] sm:$0xff]
    %v3319 = vld [vmem:[#allocation14 + $0x160] sm:$0xff]
    %v3320 = vld [vmem:[#allocation14 + $0x168] sm:$0xff]
    %v3321 = vld [vmem:[#allocation14 + $0x170] sm:$0xff]
    %v3322 = vld [vmem:[#allocation14 + $0x178] sm:$0xff]
    %v3323 = vld [vmem:[#allocation14 + $0x180] sm:$0xff]
    %v3324 = vld [vmem:[#allocation14 + $0x188] sm:$0xff]
    %v3325 = vld [vmem:[#allocation14 + $0x190] sm:$0xff]
    %v3326 = vld [vmem:[#allocation14 + $0x198] sm:$0xff]
    %v3327 = vld [vmem:[#allocation14 + $0x1a0] sm:$0xff]
    %v3328 = vld [vmem:[#allocation14 + $0x1a8] sm:$0xff]
    %v3329 = vld [vmem:[#allocation14 + $0x1b0] sm:$0xff]
    %v3330 = vld [vmem:[#allocation14 + $0x1b8] sm:$0xff]
    %v3331 = vld [vmem:[#allocation14 + $0x1c0] sm:$0xff]
    %v3332 = vld [vmem:[#allocation14 + $0x1c8] sm:$0xff]
    %v3333 = vld [vmem:[#allocation14 + $0x1d0] sm:$0xff]
    %v3334 = vld [vmem:[#allocation14 + $0x1d8] sm:$0xff]
    %v3335 = vld [vmem:[#allocation14 + $0x1e0] sm:$0xff]
    %v3336 = vld [vmem:[#allocation14 + $0x1e8] sm:$0xff]
    %v3337 = vld [vmem:[#allocation14 + $0x1f0] sm:$0xff]
    %v3338 = vld [vmem:[#allocation14 + $0x1f8] sm:$0xff]
    %v3339 = vunpack.c.l.bf16 %v3275
    %v3340 = vunpack.c.h.bf16 %v3275
    %v3341 = vunpack.c.l.bf16 %v3276
    %v3342 = vunpack.c.h.bf16 %v3276
    %v3343 = vunpack.c.l.bf16 %v3277
    %v3344 = vunpack.c.h.bf16 %v3277
    %v3345 = vunpack.c.l.bf16 %v3278
    %v3346 = vunpack.c.h.bf16 %v3278
    %v3347 = vunpack.c.l.bf16 %v3279
    %v3348 = vunpack.c.h.bf16 %v3279
    %v3349 = vunpack.c.l.bf16 %v3280
    %v3350 = vunpack.c.h.bf16 %v3280
    %v3351 = vunpack.c.l.bf16 %v3281
    %v3352 = vunpack.c.h.bf16 %v3281
    %v3353 = vunpack.c.l.bf16 %v3282
    %v3354 = vunpack.c.h.bf16 %v3282
    %v3355 = vunpack.c.l.bf16 %v3283
    %v3356 = vunpack.c.h.bf16 %v3283
    %v3357 = vunpack.c.l.bf16 %v3284
    %v3358 = vunpack.c.h.bf16 %v3284
    %v3359 = vunpack.c.l.bf16 %v3285
    %v3360 = vunpack.c.h.bf16 %v3285
    %v3361 = vunpack.c.l.bf16 %v3286
    %v3362 = vunpack.c.h.bf16 %v3286
    %v3363 = vunpack.c.l.bf16 %v3287
    %v3364 = vunpack.c.h.bf16 %v3287
    %v3365 = vunpack.c.l.bf16 %v3288
    %v3366 = vunpack.c.h.bf16 %v3288
    %v3367 = vunpack.c.l.bf16 %v3289
    %v3368 = vunpack.c.h.bf16 %v3289
    %v3369 = vunpack.c.l.bf16 %v3290
    %v3370 = vunpack.c.h.bf16 %v3290
    %v3371 = vunpack.c.l.bf16 %v3291
    %v3372 = vunpack.c.h.bf16 %v3291
    %v3373 = vunpack.c.l.bf16 %v3292
    %v3374 = vunpack.c.h.bf16 %v3292
    %v3375 = vunpack.c.l.bf16 %v3293
    %v3376 = vunpack.c.h.bf16 %v3293
    %v3377 = vunpack.c.l.bf16 %v3294
    %v3378 = vunpack.c.h.bf16 %v3294
    %v3379 = vunpack.c.l.bf16 %v3295
    %v3380 = vunpack.c.h.bf16 %v3295
    %v3381 = vunpack.c.l.bf16 %v3296
    %v3382 = vunpack.c.h.bf16 %v3296
    %v3383 = vunpack.c.l.bf16 %v3297
    %v3384 = vunpack.c.h.bf16 %v3297
    %v3385 = vunpack.c.l.bf16 %v3298
    %v3386 = vunpack.c.h.bf16 %v3298
    %v3387 = vunpack.c.l.bf16 %v3299
    %v3388 = vunpack.c.h.bf16 %v3299
    %v3389 = vunpack.c.l.bf16 %v3300
    %v3390 = vunpack.c.h.bf16 %v3300
    %v3391 = vunpack.c.l.bf16 %v3301
    %v3392 = vunpack.c.h.bf16 %v3301
    %v3393 = vunpack.c.l.bf16 %v3302
    %v3394 = vunpack.c.h.bf16 %v3302
    %v3395 = vunpack.c.l.bf16 %v3303
    %v3396 = vunpack.c.h.bf16 %v3303
    %v3397 = vunpack.c.l.bf16 %v3304
    %v3398 = vunpack.c.h.bf16 %v3304
    %v3399 = vunpack.c.l.bf16 %v3305
    %v3400 = vunpack.c.h.bf16 %v3305
    %v3401 = vunpack.c.l.bf16 %v3306
    %v3402 = vunpack.c.h.bf16 %v3306
    %v3403 = vunpack.c.l.bf16 %v3307
    %v3404 = vunpack.c.h.bf16 %v3307
    %v3405 = vunpack.c.l.bf16 %v3308
    %v3406 = vunpack.c.h.bf16 %v3308
    %v3407 = vunpack.c.l.bf16 %v3309
    %v3408 = vunpack.c.h.bf16 %v3309
    %v3409 = vunpack.c.l.bf16 %v3310
    %v3410 = vunpack.c.h.bf16 %v3310
    %v3411 = vunpack.c.l.bf16 %v3311
    %v3412 = vunpack.c.h.bf16 %v3311
    %v3413 = vunpack.c.l.bf16 %v3312
    %v3414 = vunpack.c.h.bf16 %v3312
    %v3415 = vunpack.c.l.bf16 %v3313
    %v3416 = vunpack.c.h.bf16 %v3313
    %v3417 = vunpack.c.l.bf16 %v3314
    %v3418 = vunpack.c.h.bf16 %v3314
    %v3419 = vunpack.c.l.bf16 %v3315
    %v3420 = vunpack.c.h.bf16 %v3315
    %v3421 = vunpack.c.l.bf16 %v3316
    %v3422 = vunpack.c.h.bf16 %v3316
    %v3423 = vunpack.c.l.bf16 %v3317
    %v3424 = vunpack.c.h.bf16 %v3317
    %v3425 = vunpack.c.l.bf16 %v3318
    %v3426 = vunpack.c.h.bf16 %v3318
    %v3427 = vunpack.c.l.bf16 %v3319
    %v3428 = vunpack.c.h.bf16 %v3319
    %v3429 = vunpack.c.l.bf16 %v3320
    %v3430 = vunpack.c.h.bf16 %v3320
    %v3431 = vunpack.c.l.bf16 %v3321
    %v3432 = vunpack.c.h.bf16 %v3321
    %v3433 = vunpack.c.l.bf16 %v3322
    %v3434 = vunpack.c.h.bf16 %v3322
    %v3435 = vunpack.c.l.bf16 %v3323
    %v3436 = vunpack.c.h.bf16 %v3323
    %v3437 = vunpack.c.l.bf16 %v3324
    %v3438 = vunpack.c.h.bf16 %v3324
    %v3439 = vunpack.c.l.bf16 %v3325
    %v3440 = vunpack.c.h.bf16 %v3325
    %v3441 = vunpack.c.l.bf16 %v3326
    %v3442 = vunpack.c.h.bf16 %v3326
    %v3443 = vunpack.c.l.bf16 %v3327
    %v3444 = vunpack.c.h.bf16 %v3327
    %v3445 = vunpack.c.l.bf16 %v3328
    %v3446 = vunpack.c.h.bf16 %v3328
    %v3447 = vunpack.c.l.bf16 %v3329
    %v3448 = vunpack.c.h.bf16 %v3329
    %v3449 = vunpack.c.l.bf16 %v3330
    %v3450 = vunpack.c.h.bf16 %v3330
    %v3451 = vunpack.c.l.bf16 %v3331
    %v3452 = vunpack.c.h.bf16 %v3331
    %v3453 = vunpack.c.l.bf16 %v3332
    %v3454 = vunpack.c.h.bf16 %v3332
    %v3455 = vunpack.c.l.bf16 %v3333
    %v3456 = vunpack.c.h.bf16 %v3333
    %v3457 = vunpack.c.l.bf16 %v3334
    %v3458 = vunpack.c.h.bf16 %v3334
    %v3459 = vunpack.c.l.bf16 %v3335
    %v3460 = vunpack.c.h.bf16 %v3335
    %v3461 = vunpack.c.l.bf16 %v3336
    %v3462 = vunpack.c.h.bf16 %v3336
    %v3463 = vunpack.c.l.bf16 %v3337
    %v3464 = vunpack.c.h.bf16 %v3337
    %v3465 = vunpack.c.l.bf16 %v3338
    %v3466 = vunpack.c.h.bf16 %v3338
    %v3467 = vld [vmem:[%s13] sm:$0x3]
    %v3469 = vlaneseq
    %v3470 = vshrl.u32 %v3469, 7
    %v3471 = vsub.s32 0, %v3470
    %v3472 = vrot.slane %v3467, %v3471
    %v3473 = vlaneseq
    %v3474 = vshrl.u32 %v3473, 7
    %v3475 = vsub.s32 1, %v3474
    %v3476 = vrot.slane %v3467, %v3475
    %3479 = vmatprep.subr.mxu0 %v3370
    %3480 = vmatpush1.msra.mxu0 %v3369
    %3481 = vmatprep.subr.mxu0 %v3368
    %3482 = vmatpush1.msra.mxu0 %v3367
    %3483 = vmatprep.subr.mxu0 %v3366
    %3484 = vmatpush1.msra.mxu0 %v3365
    %3485 = vmatprep.subr.mxu0 %v3364
    %3486 = vmatpush1.msra.mxu0 %v3363
    %3487 = vmatprep.subr.mxu0 %v3362
    %3488 = vmatpush1.msra.mxu0 %v3361
    %3489 = vmatprep.subr.mxu0 %v3360
    %3490 = vmatpush1.msra.mxu0 %v3359
    %3491 = vmatprep.subr.mxu0 %v3358
    %3492 = vmatpush1.msra.mxu0 %v3357
    %3493 = vmatprep.subr.mxu0 %v3356
    %3494 = vmatpush1.msra.mxu0 %v3355
    %3495 = vmatprep.subr.mxu0 %v3354
    %3496 = vmatpush1.msra.mxu0 %v3353
    %3497 = vmatprep.subr.mxu0 %v3352
    %3498 = vmatpush1.msra.mxu0 %v3351
    %3499 = vmatprep.subr.mxu0 %v3350
    %3500 = vmatpush1.msra.mxu0 %v3349
    %3501 = vmatprep.subr.mxu0 %v3348
    %3502 = vmatpush1.msra.mxu0 %v3347
    %3503 = vmatprep.subr.mxu0 %v3346
    %3504 = vmatpush1.msra.mxu0 %v3345
    %3505 = vmatprep.subr.mxu0 %v3344
    %3506 = vmatpush1.msra.mxu0 %v3343
    %3507 = vmatprep.subr.mxu0 %v3342
    %3508 = vmatpush1.msra.mxu0 %v3341
    %3509 = vmatprep.subr.mxu0 %v3340
    %3510 = vmatpush1.msra.mxu0 %v3339
    %3511 = vmatprep.subr.mxu0 %v3402
    %3512 = vmatpush2.msra.mxu0 %v3401
    %3513 = vmatprep.subr.mxu0 %v3400
    %3514 = vmatpush2.msra.mxu0 %v3399
    %3515 = vmatprep.subr.mxu0 %v3398
    %3516 = vmatpush2.msra.mxu0 %v3397
    %3517 = vmatprep.subr.mxu0 %v3396
    %3518 = vmatpush2.msra.mxu0 %v3395
    %3519 = vmatprep.subr.mxu0 %v3394
    %3520 = vmatpush2.msra.mxu0 %v3393
    %3521 = vmatprep.subr.mxu0 %v3392
    %3522 = vmatpush2.msra.mxu0 %v3391
    %3523 = vmatprep.subr.mxu0 %v3390
    %3524 = vmatpush2.msra.mxu0 %v3389
    %3525 = vmatprep.subr.mxu0 %v3388
    %3526 = vmatpush2.msra.mxu0 %v3387
    %3527 = vmatprep.subr.mxu0 %v3386
    %3528 = vmatpush2.msra.mxu0 %v3385
    %3529 = vmatprep.subr.mxu0 %v3384
    %3530 = vmatpush2.msra.mxu0 %v3383
    %3531 = vmatprep.subr.mxu0 %v3382
    %3532 = vmatpush2.msra.mxu0 %v3381
    %3533 = vmatprep.subr.mxu0 %v3380
    %3534 = vmatpush2.msra.mxu0 %v3379
    %3535 = vmatprep.subr.mxu0 %v3378
    %3536 = vmatpush2.msra.mxu0 %v3377
    %3537 = vmatprep.subr.mxu0 %v3376
    %3538 = vmatpush2.msra.mxu0 %v3375
    %3539 = vmatprep.subr.mxu0 %v3374
    %3540 = vmatpush2.msra.mxu0 %v3373
    %3541 = vmatprep.subr.mxu0 %v3372
    %3542 = vmatpush2.msra.mxu0 %v3371
    %3543 = vmatprep.mubr.f32.mxu0 %v2924
    %3544 = vmatmul.mubr.f32.gmra.mxu0 %v2923
    %v3545 = vpop.f32.mrf.mxu0
    %v3546 = vadd.f32 %v3472, %v3545
    %v3547 = vpop.f32.mrf.mxu0
    %v3548 = vadd.f32 %v3476, %v3547
    %3549 = vdwg.mxu0
    %3550 = vmatprep.subr.mxu0 %v3434
    %3551 = vmatpush1.msra.mxu0 %v3433
    %3552 = vmatprep.subr.mxu0 %v3432
    %3553 = vmatpush1.msra.mxu0 %v3431
    %3554 = vmatprep.subr.mxu0 %v3430
    %3555 = vmatpush1.msra.mxu0 %v3429
    %3556 = vmatprep.subr.mxu0 %v3428
    %3557 = vmatpush1.msra.mxu0 %v3427
    %3558 = vmatprep.subr.mxu0 %v3426
    %3559 = vmatpush1.msra.mxu0 %v3425
    %3560 = vmatprep.subr.mxu0 %v3424
    %3561 = vmatpush1.msra.mxu0 %v3423
    %3562 = vmatprep.subr.mxu0 %v3422
    %3563 = vmatpush1.msra.mxu0 %v3421
    %3564 = vmatprep.subr.mxu0 %v3420
    %3565 = vmatpush1.msra.mxu0 %v3419
    %3566 = vmatprep.subr.mxu0 %v3418
    %3567 = vmatpush1.msra.mxu0 %v3417
    %3568 = vmatprep.subr.mxu0 %v3416
    %3569 = vmatpush1.msra.mxu0 %v3415
    %3570 = vmatprep.subr.mxu0 %v3414
    %3571 = vmatpush1.msra.mxu0 %v3413
    %3572 = vmatprep.subr.mxu0 %v3412
    %3573 = vmatpush1.msra.mxu0 %v3411
    %3574 = vmatprep.subr.mxu0 %v3410
    %3575 = vmatpush1.msra.mxu0 %v3409
    %3576 = vmatprep.subr.mxu0 %v3408
    %3577 = vmatpush1.msra.mxu0 %v3407
    %3578 = vmatprep.subr.mxu0 %v3406
    %3579 = vmatpush1.msra.mxu0 %v3405
    %3580 = vmatprep.subr.mxu0 %v3404
    %3581 = vmatpush1.msra.mxu0 %v3403
    %3582 = vmatprep.subr.mxu0 %v3466
    %3583 = vmatpush2.msra.mxu0 %v3465
    %3584 = vmatprep.subr.mxu0 %v3464
    %3585 = vmatpush2.msra.mxu0 %v3463
    %3586 = vmatprep.subr.mxu0 %v3462
    %3587 = vmatpush2.msra.mxu0 %v3461
    %3588 = vmatprep.subr.mxu0 %v3460
    %3589 = vmatpush2.msra.mxu0 %v3459
    %3590 = vmatprep.subr.mxu0 %v3458
    %3591 = vmatpush2.msra.mxu0 %v3457
    %3592 = vmatprep.subr.mxu0 %v3456
    %3593 = vmatpush2.msra.mxu0 %v3455
    %3594 = vmatprep.subr.mxu0 %v3454
    %3595 = vmatpush2.msra.mxu0 %v3453
    %3596 = vmatprep.subr.mxu0 %v3452
    %3597 = vmatpush2.msra.mxu0 %v3451
    %3598 = vmatprep.subr.mxu0 %v3450
    %3599 = vmatpush2.msra.mxu0 %v3449
    %3600 = vmatprep.subr.mxu0 %v3448
    %3601 = vmatpush2.msra.mxu0 %v3447
    %3602 = vmatprep.subr.mxu0 %v3446
    %3603 = vmatpush2.msra.mxu0 %v3445
    %3604 = vmatprep.subr.mxu0 %v3444
    %3605 = vmatpush2.msra.mxu0 %v3443
    %3606 = vmatprep.subr.mxu0 %v3442
    %3607 = vmatpush2.msra.mxu0 %v3441
    %3608 = vmatprep.subr.mxu0 %v3440
    %3609 = vmatpush2.msra.mxu0 %v3439
    %3610 = vmatprep.subr.mxu0 %v3438
    %3611 = vmatpush2.msra.mxu0 %v3437
    %3612 = vmatprep.subr.mxu0 %v3436
    %3613 = vmatpush2.msra.mxu0 %v3435
    %3614 = vmatprep.mubr.f32.mxu0 %v2926
    %3615 = vmatmul.mubr.f32.gmra.mxu0 %v2925
    %v3616 = vpop.f32.mrf.mxu0
    %v3617 = vadd.f32 %v3546, %v3616
    %v3618 = vpop.f32.mrf.mxu0
    %v3619 = vadd.f32 %v3548, %v3618
    %3620 = vdwg.mxu0
    %v3621 = vmax.f32 %v3617, 0.0
    %v3622 = vmax.f32 %v3619, 0.0
    %v3623 = vld [vmem:[#allocation15] sm:$0xf]
    %v3624 = vld [vmem:[#allocation15 + $0x4] sm:$0xf]
    %v3625 = vld [vmem:[#allocation15 + $0x8] sm:$0xf]
    %v3626 = vld [vmem:[#allocation15 + $0xc] sm:$0xf]
    %v3627 = vld [vmem:[#allocation15 + $0x10] sm:$0xf]
    %v3628 = vld [vmem:[#allocation15 + $0x14] sm:$0xf]
    %v3629 = vld [vmem:[#allocation15 + $0x18] sm:$0xf]
    %v3630 = vld [vmem:[#allocation15 + $0x1c] sm:$0xf]
    %v3631 = vld [vmem:[#allocation15 + $0x20] sm:$0xf]
    %v3632 = vld [vmem:[#allocation15 + $0x24] sm:$0xf]
    %v3633 = vld [vmem:[#allocation15 + $0x28] sm:$0xf]
    %v3634 = vld [vmem:[#allocation15 + $0x2c] sm:$0xf]
    %v3635 = vld [vmem:[#allocation15 + $0x30] sm:$0xf]
    %v3636 = vld [vmem:[#allocation15 + $0x34] sm:$0xf]
    %v3637 = vld [vmem:[#allocation15 + $0x38] sm:$0xf]
    %v3638 = vld [vmem:[#allocation15 + $0x3c] sm:$0xf]
    %v3639 = vld [vmem:[#allocation15 + $0x40] sm:$0xf]
    %v3640 = vld [vmem:[#allocation15 + $0x44] sm:$0xf]
    %v3641 = vld [vmem:[#allocation15 + $0x48] sm:$0xf]
    %v3642 = vld [vmem:[#allocation15 + $0x4c] sm:$0xf]
    %v3643 = vld [vmem:[#allocation15 + $0x50] sm:$0xf]
    %v3644 = vld [vmem:[#allocation15 + $0x54] sm:$0xf]
    %v3645 = vld [vmem:[#allocation15 + $0x58] sm:$0xf]
    %v3646 = vld [vmem:[#allocation15 + $0x5c] sm:$0xf]
    %v3647 = vld [vmem:[#allocation15 + $0x60] sm:$0xf]
    %v3648 = vld [vmem:[#allocation15 + $0x64] sm:$0xf]
    %v3649 = vld [vmem:[#allocation15 + $0x68] sm:$0xf]
    %v3650 = vld [vmem:[#allocation15 + $0x6c] sm:$0xf]
    %v3651 = vld [vmem:[#allocation15 + $0x70] sm:$0xf]
    %v3652 = vld [vmem:[#allocation15 + $0x74] sm:$0xf]
    %v3653 = vld [vmem:[#allocation15 + $0x78] sm:$0xf]
    %v3654 = vld [vmem:[#allocation15 + $0x7c] sm:$0xf]
    %v3655 = vunpack.c.l.bf16 %v3623
    %v3656 = vunpack.c.l.bf16 %v3624
    %v3657 = vunpack.c.l.bf16 %v3625
    %v3658 = vunpack.c.l.bf16 %v3626
    %v3659 = vunpack.c.l.bf16 %v3627
    %v3660 = vunpack.c.l.bf16 %v3628
    %v3661 = vunpack.c.l.bf16 %v3629
    %v3662 = vunpack.c.l.bf16 %v3630
    %v3663 = vunpack.c.l.bf16 %v3631
    %v3664 = vunpack.c.l.bf16 %v3632
    %v3665 = vunpack.c.l.bf16 %v3633
    %v3666 = vunpack.c.l.bf16 %v3634
    %v3667 = vunpack.c.l.bf16 %v3635
    %v3668 = vunpack.c.l.bf16 %v3636
    %v3669 = vunpack.c.l.bf16 %v3637
    %v3670 = vunpack.c.l.bf16 %v3638
    %v3671 = vunpack.c.l.bf16 %v3639
    %v3672 = vunpack.c.l.bf16 %v3640
    %v3673 = vunpack.c.l.bf16 %v3641
    %v3674 = vunpack.c.l.bf16 %v3642
    %v3675 = vunpack.c.l.bf16 %v3643
    %v3676 = vunpack.c.l.bf16 %v3644
    %v3677 = vunpack.c.l.bf16 %v3645
    %v3678 = vunpack.c.l.bf16 %v3646
    %v3679 = vunpack.c.l.bf16 %v3647
    %v3680 = vunpack.c.l.bf16 %v3648
    %v3681 = vunpack.c.l.bf16 %v3649
    %v3682 = vunpack.c.l.bf16 %v3650
    %v3683 = vunpack.c.l.bf16 %v3651
    %v3684 = vunpack.c.l.bf16 %v3652
    %v3685 = vunpack.c.l.bf16 %v3653
    %v3686 = vunpack.c.l.bf16 %v3654
    %v3687 = vld [vmem:[%s15] sm:$0x1]
    %v3689 = vlaneseq
    %v3690 = vshrl.u32 %v3689, 7
    %v3691 = vsub.s32 0, %v3690
    %v3692 = vrot.slane %v3687, %v3691
    %3694 = vmatprep.subr.mxu0 0.0
    %3695 = vmatpush1.msra.mxu0 %v3670
    %3696 = vmatprep.subr.mxu0 0.0
    %3697 = vmatpush1.msra.mxu0 %v3669
    %3698 = vmatprep.subr.mxu0 0.0
    %3699 = vmatpush1.msra.mxu0 %v3668
    %3700 = vmatprep.subr.mxu0 0.0
    %3701 = vmatpush1.msra.mxu0 %v3667
    %3702 = vmatprep.subr.mxu0 0.0
    %3703 = vmatpush1.msra.mxu0 %v3666
    %3704 = vmatprep.subr.mxu0 0.0
    %3705 = vmatpush1.msra.mxu0 %v3665
    %3706 = vmatprep.subr.mxu0 0.0
    %3707 = vmatpush1.msra.mxu0 %v3664
    %3708 = vmatprep.subr.mxu0 0.0
    %3709 = vmatpush1.msra.mxu0 %v3663
    %3710 = vmatprep.subr.mxu0 0.0
    %3711 = vmatpush1.msra.mxu0 %v3662
    %3712 = vmatprep.subr.mxu0 0.0
    %3713 = vmatpush1.msra.mxu0 %v3661
    %3714 = vmatprep.subr.mxu0 0.0
    %3715 = vmatpush1.msra.mxu0 %v3660
    %3716 = vmatprep.subr.mxu0 0.0
    %3717 = vmatpush1.msra.mxu0 %v3659
    %3718 = vmatprep.subr.mxu0 0.0
    %3719 = vmatpush1.msra.mxu0 %v3658
    %3720 = vmatprep.subr.mxu0 0.0
    %3721 = vmatpush1.msra.mxu0 %v3657
    %3722 = vmatprep.subr.mxu0 0.0
    %3723 = vmatpush1.msra.mxu0 %v3656
    %3724 = vmatprep.subr.mxu0 0.0
    %3725 = vmatpush1.msra.mxu0 %v3655
    %3726 = vmatprep.subr.mxu0 0.0
    %3727 = vmatpush2.msra.mxu0 %v3686
    %3728 = vmatprep.subr.mxu0 0.0
    %3729 = vmatpush2.msra.mxu0 %v3685
    %3730 = vmatprep.subr.mxu0 0.0
    %3731 = vmatpush2.msra.mxu0 %v3684
    %3732 = vmatprep.subr.mxu0 0.0
    %3733 = vmatpush2.msra.mxu0 %v3683
    %3734 = vmatprep.subr.mxu0 0.0
    %3735 = vmatpush2.msra.mxu0 %v3682
    %3736 = vmatprep.subr.mxu0 0.0
    %3737 = vmatpush2.msra.mxu0 %v3681
    %3738 = vmatprep.subr.mxu0 0.0
    %3739 = vmatpush2.msra.mxu0 %v3680
    %3740 = vmatprep.subr.mxu0 0.0
    %3741 = vmatpush2.msra.mxu0 %v3679
    %3742 = vmatprep.subr.mxu0 0.0
    %3743 = vmatpush2.msra.mxu0 %v3678
    %3744 = vmatprep.subr.mxu0 0.0
    %3745 = vmatpush2.msra.mxu0 %v3677
    %3746 = vmatprep.subr.mxu0 0.0
    %3747 = vmatpush2.msra.mxu0 %v3676
    %3748 = vmatprep.subr.mxu0 0.0
    %3749 = vmatpush2.msra.mxu0 %v3675
    %3750 = vmatprep.subr.mxu0 0.0
    %3751 = vmatpush2.msra.mxu0 %v3674
    %3752 = vmatprep.subr.mxu0 0.0
    %3753 = vmatpush2.msra.mxu0 %v3673
    %3754 = vmatprep.subr.mxu0 0.0
    %3755 = vmatpush2.msra.mxu0 %v3672
    %3756 = vmatprep.subr.mxu0 0.0
    %3757 = vmatpush2.msra.mxu0 %v3671
    %3758 = vmatprep.mubr.f32.mxu0 %v3274
    %3759 = vmatmul.mubr.f32.gmra.mxu0 %v3273
    %v3760 = vpop.f32.mrf.mxu0
    %v3761 = vadd.f32 %v3692, %v3760
    %v3762 = vpop.f32.mrf.mxu0
    %3763 = vdwg.mxu0
    %3764 = vst [vmem:[#allocation18] sm:$0xff] %v3761
    %v3765 = vld [vmem:[#allocation17] sm:$0xf]
    %v3766 = vld [vmem:[#allocation17 + $0x4] sm:$0xf]
    %v3767 = vld [vmem:[#allocation17 + $0x8] sm:$0xf]
    %v3768 = vld [vmem:[#allocation17 + $0xc] sm:$0xf]
    %v3769 = vld [vmem:[#allocation17 + $0x10] sm:$0xf]
    %v3770 = vld [vmem:[#allocation17 + $0x14] sm:$0xf]
    %v3771 = vld [vmem:[#allocation17 + $0x18] sm:$0xf]
    %v3772 = vld [vmem:[#allocation17 + $0x1c] sm:$0xf]
    %v3773 = vld [vmem:[#allocation17 + $0x20] sm:$0xf]
    %v3774 = vld [vmem:[#allocation17 + $0x24] sm:$0xf]
    %v3775 = vld [vmem:[#allocation17 + $0x28] sm:$0xf]
    %v3776 = vld [vmem:[#allocation17 + $0x2c] sm:$0xf]
    %v3777 = vld [vmem:[#allocation17 + $0x30] sm:$0xf]
    %v3778 = vld [vmem:[#allocation17 + $0x34] sm:$0xf]
    %v3779 = vld [vmem:[#allocation17 + $0x38] sm:$0xf]
    %v3780 = vld [vmem:[#allocation17 + $0x3c] sm:$0xf]
    %v3781 = vld [vmem:[#allocation17 + $0x40] sm:$0xf]
    %v3782 = vld [vmem:[#allocation17 + $0x44] sm:$0xf]
    %v3783 = vld [vmem:[#allocation17 + $0x48] sm:$0xf]
    %v3784 = vld [vmem:[#allocation17 + $0x4c] sm:$0xf]
    %v3785 = vld [vmem:[#allocation17 + $0x50] sm:$0xf]
    %v3786 = vld [vmem:[#allocation17 + $0x54] sm:$0xf]
    %v3787 = vld [vmem:[#allocation17 + $0x58] sm:$0xf]
    %v3788 = vld [vmem:[#allocation17 + $0x5c] sm:$0xf]
    %v3789 = vld [vmem:[#allocation17 + $0x60] sm:$0xf]
    %v3790 = vld [vmem:[#allocation17 + $0x64] sm:$0xf]
    %v3791 = vld [vmem:[#allocation17 + $0x68] sm:$0xf]
    %v3792 = vld [vmem:[#allocation17 + $0x6c] sm:$0xf]
    %v3793 = vld [vmem:[#allocation17 + $0x70] sm:$0xf]
    %v3794 = vld [vmem:[#allocation17 + $0x74] sm:$0xf]
    %v3795 = vld [vmem:[#allocation17 + $0x78] sm:$0xf]
    %v3796 = vld [vmem:[#allocation17 + $0x7c] sm:$0xf]
    %v3797 = vunpack.c.l.bf16 %v3765
    %v3798 = vunpack.c.l.bf16 %v3766
    %v3799 = vunpack.c.l.bf16 %v3767
    %v3800 = vunpack.c.l.bf16 %v3768
    %v3801 = vunpack.c.l.bf16 %v3769
    %v3802 = vunpack.c.l.bf16 %v3770
    %v3803 = vunpack.c.l.bf16 %v3771
    %v3804 = vunpack.c.l.bf16 %v3772
    %v3805 = vunpack.c.l.bf16 %v3773
    %v3806 = vunpack.c.l.bf16 %v3774
    %v3807 = vunpack.c.l.bf16 %v3775
    %v3808 = vunpack.c.l.bf16 %v3776
    %v3809 = vunpack.c.l.bf16 %v3777
    %v3810 = vunpack.c.l.bf16 %v3778
    %v3811 = vunpack.c.l.bf16 %v3779
    %v3812 = vunpack.c.l.bf16 %v3780
    %v3813 = vunpack.c.l.bf16 %v3781
    %v3814 = vunpack.c.l.bf16 %v3782
    %v3815 = vunpack.c.l.bf16 %v3783
    %v3816 = vunpack.c.l.bf16 %v3784
    %v3817 = vunpack.c.l.bf16 %v3785
    %v3818 = vunpack.c.l.bf16 %v3786
    %v3819 = vunpack.c.l.bf16 %v3787
    %v3820 = vunpack.c.l.bf16 %v3788
    %v3821 = vunpack.c.l.bf16 %v3789
    %v3822 = vunpack.c.l.bf16 %v3790
    %v3823 = vunpack.c.l.bf16 %v3791
    %v3824 = vunpack.c.l.bf16 %v3792
    %v3825 = vunpack.c.l.bf16 %v3793
    %v3826 = vunpack.c.l.bf16 %v3794
    %v3827 = vunpack.c.l.bf16 %v3795
    %v3828 = vunpack.c.l.bf16 %v3796
    %v3829 = vld [vmem:[%s17] sm:$0x1]
    %v3831 = vlaneseq
    %v3832 = vshrl.u32 %v3831, 7
    %v3833 = vsub.s32 0, %v3832
    %v3834 = vrot.slane %v3829, %v3833
    %3836 = vmatprep.subr.mxu0 0.0
    %3837 = vmatpush1.msra.mxu0 %v3812
    %3838 = vmatprep.subr.mxu0 0.0
    %3839 = vmatpush1.msra.mxu0 %v3811
    %3840 = vmatprep.subr.mxu0 0.0
    %3841 = vmatpush1.msra.mxu0 %v3810
    %3842 = vmatprep.subr.mxu0 0.0
    %3843 = vmatpush1.msra.mxu0 %v3809
    %3844 = vmatprep.subr.mxu0 0.0
    %3845 = vmatpush1.msra.mxu0 %v3808
    %3846 = vmatprep.subr.mxu0 0.0
    %3847 = vmatpush1.msra.mxu0 %v3807
    %3848 = vmatprep.subr.mxu0 0.0
    %3849 = vmatpush1.msra.mxu0 %v3806
    %3850 = vmatprep.subr.mxu0 0.0
    %3851 = vmatpush1.msra.mxu0 %v3805
    %3852 = vmatprep.subr.mxu0 0.0
    %3853 = vmatpush1.msra.mxu0 %v3804
    %3854 = vmatprep.subr.mxu0 0.0
    %3855 = vmatpush1.msra.mxu0 %v3803
    %3856 = vmatprep.subr.mxu0 0.0
    %3857 = vmatpush1.msra.mxu0 %v3802
    %3858 = vmatprep.subr.mxu0 0.0
    %3859 = vmatpush1.msra.mxu0 %v3801
    %3860 = vmatprep.subr.mxu0 0.0
    %3861 = vmatpush1.msra.mxu0 %v3800
    %3862 = vmatprep.subr.mxu0 0.0
    %3863 = vmatpush1.msra.mxu0 %v3799
    %3864 = vmatprep.subr.mxu0 0.0
    %3865 = vmatpush1.msra.mxu0 %v3798
    %3866 = vmatprep.subr.mxu0 0.0
    %3867 = vmatpush1.msra.mxu0 %v3797
    %3868 = vmatprep.subr.mxu0 0.0
    %3869 = vmatpush2.msra.mxu0 %v3828
    %3870 = vmatprep.subr.mxu0 0.0
    %3871 = vmatpush2.msra.mxu0 %v3827
    %3872 = vmatprep.subr.mxu0 0.0
    %3873 = vmatpush2.msra.mxu0 %v3826
    %3874 = vmatprep.subr.mxu0 0.0
    %3875 = vmatpush2.msra.mxu0 %v3825
    %3876 = vmatprep.subr.mxu0 0.0
    %3877 = vmatpush2.msra.mxu0 %v3824
    %3878 = vmatprep.subr.mxu0 0.0
    %3879 = vmatpush2.msra.mxu0 %v3823
    %3880 = vmatprep.subr.mxu0 0.0
    %3881 = vmatpush2.msra.mxu0 %v3822
    %3882 = vmatprep.subr.mxu0 0.0
    %3883 = vmatpush2.msra.mxu0 %v3821
    %3884 = vmatprep.subr.mxu0 0.0
    %3885 = vmatpush2.msra.mxu0 %v3820
    %3886 = vmatprep.subr.mxu0 0.0
    %3887 = vmatpush2.msra.mxu0 %v3819
    %3888 = vmatprep.subr.mxu0 0.0
    %3889 = vmatpush2.msra.mxu0 %v3818
    %3890 = vmatprep.subr.mxu0 0.0
    %3891 = vmatpush2.msra.mxu0 %v3817
    %3892 = vmatprep.subr.mxu0 0.0
    %3893 = vmatpush2.msra.mxu0 %v3816
    %3894 = vmatprep.subr.mxu0 0.0
    %3895 = vmatpush2.msra.mxu0 %v3815
    %3896 = vmatprep.subr.mxu0 0.0
    %3897 = vmatpush2.msra.mxu0 %v3814
    %3898 = vmatprep.subr.mxu0 0.0
    %3899 = vmatpush2.msra.mxu0 %v3813
    %3900 = vmatprep.mubr.f32.mxu0 %v3622
    %3901 = vmatmul.mubr.f32.gmra.mxu0 %v3621
    %v3902 = vpop.f32.mrf.mxu0
    %v3903 = vadd.f32 %v3834, %v3902
    %v3904 = vpop.f32.mrf.mxu0
    %3905 = vdwg.mxu0
    %3906 = vst [vmem:[#allocation18 + $0x8] sm:$0xff] %v3903
    // Predicated region
    $region110: #{tpu_custom_call.1} parent=1 // pred_check
      _
    $region111: #{tpu_custom_call.1} parent=1 // pred_check_branch
      %3908 = sbr.rel (0) target = $region113
    $region112: #{tpu_custom_call.1} parent=1 // pred_region
      %s3910 = ssub.s32 256, 256
      %3911 = vsyncadd [#allocation5], %s3910
      %s3913 = sshll.u32 [#allocation18], 4
      %s3914 = int_to_ptr.vmem [resolvable:$true] %s3913
      %3916 = dma.vmem_to_hbm [thread:$0]  %s3914, 256, %s18, [#allocation5]
    $region113: #{tpu_custom_call.1} parent=1 // pred_fallthru
      _
    // Predicated region
    $region114: #{tpu_custom_call.1} parent=1 // pred_check
      _
    $region115: #{tpu_custom_call.1} parent=1 // pred_check_branch
      %3918 = sbr.rel (0) target = $region117
    $region116: #{tpu_custom_call.1} parent=1 // pred_region
      %3919 = dma.done [#allocation5], 256
    $region117: #{tpu_custom_call.1} parent=1 // pred_fallthru
      _
    %3920 = vsyncpa [#allocation4], 1
    %3921 = vsyncpa [#allocation7], 1
    %3922 = vsyncpa [#allocation10], 1
    %3923 = vsyncpa [#allocation13], 1
    %3924 = vsyncpa [#allocation16], 1
    %3925 = vsyncpa [#allocation5], 1

</llo_original>
